<compile_context>
chip_gen: v5e
topology: v5e:2x2
jax: 0.10.0
libtpu: 0.0.40
codegen_flags: <defaults>
</compile_context>

<pallas_src>
import functools

import jax
import jax.numpy as jnp
from jax.experimental import pallas as pl
from jax.experimental.pallas import tpu as pltpu


# ----------------------------------------------------------------------------
# Pallas kernels
# ----------------------------------------------------------------------------
def _conv_pool_kernel(x_ref, w_ref, b_ref, o_ref, *, num_shifts):
    """Fused conv (im2col matmul) + folded-BN bias + ReLU + MaxPool.

    x_ref: (1, S, M, K) pool-shift-major im2col patches for one image,
           S = ph*pw pool-window shifts, M = Hop*Wop pooled output pixels.
    w_ref: (K, C) conv weights with BN scale folded in.
    b_ref: (1, C) folded bias.
    o_ref: (1, M, C) pooled, ReLU'd conv output.
    """
    w = w_ref[...]
    acc = None
    for s in range(num_shifts):                       # unrolled at trace time
        y = jnp.dot(x_ref[0, s], w, preferred_element_type=jnp.float32)
        acc = y if acc is None else jnp.maximum(acc, y)
    # max_s(y_s + b) == max_s(y_s) + b  -> add bias & ReLU once, after the max.
    o_ref[...] = jnp.maximum(acc + b_ref[...], 0.0)[None, :, :]


def _fc_head_kernel(x_ref, w1_ref, b1_ref, w2_ref, b2_ref, o_ref):
    """Fused fc1 + ReLU + (dropout=identity at eval) + fc2 + LogSoftmax."""
    h = jnp.dot(x_ref[...], w1_ref[...], preferred_element_type=jnp.float32)
    h = jnp.maximum(h + b1_ref[...], 0.0)
    logits = jnp.dot(h, w2_ref[...], preferred_element_type=jnp.float32) + b2_ref[...]
    m = jnp.max(logits, axis=-1, keepdims=True)
    z = logits - m
    o_ref[...] = z - jnp.log(jnp.sum(jnp.exp(z), axis=-1, keepdims=True))


# ----------------------------------------------------------------------------
# Pallas wrappers
# ----------------------------------------------------------------------------
def conv_bn_relu_pool(patches, w, b):
    """patches: (B, S, M, K) f32; w: (K, C); b: (C,) -> (B, M, C) f32."""
    B, S, M, K = patches.shape
    C = w.shape[1]
    return pl.pallas_call(
        functools.partial(_conv_pool_kernel, num_shifts=S),
        out_shape=jax.ShapeDtypeStruct((B, M, C), jnp.float32),
        grid=(B,),
        in_specs=[
            pl.BlockSpec((1, S, M, K), lambda i: (i, 0, 0, 0)),
            pl.BlockSpec((K, C), lambda i: (0, 0)),
            pl.BlockSpec((1, C), lambda i: (0, 0)),
        ],
        out_specs=pl.BlockSpec((1, M, C), lambda i: (i, 0, 0)),
        compiler_params=pltpu.CompilerParams(dimension_semantics=("parallel",)),
    )(patches, w, b.reshape(1, C))


def fc_head(x, w1, b1, w2, b2):
    """x: (B, D); w1: (D, H); w2: (H, N) -> log-softmax logits (B, N)."""
    B, D = x.shape
    H = w1.shape[1]
    N = w2.shape[1]
    return pl.pallas_call(
        _fc_head_kernel,
        out_shape=jax.ShapeDtypeStruct((B, N), jnp.float32),
        grid=(1,),
        in_specs=[
            pl.BlockSpec((B, D), lambda i: (0, 0)),
            pl.BlockSpec((D, H), lambda i: (0, 0)),
            pl.BlockSpec((1, H), lambda i: (0, 0)),
            pl.BlockSpec((H, N), lambda i: (0, 0)),
            pl.BlockSpec((1, N), lambda i: (0, 0)),
        ],
        out_specs=pl.BlockSpec((B, N), lambda i: (0, 0)),
    )(x, w1, b1.reshape(1, H), w2, b2.reshape(1, N))


# ----------------------------------------------------------------------------
# Plain-JAX glue
# ----------------------------------------------------------------------------
def _im2col_pool_shift(x, kh, kw, ph, pw):
    """x: (B, H, W, Cin) -> pool-shift-major im2col patches.

    Returns (B, ph*pw, Hop*Wop, kh*kw*Cin), Hop, Wop where shift index
    s = dh*pw + dw selects the pool-window offset and row m = hp*Wop + wp the
    pooled output pixel.  Feature ordering is (kh, kw, cin) (PyTorch conv layout).
    """
    B, H, W, C = x.shape
    Ho, Wo = H - kh + 1, W - kw + 1
    Hop, Wop = Ho // ph, Wo // pw
    K = kh * kw * C
    cols = [x[:, dh:dh + Ho, dw:dw + Wo, :] for dh in range(kh) for dw in range(kw)]
    patches = jnp.concatenate(cols, axis=-1)                       # (B, Ho, Wo, K)
    patches = patches[:, : Hop * ph, : Wop * pw, :]
    patches = patches.reshape(B, Hop, ph, Wop, pw, K)
    patches = patches.transpose(0, 2, 4, 1, 3, 5)                  # (B, ph, pw, Hop, Wop, K)
    return patches.reshape(B, ph * pw, Hop * Wop, K), Hop, Wop


def _fold_bn_into_weights(w_conv, conv_bias, gamma, beta, mean, var, eps=1e-5):
    """PyTorch conv weight (Cout,Cin,kh,kw) + BN(running stats) ->
    im2col weight (kh*kw*Cin, Cout) with scale folded in, and bias (Cout,)."""
    cout, cin, kh, kw = w_conv.shape
    w = w_conv.transpose(2, 3, 1, 0).reshape(kh * kw * cin, cout)
    scale = gamma / jnp.sqrt(var + eps)
    return w * scale[None, :], beta + (conv_bias - mean) * scale


def init_params(key):
    ks = jax.random.split(key, 16)
    n = lambda k, shape, s=0.05: s * jax.random.normal(k, shape, jnp.float32)
    p = {}
    # conv1: Conv2d(1, 32, (3, 11)) + BatchNorm2d(32)
    p["w1"] = n(ks[0], (32, 1, 3, 11))
    p["b1"] = n(ks[1], (32,))
    p["bn1_g"] = 1.0 + n(ks[2], (32,))
    p["bn1_b"] = n(ks[3], (32,))
    p["bn1_m"] = n(ks[4], (32,))
    p["bn1_v"] = 0.5 + jax.random.uniform(ks[5], (32,), jnp.float32)
    # conv2: Conv2d(32, 64, (2, 11)) + BatchNorm2d(64)
    p["w2"] = n(ks[6], (64, 32, 2, 11))
    p["b2"] = n(ks[7], (64,))
    p["bn2_g"] = 1.0 + n(ks[8], (64,))
    p["bn2_b"] = n(ks[9], (64,))
    p["bn2_m"] = n(ks[10], (64,))
    p["bn2_v"] = 0.5 + jax.random.uniform(ks[11], (64,), jnp.float32)
    # fc1: Linear(64*15*2, 256)  (stored transposed: (in, out))
    p["fc1_w"] = n(ks[12], (64 * 15 * 2, 256), 0.02)
    p["fc1_b"] = n(ks[13], (256,))
    # fc2: Linear(256, 2)
    p["fc2_w"] = n(ks[14], (256, 2), 0.02)
    p["fc2_b"] = n(ks[15], (2,))
    return p


def afib_detector_forward(x_nchw, p):
    """Forward pass of AfibDetector (inference mode). x_nchw: (B, 1, 12, 175)."""
    B = x_nchw.shape[0]
    x = jnp.transpose(x_nchw, (0, 2, 3, 1))                       # NCHW -> NHWC (B,12,175,1)

    # conv1 = Conv2d(1,32,(3,11)) + BN + ReLU + MaxPool((2,3)) — one fused kernel.
    w1, b1 = _fold_bn_into_weights(p["w1"], p["b1"], p["bn1_g"], p["bn1_b"],
                                   p["bn1_m"], p["bn1_v"])
    patches, hop, wop = _im2col_pool_shift(x, 3, 11, 2, 3)        # (B, 6, 275, 33)
    y = conv_bn_relu_pool(patches, w1, b1)                        # (B, 275, 32)
    y = y.reshape(B, hop, wop, 32)                                # (B, 5, 55, 32)

    # conv2 = Conv2d(32,64,(2,11)) + BN + ReLU + MaxPool((2,3)) — one fused kernel.
    w2, b2 = _fold_bn_into_weights(p["w2"], p["b2"], p["bn2_g"], p["bn2_b"],
                                   p["bn2_m"], p["bn2_v"])
    patches, hop, wop = _im2col_pool_shift(y, 2, 11, 2, 3)        # (B, 6, 30, 704)
    y = conv_bn_relu_pool(patches, w2, b2)                        # (B, 30, 64)
    y = y.reshape(B, hop, wop, 64)                                # (B, 2, 15, 64)

    # x.view(B, -1) in PyTorch flattens NCHW order (C, H, W)
    flat = jnp.transpose(y, (0, 3, 1, 2)).reshape(B, -1)          # (B, 1920)

    # fc1 + ReLU + dropout(p=0.6, identity at eval) + fc2 + LogSoftmax — one fused kernel.
    # TODO(synk): training-mode stochastic dropout / batch-stat BatchNorm not emitted.
    return fc_head(flat, p["fc1_w"], p["fc1_b"], p["fc2_w"], p["fc2_b"])


def _reference_forward(x_nchw, p):
    """Pure-JAX (XLA) reference for correctness checking."""
    eps = 1e-5
    x = jnp.transpose(x_nchw, (0, 2, 3, 1))

    def conv_block(x, w, b, g, beta, m, v):
        y = jax.lax.conv_general_dilated(
            x, jnp.transpose(w, (2, 3, 1, 0)), (1, 1), "VALID",
            dimension_numbers=("NHWC", "HWIO", "NHWC"))
        y = (y + b - m) / jnp.sqrt(v + eps) * g + beta
        y = jnp.maximum(y, 0.0)
        return jax.lax.reduce_window(y, -jnp.inf, jax.lax.max,
                                     (1, 2, 3, 1), (1, 2, 3, 1), "VALID")

    y = conv_block(x, p["w1"], p["b1"], p["bn1_g"], p["bn1_b"], p["bn1_m"], p["bn1_v"])
    y = conv_block(y, p["w2"], p["b2"], p["bn2_g"], p["bn2_b"], p["bn2_m"], p["bn2_v"])
    flat = jnp.transpose(y, (0, 3, 1, 2)).reshape(x_nchw.shape[0], -1)
    h = jnp.maximum(flat @ p["fc1_w"] + p["fc1_b"], 0.0)
    logits = h @ p["fc2_w"] + p["fc2_b"]
    return jax.nn.log_softmax(logits, axis=-1)


if __name__ == "__main__":
    key = jax.random.PRNGKey(0)
    pkey, xkey = jax.random.split(key)
    params = init_params(pkey)

    # Smallest input consistent with fc1 = Linear(64*15*2, 256): NCHW (2, 1, 12, 175)
    x = jax.random.normal(xkey, (2, 1, 12, 175), jnp.float32)

    fwd = jax.jit(lambda inp: afib_detector_forward(inp, params))
    out = jax.block_until_ready(fwd(x))

    assert out.shape == (2, 2), out.shape
    # log-softmax rows must exponentiate-sum to 1
    assert jnp.allclose(jnp.sum(jnp.exp(out), axis=1), 1.0, atol=1e-4)

    # cross-check against a pure-JAX/XLA reference of the same module
    ref = jax.block_until_ready(jax.jit(lambda inp: _reference_forward(inp, params))(x))
    max_err = float(jnp.max(jnp.abs(out - ref)))
    assert max_err < 5e-3, f"mismatch vs reference: {max_err}"

    print("KERNEL_OK")
</pallas_src>

<mosaic_0001>
module attributes {stable_mosaic.version = 11 : i64} {
  func.func @_conv_pool_kernel(%arg0: i32, %arg1: memref<1x6x275x33xf32, #tpu.memory_space<vmem>>, %arg2: memref<33x32xf32, #tpu.memory_space<vmem>>, %arg3: memref<1x32xf32, #tpu.memory_space<vmem>>, %arg4: memref<1x275x32xf32, #tpu.memory_space<vmem>>) attributes {dimension_semantics = [#tpu.dimension_semantics<parallel>], iteration_bounds = array<i64: 2>, scalar_prefetch = 0 : i64, scratch_operands = 0 : i64, tpu.core_type = #tpu.core_type<tc>, window_params = [{transform_indices = @transform_0, window_bounds = array<i64: 1, 6, 275, 33>}, {pipeline_mode = #tpu.pipeline_mode<synchronous>, transform_indices = @transform_1, window_bounds = array<i64: 33, 32>}, {pipeline_mode = #tpu.pipeline_mode<synchronous>, transform_indices = @transform_2, window_bounds = array<i64: 1, 32>}, {transform_indices = @transform_3, window_bounds = array<i64: 1, 275, 32>}]} {
    %c0 = arith.constant 0 : index
    %c0_0 = arith.constant 0 : index
    %0 = vector.load %arg2[%c0, %c0_0] : memref<33x32xf32, #tpu.memory_space<vmem>>, vector<33x32xf32>
    %c0_1 = arith.constant 0 : index
    %c0_2 = arith.constant 0 : index
    %c0_3 = arith.constant 0 : index
    %c0_4 = arith.constant 0 : index
    %1 = vector.load %arg1[%c0_1, %c0_2, %c0_3, %c0_4] : memref<1x6x275x33xf32, #tpu.memory_space<vmem>>, vector<1x1x275x33xf32>
    %2 = vector.shape_cast %1 : vector<1x1x275x33xf32> to vector<275x33xf32>
    %cst = arith.constant dense<0.000000e+00> : vector<275x32xf32>
    %3 = tpu.matmul %2, %0, %cst {dimension_numbers = #tpu.dot_dimension_numbers<[1], [0], [0], [1], [0, 0, 1, 1], [], []>} : vector<275x33xf32>, vector<33x32xf32>, vector<275x32xf32> -> vector<275x32xf32>
    %c0_5 = arith.constant 0 : index
    %c1 = arith.constant 1 : index
    %c0_6 = arith.constant 0 : index
    %c0_7 = arith.constant 0 : index
    %4 = vector.load %arg1[%c0_5, %c1, %c0_6, %c0_7] : memref<1x6x275x33xf32, #tpu.memory_space<vmem>>, vector<1x1x275x33xf32>
    %5 = vector.shape_cast %4 : vector<1x1x275x33xf32> to vector<275x33xf32>
    %cst_8 = arith.constant dense<0.000000e+00> : vector<275x32xf32>
    %6 = tpu.matmul %5, %0, %cst_8 {dimension_numbers = #tpu.dot_dimension_numbers<[1], [0], [0], [1], [0, 0, 1, 1], [], []>} : vector<275x33xf32>, vector<33x32xf32>, vector<275x32xf32> -> vector<275x32xf32>
    %7 = arith.maximumf %3, %6 : vector<275x32xf32>
    %c0_9 = arith.constant 0 : index
    %c2 = arith.constant 2 : index
    %c0_10 = arith.constant 0 : index
    %c0_11 = arith.constant 0 : index
    %8 = vector.load %arg1[%c0_9, %c2, %c0_10, %c0_11] : memref<1x6x275x33xf32, #tpu.memory_space<vmem>>, vector<1x1x275x33xf32>
    %9 = vector.shape_cast %8 : vector<1x1x275x33xf32> to vector<275x33xf32>
    %cst_12 = arith.constant dense<0.000000e+00> : vector<275x32xf32>
    %10 = tpu.matmul %9, %0, %cst_12 {dimension_numbers = #tpu.dot_dimension_numbers<[1], [0], [0], [1], [0, 0, 1, 1], [], []>} : vector<275x33xf32>, vector<33x32xf32>, vector<275x32xf32> -> vector<275x32xf32>
    %11 = arith.maximumf %7, %10 : vector<275x32xf32>
    %c0_13 = arith.constant 0 : index
    %c3 = arith.constant 3 : index
    %c0_14 = arith.constant 0 : index
    %c0_15 = arith.constant 0 : index
    %12 = vector.load %arg1[%c0_13, %c3, %c0_14, %c0_15] : memref<1x6x275x33xf32, #tpu.memory_space<vmem>>, vector<1x1x275x33xf32>
    %13 = vector.shape_cast %12 : vector<1x1x275x33xf32> to vector<275x33xf32>
    %cst_16 = arith.constant dense<0.000000e+00> : vector<275x32xf32>
    %14 = tpu.matmul %13, %0, %cst_16 {dimension_numbers = #tpu.dot_dimension_numbers<[1], [0], [0], [1], [0, 0, 1, 1], [], []>} : vector<275x33xf32>, vector<33x32xf32>, vector<275x32xf32> -> vector<275x32xf32>
    %15 = arith.maximumf %11, %14 : vector<275x32xf32>
    %c0_17 = arith.constant 0 : index
    %c4 = arith.constant 4 : index
    %c0_18 = arith.constant 0 : index
    %c0_19 = arith.constant 0 : index
    %16 = vector.load %arg1[%c0_17, %c4, %c0_18, %c0_19] : memref<1x6x275x33xf32, #tpu.memory_space<vmem>>, vector<1x1x275x33xf32>
    %17 = vector.shape_cast %16 : vector<1x1x275x33xf32> to vector<275x33xf32>
    %cst_20 = arith.constant dense<0.000000e+00> : vector<275x32xf32>
    %18 = tpu.matmul %17, %0, %cst_20 {dimension_numbers = #tpu.dot_dimension_numbers<[1], [0], [0], [1], [0, 0, 1, 1], [], []>} : vector<275x33xf32>, vector<33x32xf32>, vector<275x32xf32> -> vector<275x32xf32>
    %19 = arith.maximumf %15, %18 : vector<275x32xf32>
    %c0_21 = arith.constant 0 : index
    %c5 = arith.constant 5 : index
    %c0_22 = arith.constant 0 : index
    %c0_23 = arith.constant 0 : index
    %20 = vector.load %arg1[%c0_21, %c5, %c0_22, %c0_23] : memref<1x6x275x33xf32, #tpu.memory_space<vmem>>, vector<1x1x275x33xf32>
    %21 = vector.shape_cast %20 : vector<1x1x275x33xf32> to vector<275x33xf32>
    %cst_24 = arith.constant dense<0.000000e+00> : vector<275x32xf32>
    %22 = tpu.matmul %21, %0, %cst_24 {dimension_numbers = #tpu.dot_dimension_numbers<[1], [0], [0], [1], [0, 0, 1, 1], [], []>} : vector<275x33xf32>, vector<33x32xf32>, vector<275x32xf32> -> vector<275x32xf32>
    %23 = arith.maximumf %19, %22 : vector<275x32xf32>
    %c0_25 = arith.constant 0 : index
    %c0_26 = arith.constant 0 : index
    %24 = vector.load %arg3[%c0_25, %c0_26] : memref<1x32xf32, #tpu.memory_space<vmem>>, vector<1x32xf32>
    %25 = vector.broadcast %24 : vector<1x32xf32> to vector<275x32xf32>
    %26 = arith.addf %23, %25 : vector<275x32xf32>
    %cst_27 = arith.constant 0.000000e+00 : f32
    %27 = vector.broadcast %cst_27 : f32 to vector<275x32xf32>
    %28 = arith.maximumf %26, %27 : vector<275x32xf32>
    %29 = vector.shape_cast %28 : vector<275x32xf32> to vector<1x275x32xf32>
    %c0_28 = arith.constant 0 : index
    %c0_29 = arith.constant 0 : index
    %c0_30 = arith.constant 0 : index
    %30 = vector.load %arg4[%c0_28, %c0_29, %c0_30] : memref<1x275x32xf32, #tpu.memory_space<vmem>>, vector<1x275x32xf32>
    tpu.vector_store %arg4[%c0_28, %c0_29, %c0_30], %29 {strides = array<i32>} : memref<1x275x32xf32, #tpu.memory_space<vmem>>, vector<1x275x32xf32>,
    return
  }
  func.func @transform_0(%arg0: i32) -> (i32, i32, i32, i32) {
    %c0_i32 = arith.constant 0 : i32
    %c0_i32_0 = arith.constant 0 : i32
    %c0_i32_1 = arith.constant 0 : i32
    %c0_i32_2 = arith.constant 0 : i32
    return %arg0, %c0_i32, %c0_i32_0, %c0_i32_1 : i32, i32, i32, i32
  }
  func.func @transform_1(%arg0: i32) -> (i32, i32) {
    %c0_i32 = arith.constant 0 : i32
    %c0_i32_0 = arith.constant 0 : i32
    %c0_i32_1 = arith.constant 0 : i32
    return %c0_i32, %c0_i32_0 : i32, i32
  }
  func.func @transform_2(%arg0: i32) -> (i32, i32) {
    %c0_i32 = arith.constant 0 : i32
    %c0_i32_0 = arith.constant 0 : i32
    %c0_i32_1 = arith.constant 0 : i32
    return %c0_i32, %c0_i32_0 : i32, i32
  }
  func.func @transform_3(%arg0: i32) -> (i32, i32, i32) {
    %c0_i32 = arith.constant 0 : i32
    %c0_i32_0 = arith.constant 0 : i32
    %c0_i32_1 = arith.constant 0 : i32
    return %arg0, %c0_i32, %c0_i32_0 : i32, i32, i32
  }
}

module attributes {stable_mosaic.version = 11 : i64} {
  func.func @_conv_pool_kernel(%arg0: i32, %arg1: memref<1x6x30x704xf32, #tpu.memory_space<vmem>>, %arg2: memref<704x64xf32, #tpu.memory_space<vmem>>, %arg3: memref<1x64xf32, #tpu.memory_space<vmem>>, %arg4: memref<1x30x64xf32, #tpu.memory_space<vmem>>) attributes {dimension_semantics = [#tpu.dimension_semantics<parallel>], iteration_bounds = array<i64: 2>, scalar_prefetch = 0 : i64, scratch_operands = 0 : i64, tpu.core_type = #tpu.core_type<tc>, window_params = [{transform_indices = @transform_0, window_bounds = array<i64: 1, 6, 30, 704>}, {pipeline_mode = #tpu.pipeline_mode<synchronous>, transform_indices = @transform_1, window_bounds = array<i64: 704, 64>}, {pipeline_mode = #tpu.pipeline_mode<synchronous>, transform_indices = @transform_2, window_bounds = array<i64: 1, 64>}, {transform_indices = @transform_3, window_bounds = array<i64: 1, 30, 64>}]} {
    %c0 = arith.constant 0 : index
    %c0_0 = arith.constant 0 : index
    %0 = vector.load %arg2[%c0, %c0_0] : memref<704x64xf32, #tpu.memory_space<vmem>>, vector<704x64xf32>
    %c0_1 = arith.constant 0 : index
    %c0_2 = arith.constant 0 : index
    %c0_3 = arith.constant 0 : index
    %c0_4 = arith.constant 0 : index
    %1 = vector.load %arg1[%c0_1, %c0_2, %c0_3, %c0_4] : memref<1x6x30x704xf32, #tpu.memory_space<vmem>>, vector<1x1x30x704xf32>
    %2 = vector.shape_cast %1 : vector<1x1x30x704xf32> to vector<30x704xf32>
    %cst = arith.constant dense<0.000000e+00> : vector<30x64xf32>
    %3 = tpu.matmul %2, %0, %cst {dimension_numbers = #tpu.dot_dimension_numbers<[1], [0], [0], [1], [0, 0, 1, 1], [], []>} : vector<30x704xf32>, vector<704x64xf32>, vector<30x64xf32> -> vector<30x64xf32>
    %c0_5 = arith.constant 0 : index
    %c1 = arith.constant 1 : index
    %c0_6 = arith.constant 0 : index
    %c0_7 = arith.constant 0 : index
    %4 = vector.load %arg1[%c0_5, %c1, %c0_6, %c0_7] : memref<1x6x30x704xf32, #tpu.memory_space<vmem>>, vector<1x1x30x704xf32>
    %5 = vector.shape_cast %4 : vector<1x1x30x704xf32> to vector<30x704xf32>
    %cst_8 = arith.constant dense<0.000000e+00> : vector<30x64xf32>
    %6 = tpu.matmul %5, %0, %cst_8 {dimension_numbers = #tpu.dot_dimension_numbers<[1], [0], [0], [1], [0, 0, 1, 1], [], []>} : vector<30x704xf32>, vector<704x64xf32>, vector<30x64xf32> -> vector<30x64xf32>
    %7 = arith.maximumf %3, %6 : vector<30x64xf32>
    %c0_9 = arith.constant 0 : index
    %c2 = arith.constant 2 : index
    %c0_10 = arith.constant 0 : index
    %c0_11 = arith.constant 0 : index
    %8 = vector.load %arg1[%c0_9, %c2, %c0_10, %c0_11] : memref<1x6x30x704xf32, #tpu.memory_space<vmem>>, vector<1x1x30x704xf32>
    %9 = vector.shape_cast %8 : vector<1x1x30x704xf32> to vector<30x704xf32>
    %cst_12 = arith.constant dense<0.000000e+00> : vector<30x64xf32>
    %10 = tpu.matmul %9, %0, %cst_12 {dimension_numbers = #tpu.dot_dimension_numbers<[1], [0], [0], [1], [0, 0, 1, 1], [], []>} : vector<30x704xf32>, vector<704x64xf32>, vector<30x64xf32> -> vector<30x64xf32>
    %11 = arith.maximumf %7, %10 : vector<30x64xf32>
    %c0_13 = arith.constant 0 : index
    %c3 = arith.constant 3 : index
    %c0_14 = arith.constant 0 : index
    %c0_15 = arith.constant 0 : index
    %12 = vector.load %arg1[%c0_13, %c3, %c0_14, %c0_15] : memref<1x6x30x704xf32, #tpu.memory_space<vmem>>, vector<1x1x30x704xf32>
    %13 = vector.shape_cast %12 : vector<1x1x30x704xf32> to vector<30x704xf32>
    %cst_16 = arith.constant dense<0.000000e+00> : vector<30x64xf32>
    %14 = tpu.matmul %13, %0, %cst_16 {dimension_numbers = #tpu.dot_dimension_numbers<[1], [0], [0], [1], [0, 0, 1, 1], [], []>} : vector<30x704xf32>, vector<704x64xf32>, vector<30x64xf32> -> vector<30x64xf32>
    %15 = arith.maximumf %11, %14 : vector<30x64xf32>
    %c0_17 = arith.constant 0 : index
    %c4 = arith.constant 4 : index
    %c0_18 = arith.constant 0 : index
    %c0_19 = arith.constant 0 : index
    %16 = vector.load %arg1[%c0_17, %c4, %c0_18, %c0_19] : memref<1x6x30x704xf32, #tpu.memory_space<vmem>>, vector<1x1x30x704xf32>
    %17 = vector.shape_cast %16 : vector<1x1x30x704xf32> to vector<30x704xf32>
    %cst_20 = arith.constant dense<0.000000e+00> : vector<30x64xf32>
    %18 = tpu.matmul %17, %0, %cst_20 {dimension_numbers = #tpu.dot_dimension_numbers<[1], [0], [0], [1], [0, 0, 1, 1], [], []>} : vector<30x704xf32>, vector<704x64xf32>, vector<30x64xf32> -> vector<30x64xf32>
    %19 = arith.maximumf %15, %18 : vector<30x64xf32>
    %c0_21 = arith.constant 0 : index
    %c5 = arith.constant 5 : index
    %c0_22 = arith.constant 0 : index
    %c0_23 = arith.constant 0 : index
    %20 = vector.load %arg1[%c0_21, %c5, %c0_22, %c0_23] : memref<1x6x30x704xf32, #tpu.memory_space<vmem>>, vector<1x1x30x704xf32>
    %21 = vector.shape_cast %20 : vector<1x1x30x704xf32> to vector<30x704xf32>
    %cst_24 = arith.constant dense<0.000000e+00> : vector<30x64xf32>
    %22 = tpu.matmul %21, %0, %cst_24 {dimension_numbers = #tpu.dot_dimension_numbers<[1], [0], [0], [1], [0, 0, 1, 1], [], []>} : vector<30x704xf32>, vector<704x64xf32>, vector<30x64xf32> -> vector<30x64xf32>
    %23 = arith.maximumf %19, %22 : vector<30x64xf32>
    %c0_25 = arith.constant 0 : index
    %c0_26 = arith.constant 0 : index
    %24 = vector.load %arg3[%c0_25, %c0_26] : memref<1x64xf32, #tpu.memory_space<vmem>>, vector<1x64xf32>
    %25 = vector.broadcast %24 : vector<1x64xf32> to vector<30x64xf32>
    %26 = arith.addf %23, %25 : vector<30x64xf32>
    %cst_27 = arith.constant 0.000000e+00 : f32
    %27 = vector.broadcast %cst_27 : f32 to vector<30x64xf32>
    %28 = arith.maximumf %26, %27 : vector<30x64xf32>
    %29 = vector.shape_cast %28 : vector<30x64xf32> to vector<1x30x64xf32>
    %c0_28 = arith.constant 0 : index
    %c0_29 = arith.constant 0 : index
    %c0_30 = arith.constant 0 : index
    %30 = vector.load %arg4[%c0_28, %c0_29, %c0_30] : memref<1x30x64xf32, #tpu.memory_space<vmem>>, vector<1x30x64xf32>
    tpu.vector_store %arg4[%c0_28, %c0_29, %c0_30], %29 {strides = array<i32>} : memref<1x30x64xf32, #tpu.memory_space<vmem>>, vector<1x30x64xf32>,
    return
  }
  func.func @transform_0(%arg0: i32) -> (i32, i32, i32, i32) {
    %c0_i32 = arith.constant 0 : i32
    %c0_i32_0 = arith.constant 0 : i32
    %c0_i32_1 = arith.constant 0 : i32
    %c0_i32_2 = arith.constant 0 : i32
    return %arg0, %c0_i32, %c0_i32_0, %c0_i32_1 : i32, i32, i32, i32
  }
  func.func @transform_1(%arg0: i32) -> (i32, i32) {
    %c0_i32 = arith.constant 0 : i32
    %c0_i32_0 = arith.constant 0 : i32
    %c0_i32_1 = arith.constant 0 : i32
    return %c0_i32, %c0_i32_0 : i32, i32
  }
  func.func @transform_2(%arg0: i32) -> (i32, i32) {
    %c0_i32 = arith.constant 0 : i32
    %c0_i32_0 = arith.constant 0 : i32
    %c0_i32_1 = arith.constant 0 : i32
    return %c0_i32, %c0_i32_0 : i32, i32
  }
  func.func @transform_3(%arg0: i32) -> (i32, i32, i32) {
    %c0_i32 = arith.constant 0 : i32
    %c0_i32_0 = arith.constant 0 : i32
    %c0_i32_1 = arith.constant 0 : i32
    return %arg0, %c0_i32, %c0_i32_0 : i32, i32, i32
  }
}

module attributes {stable_mosaic.version = 11 : i64} {
  func.func @_fc_head_kernel(%arg0: i32, %arg1: memref<2x1920xf32, #tpu.memory_space<vmem>>, %arg2: memref<1920x256xf32, #tpu.memory_space<vmem>>, %arg3: memref<1x256xf32, #tpu.memory_space<vmem>>, %arg4: memref<256x2xf32, #tpu.memory_space<vmem>>, %arg5: memref<1x2xf32, #tpu.memory_space<vmem>>, %arg6: memref<2x2xf32, #tpu.memory_space<vmem>>) attributes {dimension_semantics = [#tpu.dimension_semantics<arbitrary>], iteration_bounds = array<i64: 1>, scalar_prefetch = 0 : i64, scratch_operands = 0 : i64, tpu.core_type = #tpu.core_type<tc>, window_params = [{pipeline_mode = #tpu.pipeline_mode<synchronous>, transform_indices = @transform_0, window_bounds = array<i64: 2, 1920>}, {pipeline_mode = #tpu.pipeline_mode<synchronous>, transform_indices = @transform_1, window_bounds = array<i64: 1920, 256>}, {pipeline_mode = #tpu.pipeline_mode<synchronous>, transform_indices = @transform_2, window_bounds = array<i64: 1, 256>}, {pipeline_mode = #tpu.pipeline_mode<synchronous>, transform_indices = @transform_3, window_bounds = array<i64: 256, 2>}, {pipeline_mode = #tpu.pipeline_mode<synchronous>, transform_indices = @transform_4, window_bounds = array<i64: 1, 2>}, {pipeline_mode = #tpu.pipeline_mode<synchronous>, transform_indices = @transform_5, window_bounds = array<i64: 2, 2>}]} {
    %c0 = arith.constant 0 : index
    %c0_0 = arith.constant 0 : index
    %0 = vector.load %arg1[%c0, %c0_0] : memref<2x1920xf32, #tpu.memory_space<vmem>>, vector<2x1920xf32>
    %c0_1 = arith.constant 0 : index
    %c0_2 = arith.constant 0 : index
    %1 = vector.load %arg2[%c0_1, %c0_2] : memref<1920x256xf32, #tpu.memory_space<vmem>>, vector<1920x256xf32>
    %cst = arith.constant dense<0.000000e+00> : vector<2x256xf32>
    %2 = tpu.matmul %0, %1, %cst {dimension_numbers = #tpu.dot_dimension_numbers<[1], [0], [0], [1], [0, 0, 1, 1], [], []>} : vector<2x1920xf32>, vector<1920x256xf32>, vector<2x256xf32> -> vector<2x256xf32>
    %c0_3 = arith.constant 0 : index
    %c0_4 = arith.constant 0 : index
    %3 = vector.load %arg3[%c0_3, %c0_4] : memref<1x256xf32, #tpu.memory_space<vmem>>, vector<1x256xf32>
    %4 = vector.broadcast %3 : vector<1x256xf32> to vector<2x256xf32>
    %5 = arith.addf %2, %4 : vector<2x256xf32>
    %cst_5 = arith.constant 0.000000e+00 : f32
    %6 = vector.broadcast %cst_5 : f32 to vector<2x256xf32>
    %7 = arith.maximumf %5, %6 : vector<2x256xf32>
    %c0_6 = arith.constant 0 : index
    %c0_7 = arith.constant 0 : index
    %8 = vector.load %arg4[%c0_6, %c0_7] : memref<256x2xf32, #tpu.memory_space<vmem>>, vector<256x2xf32>
    %cst_8 = arith.constant dense<0.000000e+00> : vector<2x2xf32>
    %9 = tpu.matmul %7, %8, %cst_8 {dimension_numbers = #tpu.dot_dimension_numbers<[1], [0], [0], [1], [0, 0, 1, 1], [], []>} : vector<2x256xf32>, vector<256x2xf32>, vector<2x2xf32> -> vector<2x2xf32>
    %c0_9 = arith.constant 0 : index
    %c0_10 = arith.constant 0 : index
    %10 = vector.load %arg5[%c0_9, %c0_10] : memref<1x2xf32, #tpu.memory_space<vmem>>, vector<1x2xf32>
    %11 = vector.broadcast %10 : vector<1x2xf32> to vector<2x2xf32>
    %12 = arith.addf %9, %11 : vector<2x2xf32>
    %cst_11 = arith.constant dense<0xFF800000> : vector<2xf32>
    %13 = vector.multi_reduction <maximumf>, %12, %cst_11 [1] : vector<2x2xf32> to vector<2xf32>
    %14 = vector.shape_cast %13 : vector<2xf32> to vector<2x1xf32>
    %15 = vector.broadcast %14 : vector<2x1xf32> to vector<2x2xf32>
    %16 = arith.subf %12, %15 : vector<2x2xf32>
    %17 = math.exp %16 : vector<2x2xf32>
    %cst_12 = arith.constant dense<0.000000e+00> : vector<2xf32>
    %18 = vector.multi_reduction <add>, %17, %cst_12 [1] : vector<2x2xf32> to vector<2xf32>
    %19 = vector.shape_cast %18 : vector<2xf32> to vector<2x1xf32>
    %20 = math.log %19 : vector<2x1xf32>
    %21 = vector.broadcast %20 : vector<2x1xf32> to vector<2x2xf32>
    %22 = arith.subf %16, %21 : vector<2x2xf32>
    %c0_13 = arith.constant 0 : index
    %c0_14 = arith.constant 0 : index
    %23 = vector.load %arg6[%c0_13, %c0_14] : memref<2x2xf32, #tpu.memory_space<vmem>>, vector<2x2xf32>
    tpu.vector_store %arg6[%c0_13, %c0_14], %22 {strides = array<i32>} : memref<2x2xf32, #tpu.memory_space<vmem>>, vector<2x2xf32>,
    return
  }
  func.func @transform_0(%arg0: i32) -> (i32, i32) {
    %c0_i32 = arith.constant 0 : i32
    %c0_i32_0 = arith.constant 0 : i32
    %c0_i32_1 = arith.constant 0 : i32
    return %c0_i32, %c0_i32_0 : i32, i32
  }
  func.func @transform_1(%arg0: i32) -> (i32, i32) {
    %c0_i32 = arith.constant 0 : i32
    %c0_i32_0 = arith.constant 0 : i32
    %c0_i32_1 = arith.constant 0 : i32
    return %c0_i32, %c0_i32_0 : i32, i32
  }
  func.func @transform_2(%arg0: i32) -> (i32, i32) {
    %c0_i32 = arith.constant 0 : i32
    %c0_i32_0 = arith.constant 0 : i32
    %c0_i32_1 = arith.constant 0 : i32
    return %c0_i32, %c0_i32_0 : i32, i32
  }
  func.func @transform_3(%arg0: i32) -> (i32, i32) {
    %c0_i32 = arith.constant 0 : i32
    %c0_i32_0 = arith.constant 0 : i32
    %c0_i32_1 = arith.constant 0 : i32
    return %c0_i32, %c0_i32_0 : i32, i32
  }
  func.func @transform_4(%arg0: i32) -> (i32, i32) {
    %c0_i32 = arith.constant 0 : i32
    %c0_i32_0 = arith.constant 0 : i32
    %c0_i32_1 = arith.constant 0 : i32
    return %c0_i32, %c0_i32_0 : i32, i32
  }
  func.func @transform_5(%arg0: i32) -> (i32, i32) {
    %c0_i32 = arith.constant 0 : i32
    %c0_i32_0 = arith.constant 0 : i32
    %c0_i32_1 = arith.constant 0 : i32
    return %c0_i32, %c0_i32_0 : i32, i32
  }
}

</mosaic_0001>

<llo_original>
// kernel: _lambda_.3
$region0: #{_lambda_.3}
  #allocation0 [shape = 'u32[]', space=smem, size = 0x4, offset = 0x4, fixed_abs, tag = 'smem constant byte address 0x4 - core index']
  #allocation1 [shape = 'u32[72,128]{1,0:T(1,128)}', space=vmem, size = 0x9000, scoped, tag = 'internal scratch']
  %s0 = inlined_call_operand.vmem [shape: f32[2,6,275,33], index: 0, kind: input, shape index: {}]
  %s1 = inlined_call_operand.vmem [shape: f32[33,32], index: 1, kind: input, shape index: {}]
  %s2 = inlined_call_operand.vmem [shape: f32[1,32], index: 2, kind: input, shape index: {}]
  %s3 = inlined_call_operand.vmem [shape: f32[2,275,32], index: 3, kind: output, shape index: {}]
  %s4 = sld [smem:[#allocation0]]
  $region45: #{_lambda_.3} parent=0
    _
  %s6 = ssub.s32 1, %s4
  %s7 = scalar_select 0, %s6, %s4
  loop: start=0, step=1, limit=4
  $region2: #{_lambda_.3} parent=0 // loop_pre_header
    _
  $region3: #{_lambda_.3} parent=0 // loop_header
    %s9 = sphi 0, %s13
    %p10 = scmp.ge.s32.totalorder %s9, 4
    %s19 = sphi 0, %s21
    %s22 = sphi 0, %s19
    %s23 = sphi 0, %s22
    %s39 = sphi 0, %s23
    %s43 = sphi 0, %s43
    %s45 = sphi 0, %s43
    %s46 = sphi 0, %s45
    %s60 = sphi 0, %s46
    %s64 = sphi 0, %s64
    %s66 = sphi 0, %s64
    %s67 = sphi 0, %s66
    %s81 = sphi 0, %s67
    %s87 = sphi 0, %s89
    %s90 = sphi 0, %s87
    %s91 = sphi 0, %s90
    %s107 = sphi 0, %s91
  $region4: #{_lambda_.3} parent=0 // loop_header_branch
    %12 = sbr.rel (%p10) target = $region8
  $region5: #{_lambda_.3} parent=0 // loop_body
    %s14 = ssub.s32 %s9, 1
    %s15 = ssub.s32 %s9, 2
    %s16 = sadd.s32 %s9, 1
    %s17 = ssub.s32 %s9, %s16
    %p18 = scmp.eq.s32.totalorder %s17, 0
    %s20 = sadd.s32 %s19, 1
    %s21 = scalar_select %p18, %s19, %s20
    %p24 = pneg %p18
    %p25 = scmp.eq.s32.totalorder %s9, 1
    %p26 = por %p24, %p25
    %p27 = scmp.ne.s32.totalorder %s19, %s22
    %p28 = scmp.eq.s32.totalorder %s9, 0
    %p29 = por %p27, %p28
    %p30 = scmp.ne.s32.totalorder %s19, %s22
    %p31 = scmp.eq.s32.totalorder %s14, 1
    %p32 = por %p30, %p31
    %p33 = scmp.ne.s32.totalorder %s22, %s23
    %p34 = scmp.eq.s32.totalorder %s14, 0
    %p35 = por %p33, %p34
    %p36 = scmp.ne.s32.totalorder %s22, %s23
    %p37 = scmp.eq.s32.totalorder %s15, 1
    %p38 = por %p36, %p37
    %p40 = scmp.ne.s32.totalorder %s23, %s39
    %p41 = scmp.eq.s32.totalorder %s15, 0
    %p42 = por %p40, %p41
    %s44 = sadd.s32 %s43, 1
    %p47 = scmp.eq.s32.totalorder %s9, 1
    %p48 = scmp.ne.s32.totalorder %s43, %s45
    %p49 = scmp.eq.s32.totalorder %s9, 0
    %p50 = por %p48, %p49
    %p51 = scmp.ne.s32.totalorder %s43, %s45
    %p52 = scmp.eq.s32.totalorder %s14, 1
    %p53 = por %p51, %p52
    %p54 = scmp.ne.s32.totalorder %s45, %s46
    %p55 = scmp.eq.s32.totalorder %s14, 0
    %p56 = por %p54, %p55
    %p57 = scmp.ne.s32.totalorder %s45, %s46
    %p58 = scmp.eq.s32.totalorder %s15, 1
    %p59 = por %p57, %p58
    %p61 = scmp.ne.s32.totalorder %s46, %s60
    %p62 = scmp.eq.s32.totalorder %s15, 0
    %p63 = por %p61, %p62
    %s65 = sadd.s32 %s64, 1
    %p68 = scmp.eq.s32.totalorder %s9, 1
    %p69 = scmp.ne.s32.totalorder %s64, %s66
    %p70 = scmp.eq.s32.totalorder %s9, 0
    %p71 = por %p69, %p70
    %p72 = scmp.ne.s32.totalorder %s64, %s66
    %p73 = scmp.eq.s32.totalorder %s14, 1
    %p74 = por %p72, %p73
    %p75 = scmp.ne.s32.totalorder %s66, %s67
    %p76 = scmp.eq.s32.totalorder %s14, 0
    %p77 = por %p75, %p76
    %p78 = scmp.ne.s32.totalorder %s66, %s67
    %p79 = scmp.eq.s32.totalorder %s15, 1
    %p80 = por %p78, %p79
    %p82 = scmp.ne.s32.totalorder %s67, %s81
    %p83 = scmp.eq.s32.totalorder %s15, 0
    %p84 = por %p82, %p83
    %s85 = ssub.s32 %s9, %s16
    %p86 = scmp.eq.s32.totalorder %s85, 0
    %s88 = sadd.s32 %s87, 1
    %s89 = scalar_select %p86, %s87, %s88
    %p92 = pneg %p86
    %p93 = scmp.eq.s32.totalorder %s9, 1
    %p94 = por %p92, %p93
    %p95 = scmp.ne.s32.totalorder %s87, %s90
    %p96 = scmp.eq.s32.totalorder %s9, 0
    %p97 = por %p95, %p96
    %p98 = scmp.ne.s32.totalorder %s87, %s90
    %p99 = scmp.eq.s32.totalorder %s14, 1
    %p100 = por %p98, %p99
    %p101 = scmp.ne.s32.totalorder %s90, %s91
    %p102 = scmp.eq.s32.totalorder %s14, 0
    %p103 = por %p101, %p102
    %p104 = scmp.ne.s32.totalorder %s90, %s91
    %p105 = scmp.eq.s32.totalorder %s15, 1
    %p106 = por %p104, %p105
    %p108 = scmp.ne.s32.totalorder %s91, %s107
    %p109 = scmp.eq.s32.totalorder %s15, 0
    %p110 = por %p108, %p109
    %p111 = scmp.le.s32.totalorder 1, %s9
    %p112 = scmp.lt.s32.totalorder %s9, 3
    %p113 = pnand %p111, %p112
    %p114 = pneg %p113
    // Predicated region
    $region9: #{_lambda_.3} parent=5 // pred_check
      _
    $region10: #{_lambda_.3} parent=5 // pred_check_branch
      %116 = sbr.rel (%p113) target = $region12
    $region11: #{_lambda_.3} parent=5 // pred_region
      %s117 = ssub.s32 %s9, 1
      // Predicated region
      $region13: #{_lambda_.3} parent=11 // pred_check
        %p118 = pneg %p56
      $region14: #{_lambda_.3} parent=11 // pred_check_branch
        %120 = sbr.rel (%p118) target = $region16
      $region15: #{_lambda_.3} parent=11 // pred_region
        _
      $region16: #{_lambda_.3} parent=11 // pred_fallthru
        _
      // Predicated region
      $region17: #{_lambda_.3} parent=11 // pred_check
        %p121 = pneg %p77
      $region18: #{_lambda_.3} parent=11 // pred_check_branch
        %123 = sbr.rel (%p121) target = $region20
      $region19: #{_lambda_.3} parent=11 // pred_region
        _
      $region20: #{_lambda_.3} parent=11 // pred_fallthru
        _
    $region12: #{_lambda_.3} parent=5 // pred_fallthru
      _
    %p124 = scmp.lt.s32.totalorder %s9, 2
    // Predicated region
    $region21: #{_lambda_.3} parent=5 // pred_check
      %p125 = pneg %p124
    $region22: #{_lambda_.3} parent=5 // pred_check_branch
      %127 = sbr.rel (%p125) target = $region24
    $region23: #{_lambda_.3} parent=5 // pred_region
      // Predicated region
      $region25: #{_lambda_.3} parent=23 // pred_check
        %p128 = pneg %p29
      $region26: #{_lambda_.3} parent=23 // pred_check_branch
        %130 = sbr.rel (%p128) target = $region28
      $region27: #{_lambda_.3} parent=23 // pred_region
        %p131 = scmp.lt.s32.totalorder %s9, 1
        %s132 = scalar_select %p131, %s9, 1
        %s133 = smul.addr %s132, 210
        %s134 = smul.addr %s133, 8
        %s135 = scalar_lea.vmem %s0, %s134
      $region28: #{_lambda_.3} parent=23 // pred_fallthru
        _
    $region24: #{_lambda_.3} parent=5 // pred_fallthru
      _
    %p136 = scmp.le.s32.totalorder 1, %s9
    %p137 = scmp.lt.s32.totalorder %s9, 3
    %p138 = pnand %p136, %p137
    %p139 = pneg %p138
    // Predicated region
    $region29: #{_lambda_.3} parent=5 // pred_check
      _
    $region30: #{_lambda_.3} parent=5 // pred_check_branch
      %141 = sbr.rel (%p138) target = $region32
    $region31: #{_lambda_.3} parent=5 // pred_region
      %s142 = ssub.s32 %s9, 1
      %p143 = scmp.lt.s32.totalorder %s14, 1
      %s144 = scalar_select %p143, %s14, 1
      %s145 = smul.addr %s144, 210
      %s146 = smul.addr %s145, 8
      %s147 = scalar_lea.vmem %s0, %s146
      %p148 = pneg %p35
      %p149 = pneg %p32
      %p150 = pneg %p56
      %p151 = pneg %p53
      %p152 = pneg %p77
      %p153 = pneg %p74
      %p154 = pneg %p103
      %p155 = pneg %p100
      %p156 = scmp.lt.s32.totalorder %s14, 1
      %s157 = scalar_select %p156, %s14, 1
      %s158 = smul.addr %s157, 35
      %s159 = smul.addr %s158, 8
      %s160 = scalar_lea.vmem %s3, %s159
      %p161 = scmp.lt.s32.totalorder %s14, 1
      %s162 = scalar_select %p161, %s14, 1
      %s163 = smul.addr %s162, 210
      %s164 = smul.addr %s163, 8
      %s165 = scalar_lea.vmem %s0, %s164
      %p166 = scmp.lt.s32.totalorder %s14, 1
      %s167 = scalar_select %p166, %s14, 1
      %s168 = smul.addr %s167, 35
      %s169 = smul.addr %s168, 8
      %s170 = scalar_lea.vmem %s3, %s169
      %v171 = vld [vmem:[%s1] sm:$0xff]
      %v172 = vld [vmem:[%s1 + $0x8] sm:$0xff]
      %v173 = vld [vmem:[%s1 + $0x10] sm:$0xff]
      %v174 = vld [vmem:[%s1 + $0x18] sm:$0xff]
      %v175 = vld [vmem:[%s1 + $0x20] sm:$0x1]
      %v176 = vld [vmem:[%s165] sm:$0xff]
      %v177 = vld [vmem:[%s165 + $0x8] sm:$0xff]
      %v178 = vld [vmem:[%s165 + $0x10] sm:$0xff]
      %v179 = vld [vmem:[%s165 + $0x18] sm:$0xff]
      %v180 = vld [vmem:[%s165 + $0x20] sm:$0xff]
      %v181 = vld [vmem:[%s165 + $0x28] sm:$0xff]
      %v182 = vld [vmem:[%s165 + $0x30] sm:$0xff]
      %v183 = vld [vmem:[%s165 + $0x38] sm:$0xff]
      %v184 = vld [vmem:[%s165 + $0x40] sm:$0xff]
      %v185 = vld [vmem:[%s165 + $0x48] sm:$0xff]
      %v186 = vld [vmem:[%s165 + $0x50] sm:$0xff]
      %v187 = vld [vmem:[%s165 + $0x58] sm:$0xff]
      %v188 = vld [vmem:[%s165 + $0x60] sm:$0xff]
      %v189 = vld [vmem:[%s165 + $0x68] sm:$0xff]
      %v190 = vld [vmem:[%s165 + $0x70] sm:$0xff]
      %v191 = vld [vmem:[%s165 + $0x78] sm:$0xff]
      %v192 = vld [vmem:[%s165 + $0x80] sm:$0xff]
      %v193 = vld [vmem:[%s165 + $0x88] sm:$0xff]
      %v194 = vld [vmem:[%s165 + $0x90] sm:$0xff]
      %v195 = vld [vmem:[%s165 + $0x98] sm:$0xff]
      %v196 = vld [vmem:[%s165 + $0xa0] sm:$0xff]
      %v197 = vld [vmem:[%s165 + $0xa8] sm:$0xff]
      %v198 = vld [vmem:[%s165 + $0xb0] sm:$0xff]
      %v199 = vld [vmem:[%s165 + $0xb8] sm:$0xff]
      %v200 = vld [vmem:[%s165 + $0xc0] sm:$0xff]
      %v201 = vld [vmem:[%s165 + $0xc8] sm:$0xff]
      %v202 = vld [vmem:[%s165 + $0xd0] sm:$0xff]
      %v203 = vld [vmem:[%s165 + $0xd8] sm:$0xff]
      %v204 = vld [vmem:[%s165 + $0xe0] sm:$0xff]
      %v205 = vld [vmem:[%s165 + $0xe8] sm:$0xff]
      %v206 = vld [vmem:[%s165 + $0xf0] sm:$0xff]
      %v207 = vld [vmem:[%s165 + $0xf8] sm:$0xff]
      %v208 = vld [vmem:[%s165 + $0x100] sm:$0xff]
      %v209 = vld [vmem:[%s165 + $0x108] sm:$0xff]
      %v210 = vld [vmem:[%s165 + $0x110] sm:$0x7]
      %vm211 = vcmask 269312
      %v213 = vsel %vm211, %v176, 0
      %v216 = vsel %vm211, %v177, 0
      %v219 = vsel %vm211, %v178, 0
      %v222 = vsel %vm211, %v179, 0
      %v225 = vsel %vm211, %v180, 0
      %v228 = vsel %vm211, %v181, 0
      %v231 = vsel %vm211, %v182, 0
      %v234 = vsel %vm211, %v183, 0
      %v237 = vsel %vm211, %v184, 0
      %v240 = vsel %vm211, %v185, 0
      %v243 = vsel %vm211, %v186, 0
      %v246 = vsel %vm211, %v187, 0
      %v249 = vsel %vm211, %v188, 0
      %v252 = vsel %vm211, %v189, 0
      %v255 = vsel %vm211, %v190, 0
      %v258 = vsel %vm211, %v191, 0
      %v261 = vsel %vm211, %v192, 0
      %v264 = vsel %vm211, %v193, 0
      %v267 = vsel %vm211, %v194, 0
      %v270 = vsel %vm211, %v195, 0
      %v273 = vsel %vm211, %v196, 0
      %v276 = vsel %vm211, %v197, 0
      %v279 = vsel %vm211, %v198, 0
      %v282 = vsel %vm211, %v199, 0
      %v285 = vsel %vm211, %v200, 0
      %v288 = vsel %vm211, %v201, 0
      %v291 = vsel %vm211, %v202, 0
      %v294 = vsel %vm211, %v203, 0
      %v297 = vsel %vm211, %v204, 0
      %v300 = vsel %vm211, %v205, 0
      %v303 = vsel %vm211, %v206, 0
      %v306 = vsel %vm211, %v207, 0
      %v309 = vsel %vm211, %v208, 0
      %v312 = vsel %vm211, %v209, 0
      %v315 = vsel %vm211, %v210, 0
      %vm317 = vcmask 1040384
      %v319 = vsel %vm317, %v175, 0
      %321 = vmatpush.msra.mxu0 0.0
      %322 = vmatpush.msra.mxu0 0.0
      %323 = vmatpush.msra.mxu0 0.0
      %324 = vmatpush.msra.mxu0 0.0
      %325 = vmatpush.msra.mxu0 0.0
      %326 = vmatpush.msra.mxu0 0.0
      %327 = vmatpush.msra.mxu0 0.0
      %328 = vmatpush.msra.mxu0 0.0
      %329 = vmatpush.msra.mxu0 0.0
      %330 = vmatpush.msra.mxu0 0.0
      %331 = vmatpush.msra.mxu0 0.0
      %332 = vmatpush.msra.mxu0 %v319
      %333 = vmatpush.msra.mxu0 %v174
      %334 = vmatpush.msra.mxu0 %v173
      %335 = vmatpush.msra.mxu0 %v172
      %336 = vmatpush.msra.mxu0 %v171
      %337 = vmatmul.f32.gmra.mxu0 %v213
      %v338 = vpop.f32.mrf.mxu0
      %v339 = vadd.f32 0.0, %v338
      %340 = vmatmul.f32.gmra.mxu0 %v216
      %v341 = vpop.f32.mrf.mxu0
      %v342 = vadd.f32 0.0, %v341
      %343 = vmatmul.f32.gmra.mxu0 %v219
      %v344 = vpop.f32.mrf.mxu0
      %v345 = vadd.f32 0.0, %v344
      %346 = vmatmul.f32.gmra.mxu0 %v222
      %v347 = vpop.f32.mrf.mxu0
      %v348 = vadd.f32 0.0, %v347
      %349 = vmatmul.f32.gmra.mxu0 %v225
      %v350 = vpop.f32.mrf.mxu0
      %v351 = vadd.f32 0.0, %v350
      %352 = vmatmul.f32.gmra.mxu0 %v228
      %v353 = vpop.f32.mrf.mxu0
      %v354 = vadd.f32 0.0, %v353
      %355 = vmatmul.f32.gmra.mxu0 %v231
      %v356 = vpop.f32.mrf.mxu0
      %v357 = vadd.f32 0.0, %v356
      %358 = vmatmul.f32.gmra.mxu0 %v234
      %v359 = vpop.f32.mrf.mxu0
      %v360 = vadd.f32 0.0, %v359
      %361 = vmatmul.f32.gmra.mxu0 %v237
      %v362 = vpop.f32.mrf.mxu0
      %v363 = vadd.f32 0.0, %v362
      %364 = vmatmul.f32.gmra.mxu0 %v240
      %v365 = vpop.f32.mrf.mxu0
      %v366 = vadd.f32 0.0, %v365
      %367 = vmatmul.f32.gmra.mxu0 %v243
      %v368 = vpop.f32.mrf.mxu0
      %v369 = vadd.f32 0.0, %v368
      %370 = vmatmul.f32.gmra.mxu0 %v246
      %v371 = vpop.f32.mrf.mxu0
      %v372 = vadd.f32 0.0, %v371
      %373 = vmatmul.f32.gmra.mxu0 %v249
      %v374 = vpop.f32.mrf.mxu0
      %v375 = vadd.f32 0.0, %v374
      %376 = vmatmul.f32.gmra.mxu0 %v252
      %v377 = vpop.f32.mrf.mxu0
      %v378 = vadd.f32 0.0, %v377
      %379 = vmatmul.f32.gmra.mxu0 %v255
      %v380 = vpop.f32.mrf.mxu0
      %v381 = vadd.f32 0.0, %v380
      %382 = vmatmul.f32.gmra.mxu0 %v258
      %v383 = vpop.f32.mrf.mxu0
      %v384 = vadd.f32 0.0, %v383
      %385 = vmatmul.f32.gmra.mxu0 %v261
      %v386 = vpop.f32.mrf.mxu0
      %v387 = vadd.f32 0.0, %v386
      %388 = vmatmul.f32.gmra.mxu0 %v264
      %v389 = vpop.f32.mrf.mxu0
      %v390 = vadd.f32 0.0, %v389
      %391 = vmatmul.f32.gmra.mxu0 %v267
      %v392 = vpop.f32.mrf.mxu0
      %v393 = vadd.f32 0.0, %v392
      %394 = vmatmul.f32.gmra.mxu0 %v270
      %v395 = vpop.f32.mrf.mxu0
      %v396 = vadd.f32 0.0, %v395
      %397 = vmatmul.f32.gmra.mxu0 %v273
      %v398 = vpop.f32.mrf.mxu0
      %v399 = vadd.f32 0.0, %v398
      %400 = vmatmul.f32.gmra.mxu0 %v276
      %v401 = vpop.f32.mrf.mxu0
      %v402 = vadd.f32 0.0, %v401
      %403 = vmatmul.f32.gmra.mxu0 %v279
      %v404 = vpop.f32.mrf.mxu0
      %v405 = vadd.f32 0.0, %v404
      %406 = vmatmul.f32.gmra.mxu0 %v282
      %v407 = vpop.f32.mrf.mxu0
      %v408 = vadd.f32 0.0, %v407
      %409 = vmatmul.f32.gmra.mxu0 %v285
      %v410 = vpop.f32.mrf.mxu0
      %v411 = vadd.f32 0.0, %v410
      %412 = vmatmul.f32.gmra.mxu0 %v288
      %v413 = vpop.f32.mrf.mxu0
      %v414 = vadd.f32 0.0, %v413
      %415 = vmatmul.f32.gmra.mxu0 %v291
      %v416 = vpop.f32.mrf.mxu0
      %v417 = vadd.f32 0.0, %v416
      %418 = vmatmul.f32.gmra.mxu0 %v294
      %v419 = vpop.f32.mrf.mxu0
      %v420 = vadd.f32 0.0, %v419
      %421 = vmatmul.f32.gmra.mxu0 %v297
      %v422 = vpop.f32.mrf.mxu0
      %v423 = vadd.f32 0.0, %v422
      %424 = vmatmul.f32.gmra.mxu0 %v300
      %v425 = vpop.f32.mrf.mxu0
      %v426 = vadd.f32 0.0, %v425
      %427 = vmatmul.f32.gmra.mxu0 %v303
      %v428 = vpop.f32.mrf.mxu0
      %v429 = vadd.f32 0.0, %v428
      %430 = vmatmul.f32.gmra.mxu0 %v306
      %v431 = vpop.f32.mrf.mxu0
      %v432 = vadd.f32 0.0, %v431
      %433 = vmatmul.f32.gmra.mxu0 %v309
      %v434 = vpop.f32.mrf.mxu0
      %v435 = vadd.f32 0.0, %v434
      %436 = vmatmul.f32.gmra.mxu0 %v312
      %v437 = vpop.f32.mrf.mxu0
      %v438 = vadd.f32 0.0, %v437
      %439 = vmatmul.f32.gmra.mxu0 %v315
      %v440 = vpop.f32.mrf.mxu0
      %v441 = vadd.f32 0.0, %v440
      %442 = vdwg.mxu0
      %s443 = scalar_lea.vmem %s165, 280
      %v444 = vld [vmem:[%s443] sm:$0xff]
      %v445 = vld [vmem:[%s443 + $0x8] sm:$0xff]
      %v446 = vld [vmem:[%s443 + $0x10] sm:$0xff]
      %v447 = vld [vmem:[%s443 + $0x18] sm:$0xff]
      %v448 = vld [vmem:[%s443 + $0x20] sm:$0xff]
      %v449 = vld [vmem:[%s443 + $0x28] sm:$0xff]
      %v450 = vld [vmem:[%s443 + $0x30] sm:$0xff]
      %v451 = vld [vmem:[%s443 + $0x38] sm:$0xff]
      %v452 = vld [vmem:[%s443 + $0x40] sm:$0xff]
      %v453 = vld [vmem:[%s443 + $0x48] sm:$0xff]
      %v454 = vld [vmem:[%s443 + $0x50] sm:$0xff]
      %v455 = vld [vmem:[%s443 + $0x58] sm:$0xff]
      %v456 = vld [vmem:[%s443 + $0x60] sm:$0xff]
      %v457 = vld [vmem:[%s443 + $0x68] sm:$0xff]
      %v458 = vld [vmem:[%s443 + $0x70] sm:$0xff]
      %v459 = vld [vmem:[%s443 + $0x78] sm:$0xff]
      %v460 = vld [vmem:[%s443 + $0x80] sm:$0xff]
      %v461 = vld [vmem:[%s443 + $0x88] sm:$0xff]
      %v462 = vld [vmem:[%s443 + $0x90] sm:$0xff]
      %v463 = vld [vmem:[%s443 + $0x98] sm:$0xff]
      %v464 = vld [vmem:[%s443 + $0xa0] sm:$0xff]
      %v465 = vld [vmem:[%s443 + $0xa8] sm:$0xff]
      %v466 = vld [vmem:[%s443 + $0xb0] sm:$0xff]
      %v467 = vld [vmem:[%s443 + $0xb8] sm:$0xff]
      %v468 = vld [vmem:[%s443 + $0xc0] sm:$0xff]
      %v469 = vld [vmem:[%s443 + $0xc8] sm:$0xff]
      %v470 = vld [vmem:[%s443 + $0xd0] sm:$0xff]
      %v471 = vld [vmem:[%s443 + $0xd8] sm:$0xff]
      %v472 = vld [vmem:[%s443 + $0xe0] sm:$0xff]
      %v473 = vld [vmem:[%s443 + $0xe8] sm:$0xff]
      %v474 = vld [vmem:[%s443 + $0xf0] sm:$0xff]
      %v475 = vld [vmem:[%s443 + $0xf8] sm:$0xff]
      %v476 = vld [vmem:[%s443 + $0x100] sm:$0xff]
      %v477 = vld [vmem:[%s443 + $0x108] sm:$0xff]
      %v478 = vld [vmem:[%s443 + $0x110] sm:$0x7]
      %v480 = vsel %vm211, %v444, 0
      %v483 = vsel %vm211, %v445, 0
      %v486 = vsel %vm211, %v446, 0
      %v489 = vsel %vm211, %v447, 0
      %v492 = vsel %vm211, %v448, 0
      %v495 = vsel %vm211, %v449, 0
      %v498 = vsel %vm211, %v450, 0
      %v501 = vsel %vm211, %v451, 0
      %v504 = vsel %vm211, %v452, 0
      %v507 = vsel %vm211, %v453, 0
      %v510 = vsel %vm211, %v454, 0
      %v513 = vsel %vm211, %v455, 0
      %v516 = vsel %vm211, %v456, 0
      %v519 = vsel %vm211, %v457, 0
      %v522 = vsel %vm211, %v458, 0
      %v525 = vsel %vm211, %v459, 0
      %v528 = vsel %vm211, %v460, 0
      %v531 = vsel %vm211, %v461, 0
      %v534 = vsel %vm211, %v462, 0
      %v537 = vsel %vm211, %v463, 0
      %v540 = vsel %vm211, %v464, 0
      %v543 = vsel %vm211, %v465, 0
      %v546 = vsel %vm211, %v466, 0
      %v549 = vsel %vm211, %v467, 0
      %v552 = vsel %vm211, %v468, 0
      %v555 = vsel %vm211, %v469, 0
      %v558 = vsel %vm211, %v470, 0
      %v561 = vsel %vm211, %v471, 0
      %v564 = vsel %vm211, %v472, 0
      %v567 = vsel %vm211, %v473, 0
      %v570 = vsel %vm211, %v474, 0
      %v573 = vsel %vm211, %v475, 0
      %v576 = vsel %vm211, %v476, 0
      %v579 = vsel %vm211, %v477, 0
      %v582 = vsel %vm211, %v478, 0
      %584 = vmatpush.msra.mxu0 0.0
      %585 = vmatpush.msra.mxu0 0.0
      %586 = vmatpush.msra.mxu0 0.0
      %587 = vmatpush.msra.mxu0 0.0
      %588 = vmatpush.msra.mxu0 0.0
      %589 = vmatpush.msra.mxu0 0.0
      %590 = vmatpush.msra.mxu0 0.0
      %591 = vmatpush.msra.mxu0 0.0
      %592 = vmatpush.msra.mxu0 0.0
      %593 = vmatpush.msra.mxu0 0.0
      %594 = vmatpush.msra.mxu0 0.0
      %595 = vmatpush.msra.mxu0 %v319
      %596 = vmatpush.msra.mxu0 %v174
      %597 = vmatpush.msra.mxu0 %v173
      %598 = vmatpush.msra.mxu0 %v172
      %599 = vmatpush.msra.mxu0 %v171
      %600 = vmatmul.f32.gmra.mxu0 %v480
      %v601 = vpop.f32.mrf.mxu0
      %v602 = vadd.f32 0.0, %v601
      %603 = vmatmul.f32.gmra.mxu0 %v483
      %v604 = vpop.f32.mrf.mxu0
      %v605 = vadd.f32 0.0, %v604
      %606 = vmatmul.f32.gmra.mxu0 %v486
      %v607 = vpop.f32.mrf.mxu0
      %v608 = vadd.f32 0.0, %v607
      %609 = vmatmul.f32.gmra.mxu0 %v489
      %v610 = vpop.f32.mrf.mxu0
      %v611 = vadd.f32 0.0, %v610
      %612 = vmatmul.f32.gmra.mxu0 %v492
      %v613 = vpop.f32.mrf.mxu0
      %v614 = vadd.f32 0.0, %v613
      %615 = vmatmul.f32.gmra.mxu0 %v495
      %v616 = vpop.f32.mrf.mxu0
      %v617 = vadd.f32 0.0, %v616
      %618 = vmatmul.f32.gmra.mxu0 %v498
      %v619 = vpop.f32.mrf.mxu0
      %v620 = vadd.f32 0.0, %v619
      %621 = vmatmul.f32.gmra.mxu0 %v501
      %v622 = vpop.f32.mrf.mxu0
      %v623 = vadd.f32 0.0, %v622
      %624 = vmatmul.f32.gmra.mxu0 %v504
      %v625 = vpop.f32.mrf.mxu0
      %v626 = vadd.f32 0.0, %v625
      %627 = vmatmul.f32.gmra.mxu0 %v507
      %v628 = vpop.f32.mrf.mxu0
      %v629 = vadd.f32 0.0, %v628
      %630 = vmatmul.f32.gmra.mxu0 %v510
      %v631 = vpop.f32.mrf.mxu0
      %v632 = vadd.f32 0.0, %v631
      %633 = vmatmul.f32.gmra.mxu0 %v513
      %v634 = vpop.f32.mrf.mxu0
      %v635 = vadd.f32 0.0, %v634
      %636 = vmatmul.f32.gmra.mxu0 %v516
      %v637 = vpop.f32.mrf.mxu0
      %v638 = vadd.f32 0.0, %v637
      %639 = vmatmul.f32.gmra.mxu0 %v519
      %v640 = vpop.f32.mrf.mxu0
      %v641 = vadd.f32 0.0, %v640
      %642 = vmatmul.f32.gmra.mxu0 %v522
      %v643 = vpop.f32.mrf.mxu0
      %v644 = vadd.f32 0.0, %v643
      %645 = vmatmul.f32.gmra.mxu0 %v525
      %v646 = vpop.f32.mrf.mxu0
      %v647 = vadd.f32 0.0, %v646
      %648 = vmatmul.f32.gmra.mxu0 %v528
      %v649 = vpop.f32.mrf.mxu0
      %v650 = vadd.f32 0.0, %v649
      %651 = vmatmul.f32.gmra.mxu0 %v531
      %v652 = vpop.f32.mrf.mxu0
      %v653 = vadd.f32 0.0, %v652
      %654 = vmatmul.f32.gmra.mxu0 %v534
      %v655 = vpop.f32.mrf.mxu0
      %v656 = vadd.f32 0.0, %v655
      %657 = vmatmul.f32.gmra.mxu0 %v537
      %v658 = vpop.f32.mrf.mxu0
      %v659 = vadd.f32 0.0, %v658
      %660 = vmatmul.f32.gmra.mxu0 %v540
      %v661 = vpop.f32.mrf.mxu0
      %v662 = vadd.f32 0.0, %v661
      %663 = vmatmul.f32.gmra.mxu0 %v543
      %v664 = vpop.f32.mrf.mxu0
      %v665 = vadd.f32 0.0, %v664
      %666 = vmatmul.f32.gmra.mxu0 %v546
      %v667 = vpop.f32.mrf.mxu0
      %v668 = vadd.f32 0.0, %v667
      %669 = vmatmul.f32.gmra.mxu0 %v549
      %v670 = vpop.f32.mrf.mxu0
      %v671 = vadd.f32 0.0, %v670
      %672 = vmatmul.f32.gmra.mxu0 %v552
      %v673 = vpop.f32.mrf.mxu0
      %v674 = vadd.f32 0.0, %v673
      %675 = vmatmul.f32.gmra.mxu0 %v555
      %v676 = vpop.f32.mrf.mxu0
      %v677 = vadd.f32 0.0, %v676
      %678 = vmatmul.f32.gmra.mxu0 %v558
      %v679 = vpop.f32.mrf.mxu0
      %v680 = vadd.f32 0.0, %v679
      %681 = vmatmul.f32.gmra.mxu0 %v561
      %v682 = vpop.f32.mrf.mxu0
      %v683 = vadd.f32 0.0, %v682
      %684 = vmatmul.f32.gmra.mxu0 %v564
      %v685 = vpop.f32.mrf.mxu0
      %v686 = vadd.f32 0.0, %v685
      %687 = vmatmul.f32.gmra.mxu0 %v567
      %v688 = vpop.f32.mrf.mxu0
      %v689 = vadd.f32 0.0, %v688
      %690 = vmatmul.f32.gmra.mxu0 %v570
      %v691 = vpop.f32.mrf.mxu0
      %v692 = vadd.f32 0.0, %v691
      %693 = vmatmul.f32.gmra.mxu0 %v573
      %v694 = vpop.f32.mrf.mxu0
      %v695 = vadd.f32 0.0, %v694
      %696 = vmatmul.f32.gmra.mxu0 %v576
      %v697 = vpop.f32.mrf.mxu0
      %v698 = vadd.f32 0.0, %v697
      %699 = vmatmul.f32.gmra.mxu0 %v579
      %v700 = vpop.f32.mrf.mxu0
      %v701 = vadd.f32 0.0, %v700
      %702 = vmatmul.f32.gmra.mxu0 %v582
      %v703 = vpop.f32.mrf.mxu0
      %v704 = vadd.f32 0.0, %v703
      %705 = vdwg.mxu0
      %v706 = vmax.f32 %v339, %v602
      %v707 = vmax.f32 %v342, %v605
      %v708 = vmax.f32 %v345, %v608
      %v709 = vmax.f32 %v348, %v611
      %v710 = vmax.f32 %v351, %v614
      %v711 = vmax.f32 %v354, %v617
      %v712 = vmax.f32 %v357, %v620
      %v713 = vmax.f32 %v360, %v623
      %v714 = vmax.f32 %v363, %v626
      %v715 = vmax.f32 %v366, %v629
      %v716 = vmax.f32 %v369, %v632
      %v717 = vmax.f32 %v372, %v635
      %v718 = vmax.f32 %v375, %v638
      %v719 = vmax.f32 %v378, %v641
      %v720 = vmax.f32 %v381, %v644
      %v721 = vmax.f32 %v384, %v647
      %v722 = vmax.f32 %v387, %v650
      %v723 = vmax.f32 %v390, %v653
      %v724 = vmax.f32 %v393, %v656
      %v725 = vmax.f32 %v396, %v659
      %v726 = vmax.f32 %v399, %v662
      %v727 = vmax.f32 %v402, %v665
      %v728 = vmax.f32 %v405, %v668
      %v729 = vmax.f32 %v408, %v671
      %v730 = vmax.f32 %v411, %v674
      %v731 = vmax.f32 %v414, %v677
      %v732 = vmax.f32 %v417, %v680
      %v733 = vmax.f32 %v420, %v683
      %v734 = vmax.f32 %v423, %v686
      %v735 = vmax.f32 %v426, %v689
      %v736 = vmax.f32 %v429, %v692
      %v737 = vmax.f32 %v432, %v695
      %v738 = vmax.f32 %v435, %v698
      %v739 = vmax.f32 %v438, %v701
      %v740 = vmax.f32 %v441, %v704
      %s741 = scalar_lea.vmem %s165, 560
      %v742 = vld [vmem:[%s741] sm:$0xff]
      %v743 = vld [vmem:[%s741 + $0x8] sm:$0xff]
      %v744 = vld [vmem:[%s741 + $0x10] sm:$0xff]
      %v745 = vld [vmem:[%s741 + $0x18] sm:$0xff]
      %v746 = vld [vmem:[%s741 + $0x20] sm:$0xff]
      %v747 = vld [vmem:[%s741 + $0x28] sm:$0xff]
      %v748 = vld [vmem:[%s741 + $0x30] sm:$0xff]
      %v749 = vld [vmem:[%s741 + $0x38] sm:$0xff]
      %v750 = vld [vmem:[%s741 + $0x40] sm:$0xff]
      %v751 = vld [vmem:[%s741 + $0x48] sm:$0xff]
      %v752 = vld [vmem:[%s741 + $0x50] sm:$0xff]
      %v753 = vld [vmem:[%s741 + $0x58] sm:$0xff]
      %v754 = vld [vmem:[%s741 + $0x60] sm:$0xff]
      %v755 = vld [vmem:[%s741 + $0x68] sm:$0xff]
      %v756 = vld [vmem:[%s741 + $0x70] sm:$0xff]
      %v757 = vld [vmem:[%s741 + $0x78] sm:$0xff]
      %v758 = vld [vmem:[%s741 + $0x80] sm:$0xff]
      %v759 = vld [vmem:[%s741 + $0x88] sm:$0xff]
      %v760 = vld [vmem:[%s741 + $0x90] sm:$0xff]
      %v761 = vld [vmem:[%s741 + $0x98] sm:$0xff]
      %v762 = vld [vmem:[%s741 + $0xa0] sm:$0xff]
      %v763 = vld [vmem:[%s741 + $0xa8] sm:$0xff]
      %v764 = vld [vmem:[%s741 + $0xb0] sm:$0xff]
      %v765 = vld [vmem:[%s741 + $0xb8] sm:$0xff]
      %v766 = vld [vmem:[%s741 + $0xc0] sm:$0xff]
      %v767 = vld [vmem:[%s741 + $0xc8] sm:$0xff]
      %v768 = vld [vmem:[%s741 + $0xd0] sm:$0xff]
      %v769 = vld [vmem:[%s741 + $0xd8] sm:$0xff]
      %v770 = vld [vmem:[%s741 + $0xe0] sm:$0xff]
      %v771 = vld [vmem:[%s741 + $0xe8] sm:$0xff]
      %v772 = vld [vmem:[%s741 + $0xf0] sm:$0xff]
      %v773 = vld [vmem:[%s741 + $0xf8] sm:$0xff]
      %v774 = vld [vmem:[%s741 + $0x100] sm:$0xff]
      %v775 = vld [vmem:[%s741 + $0x108] sm:$0xff]
      %v776 = vld [vmem:[%s741 + $0x110] sm:$0x7]
      %v778 = vsel %vm211, %v742, 0
      %v781 = vsel %vm211, %v743, 0
      %v784 = vsel %vm211, %v744, 0
      %v787 = vsel %vm211, %v745, 0
      %v790 = vsel %vm211, %v746, 0
      %v793 = vsel %vm211, %v747, 0
      %v796 = vsel %vm211, %v748, 0
      %v799 = vsel %vm211, %v749, 0
      %v802 = vsel %vm211, %v750, 0
      %v805 = vsel %vm211, %v751, 0
      %v808 = vsel %vm211, %v752, 0
      %v811 = vsel %vm211, %v753, 0
      %v814 = vsel %vm211, %v754, 0
      %v817 = vsel %vm211, %v755, 0
      %v820 = vsel %vm211, %v756, 0
      %v823 = vsel %vm211, %v757, 0
      %v826 = vsel %vm211, %v758, 0
      %v829 = vsel %vm211, %v759, 0
      %v832 = vsel %vm211, %v760, 0
      %v835 = vsel %vm211, %v761, 0
      %v838 = vsel %vm211, %v762, 0
      %v841 = vsel %vm211, %v763, 0
      %v844 = vsel %vm211, %v764, 0
      %v847 = vsel %vm211, %v765, 0
      %v850 = vsel %vm211, %v766, 0
      %v853 = vsel %vm211, %v767, 0
      %v856 = vsel %vm211, %v768, 0
      %v859 = vsel %vm211, %v769, 0
      %v862 = vsel %vm211, %v770, 0
      %v865 = vsel %vm211, %v771, 0
      %v868 = vsel %vm211, %v772, 0
      %v871 = vsel %vm211, %v773, 0
      %v874 = vsel %vm211, %v774, 0
      %v877 = vsel %vm211, %v775, 0
      %v880 = vsel %vm211, %v776, 0
      %882 = vmatpush.msra.mxu0 0.0
      %883 = vmatpush.msra.mxu0 0.0
      %884 = vmatpush.msra.mxu0 0.0
      %885 = vmatpush.msra.mxu0 0.0
      %886 = vmatpush.msra.mxu0 0.0
      %887 = vmatpush.msra.mxu0 0.0
      %888 = vmatpush.msra.mxu0 0.0
      %889 = vmatpush.msra.mxu0 0.0
      %890 = vmatpush.msra.mxu0 0.0
      %891 = vmatpush.msra.mxu0 0.0
      %892 = vmatpush.msra.mxu0 0.0
      %893 = vmatpush.msra.mxu0 %v319
      %894 = vmatpush.msra.mxu0 %v174
      %895 = vmatpush.msra.mxu0 %v173
      %896 = vmatpush.msra.mxu0 %v172
      %897 = vmatpush.msra.mxu0 %v171
      %898 = vmatmul.f32.gmra.mxu0 %v778
      %v899 = vpop.f32.mrf.mxu0
      %v900 = vadd.f32 0.0, %v899
      %901 = vmatmul.f32.gmra.mxu0 %v781
      %v902 = vpop.f32.mrf.mxu0
      %v903 = vadd.f32 0.0, %v902
      %904 = vmatmul.f32.gmra.mxu0 %v784
      %v905 = vpop.f32.mrf.mxu0
      %v906 = vadd.f32 0.0, %v905
      %907 = vmatmul.f32.gmra.mxu0 %v787
      %v908 = vpop.f32.mrf.mxu0
      %v909 = vadd.f32 0.0, %v908
      %910 = vmatmul.f32.gmra.mxu0 %v790
      %v911 = vpop.f32.mrf.mxu0
      %v912 = vadd.f32 0.0, %v911
      %913 = vmatmul.f32.gmra.mxu0 %v793
      %v914 = vpop.f32.mrf.mxu0
      %v915 = vadd.f32 0.0, %v914
      %916 = vmatmul.f32.gmra.mxu0 %v796
      %v917 = vpop.f32.mrf.mxu0
      %v918 = vadd.f32 0.0, %v917
      %919 = vmatmul.f32.gmra.mxu0 %v799
      %v920 = vpop.f32.mrf.mxu0
      %v921 = vadd.f32 0.0, %v920
      %922 = vmatmul.f32.gmra.mxu0 %v802
      %v923 = vpop.f32.mrf.mxu0
      %v924 = vadd.f32 0.0, %v923
      %925 = vmatmul.f32.gmra.mxu0 %v805
      %v926 = vpop.f32.mrf.mxu0
      %v927 = vadd.f32 0.0, %v926
      %928 = vmatmul.f32.gmra.mxu0 %v808
      %v929 = vpop.f32.mrf.mxu0
      %v930 = vadd.f32 0.0, %v929
      %931 = vmatmul.f32.gmra.mxu0 %v811
      %v932 = vpop.f32.mrf.mxu0
      %v933 = vadd.f32 0.0, %v932
      %934 = vmatmul.f32.gmra.mxu0 %v814
      %v935 = vpop.f32.mrf.mxu0
      %v936 = vadd.f32 0.0, %v935
      %937 = vmatmul.f32.gmra.mxu0 %v817
      %v938 = vpop.f32.mrf.mxu0
      %v939 = vadd.f32 0.0, %v938
      %940 = vmatmul.f32.gmra.mxu0 %v820
      %v941 = vpop.f32.mrf.mxu0
      %v942 = vadd.f32 0.0, %v941
      %943 = vmatmul.f32.gmra.mxu0 %v823
      %v944 = vpop.f32.mrf.mxu0
      %v945 = vadd.f32 0.0, %v944
      %946 = vmatmul.f32.gmra.mxu0 %v826
      %v947 = vpop.f32.mrf.mxu0
      %v948 = vadd.f32 0.0, %v947
      %949 = vmatmul.f32.gmra.mxu0 %v829
      %v950 = vpop.f32.mrf.mxu0
      %v951 = vadd.f32 0.0, %v950
      %952 = vmatmul.f32.gmra.mxu0 %v832
      %v953 = vpop.f32.mrf.mxu0
      %v954 = vadd.f32 0.0, %v953
      %955 = vmatmul.f32.gmra.mxu0 %v835
      %v956 = vpop.f32.mrf.mxu0
      %v957 = vadd.f32 0.0, %v956
      %958 = vmatmul.f32.gmra.mxu0 %v838
      %v959 = vpop.f32.mrf.mxu0
      %v960 = vadd.f32 0.0, %v959
      %961 = vmatmul.f32.gmra.mxu0 %v841
      %v962 = vpop.f32.mrf.mxu0
      %v963 = vadd.f32 0.0, %v962
      %964 = vmatmul.f32.gmra.mxu0 %v844
      %v965 = vpop.f32.mrf.mxu0
      %v966 = vadd.f32 0.0, %v965
      %967 = vmatmul.f32.gmra.mxu0 %v847
      %v968 = vpop.f32.mrf.mxu0
      %v969 = vadd.f32 0.0, %v968
      %970 = vmatmul.f32.gmra.mxu0 %v850
      %v971 = vpop.f32.mrf.mxu0
      %v972 = vadd.f32 0.0, %v971
      %973 = vmatmul.f32.gmra.mxu0 %v853
      %v974 = vpop.f32.mrf.mxu0
      %v975 = vadd.f32 0.0, %v974
      %976 = vmatmul.f32.gmra.mxu0 %v856
      %v977 = vpop.f32.mrf.mxu0
      %v978 = vadd.f32 0.0, %v977
      %979 = vmatmul.f32.gmra.mxu0 %v859
      %v980 = vpop.f32.mrf.mxu0
      %v981 = vadd.f32 0.0, %v980
      %982 = vmatmul.f32.gmra.mxu0 %v862
      %v983 = vpop.f32.mrf.mxu0
      %v984 = vadd.f32 0.0, %v983
      %985 = vmatmul.f32.gmra.mxu0 %v865
      %v986 = vpop.f32.mrf.mxu0
      %v987 = vadd.f32 0.0, %v986
      %988 = vmatmul.f32.gmra.mxu0 %v868
      %v989 = vpop.f32.mrf.mxu0
      %v990 = vadd.f32 0.0, %v989
      %991 = vmatmul.f32.gmra.mxu0 %v871
      %v992 = vpop.f32.mrf.mxu0
      %v993 = vadd.f32 0.0, %v992
      %994 = vmatmul.f32.gmra.mxu0 %v874
      %v995 = vpop.f32.mrf.mxu0
      %v996 = vadd.f32 0.0, %v995
      %997 = vmatmul.f32.gmra.mxu0 %v877
      %v998 = vpop.f32.mrf.mxu0
      %v999 = vadd.f32 0.0, %v998
      %1000 = vmatmul.f32.gmra.mxu0 %v880
      %v1001 = vpop.f32.mrf.mxu0
      %v1002 = vadd.f32 0.0, %v1001
      %1003 = vdwg.mxu0
      %v1004 = vmax.f32 %v706, %v900
      %v1005 = vmax.f32 %v707, %v903
      %v1006 = vmax.f32 %v708, %v906
      %v1007 = vmax.f32 %v709, %v909
      %v1008 = vmax.f32 %v710, %v912
      %v1009 = vmax.f32 %v711, %v915
      %v1010 = vmax.f32 %v712, %v918
      %v1011 = vmax.f32 %v713, %v921
      %v1012 = vmax.f32 %v714, %v924
      %v1013 = vmax.f32 %v715, %v927
      %v1014 = vmax.f32 %v716, %v930
      %v1015 = vmax.f32 %v717, %v933
      %v1016 = vmax.f32 %v718, %v936
      %v1017 = vmax.f32 %v719, %v939
      %v1018 = vmax.f32 %v720, %v942
      %v1019 = vmax.f32 %v721, %v945
      %v1020 = vmax.f32 %v722, %v948
      %v1021 = vmax.f32 %v723, %v951
      %v1022 = vmax.f32 %v724, %v954
      %v1023 = vmax.f32 %v725, %v957
      %v1024 = vmax.f32 %v726, %v960
      %v1025 = vmax.f32 %v727, %v963
      %v1026 = vmax.f32 %v728, %v966
      %v1027 = vmax.f32 %v729, %v969
      %v1028 = vmax.f32 %v730, %v972
      %v1029 = vmax.f32 %v731, %v975
      %v1030 = vmax.f32 %v732, %v978
      %v1031 = vmax.f32 %v733, %v981
      %v1032 = vmax.f32 %v734, %v984
      %v1033 = vmax.f32 %v735, %v987
      %v1034 = vmax.f32 %v736, %v990
      %v1035 = vmax.f32 %v737, %v993
      %v1036 = vmax.f32 %v738, %v996
      %v1037 = vmax.f32 %v739, %v999
      %v1038 = vmax.f32 %v740, %v1002
      %s1039 = scalar_lea.vmem %s165, 840
      %v1040 = vld [vmem:[%s1039] sm:$0xff]
      %v1041 = vld [vmem:[%s1039 + $0x8] sm:$0xff]
      %v1042 = vld [vmem:[%s1039 + $0x10] sm:$0xff]
      %v1043 = vld [vmem:[%s1039 + $0x18] sm:$0xff]
      %v1044 = vld [vmem:[%s1039 + $0x20] sm:$0xff]
      %v1045 = vld [vmem:[%s1039 + $0x28] sm:$0xff]
      %v1046 = vld [vmem:[%s1039 + $0x30] sm:$0xff]
      %v1047 = vld [vmem:[%s1039 + $0x38] sm:$0xff]
      %v1048 = vld [vmem:[%s1039 + $0x40] sm:$0xff]
      %v1049 = vld [vmem:[%s1039 + $0x48] sm:$0xff]
      %v1050 = vld [vmem:[%s1039 + $0x50] sm:$0xff]
      %v1051 = vld [vmem:[%s1039 + $0x58] sm:$0xff]
      %v1052 = vld [vmem:[%s1039 + $0x60] sm:$0xff]
      %v1053 = vld [vmem:[%s1039 + $0x68] sm:$0xff]
      %v1054 = vld [vmem:[%s1039 + $0x70] sm:$0xff]
      %v1055 = vld [vmem:[%s1039 + $0x78] sm:$0xff]
      %v1056 = vld [vmem:[%s1039 + $0x80] sm:$0xff]
      %v1057 = vld [vmem:[%s1039 + $0x88] sm:$0xff]
      %v1058 = vld [vmem:[%s1039 + $0x90] sm:$0xff]
      %v1059 = vld [vmem:[%s1039 + $0x98] sm:$0xff]
      %v1060 = vld [vmem:[%s1039 + $0xa0] sm:$0xff]
      %v1061 = vld [vmem:[%s1039 + $0xa8] sm:$0xff]
      %v1062 = vld [vmem:[%s1039 + $0xb0] sm:$0xff]
      %v1063 = vld [vmem:[%s1039 + $0xb8] sm:$0xff]
      %v1064 = vld [vmem:[%s1039 + $0xc0] sm:$0xff]
      %v1065 = vld [vmem:[%s1039 + $0xc8] sm:$0xff]
      %v1066 = vld [vmem:[%s1039 + $0xd0] sm:$0xff]
      %v1067 = vld [vmem:[%s1039 + $0xd8] sm:$0xff]
      %v1068 = vld [vmem:[%s1039 + $0xe0] sm:$0xff]
      %v1069 = vld [vmem:[%s1039 + $0xe8] sm:$0xff]
      %v1070 = vld [vmem:[%s1039 + $0xf0] sm:$0xff]
      %v1071 = vld [vmem:[%s1039 + $0xf8] sm:$0xff]
      %v1072 = vld [vmem:[%s1039 + $0x100] sm:$0xff]
      %v1073 = vld [vmem:[%s1039 + $0x108] sm:$0xff]
      %v1074 = vld [vmem:[%s1039 + $0x110] sm:$0x7]
      %v1076 = vsel %vm211, %v1040, 0
      %v1079 = vsel %vm211, %v1041, 0
      %v1082 = vsel %vm211, %v1042, 0
      %v1085 = vsel %vm211, %v1043, 0
      %v1088 = vsel %vm211, %v1044, 0
      %v1091 = vsel %vm211, %v1045, 0
      %v1094 = vsel %vm211, %v1046, 0
      %v1097 = vsel %vm211, %v1047, 0
      %v1100 = vsel %vm211, %v1048, 0
      %v1103 = vsel %vm211, %v1049, 0
      %v1106 = vsel %vm211, %v1050, 0
      %v1109 = vsel %vm211, %v1051, 0
      %v1112 = vsel %vm211, %v1052, 0
      %v1115 = vsel %vm211, %v1053, 0
      %v1118 = vsel %vm211, %v1054, 0
      %v1121 = vsel %vm211, %v1055, 0
      %v1124 = vsel %vm211, %v1056, 0
      %v1127 = vsel %vm211, %v1057, 0
      %v1130 = vsel %vm211, %v1058, 0
      %v1133 = vsel %vm211, %v1059, 0
      %v1136 = vsel %vm211, %v1060, 0
      %v1139 = vsel %vm211, %v1061, 0
      %v1142 = vsel %vm211, %v1062, 0
      %v1145 = vsel %vm211, %v1063, 0
      %v1148 = vsel %vm211, %v1064, 0
      %v1151 = vsel %vm211, %v1065, 0
      %v1154 = vsel %vm211, %v1066, 0
      %v1157 = vsel %vm211, %v1067, 0
      %v1160 = vsel %vm211, %v1068, 0
      %v1163 = vsel %vm211, %v1069, 0
      %v1166 = vsel %vm211, %v1070, 0
      %v1169 = vsel %vm211, %v1071, 0
      %v1172 = vsel %vm211, %v1072, 0
      %v1175 = vsel %vm211, %v1073, 0
      %v1178 = vsel %vm211, %v1074, 0
      %1180 = vmatpush.msra.mxu0 0.0
      %1181 = vmatpush.msra.mxu0 0.0
      %1182 = vmatpush.msra.mxu0 0.0
      %1183 = vmatpush.msra.mxu0 0.0
      %1184 = vmatpush.msra.mxu0 0.0
      %1185 = vmatpush.msra.mxu0 0.0
      %1186 = vmatpush.msra.mxu0 0.0
      %1187 = vmatpush.msra.mxu0 0.0
      %1188 = vmatpush.msra.mxu0 0.0
      %1189 = vmatpush.msra.mxu0 0.0
      %1190 = vmatpush.msra.mxu0 0.0
      %1191 = vmatpush.msra.mxu0 %v319
      %1192 = vmatpush.msra.mxu0 %v174
      %1193 = vmatpush.msra.mxu0 %v173
      %1194 = vmatpush.msra.mxu0 %v172
      %1195 = vmatpush.msra.mxu0 %v171
      %1196 = vmatmul.f32.gmra.mxu0 %v1076
      %v1197 = vpop.f32.mrf.mxu0
      %v1198 = vadd.f32 0.0, %v1197
      %1199 = vmatmul.f32.gmra.mxu0 %v1079
      %v1200 = vpop.f32.mrf.mxu0
      %v1201 = vadd.f32 0.0, %v1200
      %1202 = vmatmul.f32.gmra.mxu0 %v1082
      %v1203 = vpop.f32.mrf.mxu0
      %v1204 = vadd.f32 0.0, %v1203
      %1205 = vmatmul.f32.gmra.mxu0 %v1085
      %v1206 = vpop.f32.mrf.mxu0
      %v1207 = vadd.f32 0.0, %v1206
      %1208 = vmatmul.f32.gmra.mxu0 %v1088
      %v1209 = vpop.f32.mrf.mxu0
      %v1210 = vadd.f32 0.0, %v1209
      %1211 = vmatmul.f32.gmra.mxu0 %v1091
      %v1212 = vpop.f32.mrf.mxu0
      %v1213 = vadd.f32 0.0, %v1212
      %1214 = vmatmul.f32.gmra.mxu0 %v1094
      %v1215 = vpop.f32.mrf.mxu0
      %v1216 = vadd.f32 0.0, %v1215
      %1217 = vmatmul.f32.gmra.mxu0 %v1097
      %v1218 = vpop.f32.mrf.mxu0
      %v1219 = vadd.f32 0.0, %v1218
      %1220 = vmatmul.f32.gmra.mxu0 %v1100
      %v1221 = vpop.f32.mrf.mxu0
      %v1222 = vadd.f32 0.0, %v1221
      %1223 = vmatmul.f32.gmra.mxu0 %v1103
      %v1224 = vpop.f32.mrf.mxu0
      %v1225 = vadd.f32 0.0, %v1224
      %1226 = vmatmul.f32.gmra.mxu0 %v1106
      %v1227 = vpop.f32.mrf.mxu0
      %v1228 = vadd.f32 0.0, %v1227
      %1229 = vmatmul.f32.gmra.mxu0 %v1109
      %v1230 = vpop.f32.mrf.mxu0
      %v1231 = vadd.f32 0.0, %v1230
      %1232 = vmatmul.f32.gmra.mxu0 %v1112
      %v1233 = vpop.f32.mrf.mxu0
      %v1234 = vadd.f32 0.0, %v1233
      %1235 = vmatmul.f32.gmra.mxu0 %v1115
      %v1236 = vpop.f32.mrf.mxu0
      %v1237 = vadd.f32 0.0, %v1236
      %1238 = vmatmul.f32.gmra.mxu0 %v1118
      %v1239 = vpop.f32.mrf.mxu0
      %v1240 = vadd.f32 0.0, %v1239
      %1241 = vmatmul.f32.gmra.mxu0 %v1121
      %v1242 = vpop.f32.mrf.mxu0
      %v1243 = vadd.f32 0.0, %v1242
      %1244 = vmatmul.f32.gmra.mxu0 %v1124
      %v1245 = vpop.f32.mrf.mxu0
      %v1246 = vadd.f32 0.0, %v1245
      %1247 = vmatmul.f32.gmra.mxu0 %v1127
      %v1248 = vpop.f32.mrf.mxu0
      %v1249 = vadd.f32 0.0, %v1248
      %1250 = vmatmul.f32.gmra.mxu0 %v1130
      %v1251 = vpop.f32.mrf.mxu0
      %v1252 = vadd.f32 0.0, %v1251
      %1253 = vmatmul.f32.gmra.mxu0 %v1133
      %v1254 = vpop.f32.mrf.mxu0
      %v1255 = vadd.f32 0.0, %v1254
      %1256 = vmatmul.f32.gmra.mxu0 %v1136
      %v1257 = vpop.f32.mrf.mxu0
      %v1258 = vadd.f32 0.0, %v1257
      %1259 = vmatmul.f32.gmra.mxu0 %v1139
      %v1260 = vpop.f32.mrf.mxu0
      %v1261 = vadd.f32 0.0, %v1260
      %1262 = vmatmul.f32.gmra.mxu0 %v1142
      %v1263 = vpop.f32.mrf.mxu0
      %v1264 = vadd.f32 0.0, %v1263
      %1265 = vmatmul.f32.gmra.mxu0 %v1145
      %v1266 = vpop.f32.mrf.mxu0
      %v1267 = vadd.f32 0.0, %v1266
      %1268 = vmatmul.f32.gmra.mxu0 %v1148
      %v1269 = vpop.f32.mrf.mxu0
      %v1270 = vadd.f32 0.0, %v1269
      %1271 = vmatmul.f32.gmra.mxu0 %v1151
      %v1272 = vpop.f32.mrf.mxu0
      %v1273 = vadd.f32 0.0, %v1272
      %1274 = vmatmul.f32.gmra.mxu0 %v1154
      %v1275 = vpop.f32.mrf.mxu0
      %v1276 = vadd.f32 0.0, %v1275
      %1277 = vmatmul.f32.gmra.mxu0 %v1157
      %v1278 = vpop.f32.mrf.mxu0
      %v1279 = vadd.f32 0.0, %v1278
      %1280 = vmatmul.f32.gmra.mxu0 %v1160
      %v1281 = vpop.f32.mrf.mxu0
      %v1282 = vadd.f32 0.0, %v1281
      %1283 = vmatmul.f32.gmra.mxu0 %v1163
      %v1284 = vpop.f32.mrf.mxu0
      %v1285 = vadd.f32 0.0, %v1284
      %1286 = vmatmul.f32.gmra.mxu0 %v1166
      %v1287 = vpop.f32.mrf.mxu0
      %v1288 = vadd.f32 0.0, %v1287
      %1289 = vmatmul.f32.gmra.mxu0 %v1169
      %v1290 = vpop.f32.mrf.mxu0
      %v1291 = vadd.f32 0.0, %v1290
      %1292 = vmatmul.f32.gmra.mxu0 %v1172
      %v1293 = vpop.f32.mrf.mxu0
      %v1294 = vadd.f32 0.0, %v1293
      %1295 = vmatmul.f32.gmra.mxu0 %v1175
      %v1296 = vpop.f32.mrf.mxu0
      %v1297 = vadd.f32 0.0, %v1296
      %1298 = vmatmul.f32.gmra.mxu0 %v1178
      %v1299 = vpop.f32.mrf.mxu0
      %v1300 = vadd.f32 0.0, %v1299
      %1301 = vdwg.mxu0
      %v1302 = vmax.f32 %v1004, %v1198
      %v1303 = vmax.f32 %v1005, %v1201
      %v1304 = vmax.f32 %v1006, %v1204
      %v1305 = vmax.f32 %v1007, %v1207
      %v1306 = vmax.f32 %v1008, %v1210
      %v1307 = vmax.f32 %v1009, %v1213
      %v1308 = vmax.f32 %v1010, %v1216
      %v1309 = vmax.f32 %v1011, %v1219
      %v1310 = vmax.f32 %v1012, %v1222
      %v1311 = vmax.f32 %v1013, %v1225
      %v1312 = vmax.f32 %v1014, %v1228
      %v1313 = vmax.f32 %v1015, %v1231
      %v1314 = vmax.f32 %v1016, %v1234
      %v1315 = vmax.f32 %v1017, %v1237
      %v1316 = vmax.f32 %v1018, %v1240
      %v1317 = vmax.f32 %v1019, %v1243
      %v1318 = vmax.f32 %v1020, %v1246
      %v1319 = vmax.f32 %v1021, %v1249
      %v1320 = vmax.f32 %v1022, %v1252
      %v1321 = vmax.f32 %v1023, %v1255
      %v1322 = vmax.f32 %v1024, %v1258
      %v1323 = vmax.f32 %v1025, %v1261
      %v1324 = vmax.f32 %v1026, %v1264
      %v1325 = vmax.f32 %v1027, %v1267
      %v1326 = vmax.f32 %v1028, %v1270
      %v1327 = vmax.f32 %v1029, %v1273
      %v1328 = vmax.f32 %v1030, %v1276
      %v1329 = vmax.f32 %v1031, %v1279
      %v1330 = vmax.f32 %v1032, %v1282
      %v1331 = vmax.f32 %v1033, %v1285
      %v1332 = vmax.f32 %v1034, %v1288
      %v1333 = vmax.f32 %v1035, %v1291
      %v1334 = vmax.f32 %v1036, %v1294
      %v1335 = vmax.f32 %v1037, %v1297
      %v1336 = vmax.f32 %v1038, %v1300
      %s1337 = scalar_lea.vmem %s165, 1120
      %v1338 = vld [vmem:[%s1337] sm:$0xff]
      %v1339 = vld [vmem:[%s1337 + $0x8] sm:$0xff]
      %v1340 = vld [vmem:[%s1337 + $0x10] sm:$0xff]
      %v1341 = vld [vmem:[%s1337 + $0x18] sm:$0xff]
      %v1342 = vld [vmem:[%s1337 + $0x20] sm:$0xff]
      %v1343 = vld [vmem:[%s1337 + $0x28] sm:$0xff]
      %v1344 = vld [vmem:[%s1337 + $0x30] sm:$0xff]
      %v1345 = vld [vmem:[%s1337 + $0x38] sm:$0xff]
      %v1346 = vld [vmem:[%s1337 + $0x40] sm:$0xff]
      %v1347 = vld [vmem:[%s1337 + $0x48] sm:$0xff]
      %v1348 = vld [vmem:[%s1337 + $0x50] sm:$0xff]
      %v1349 = vld [vmem:[%s1337 + $0x58] sm:$0xff]
      %v1350 = vld [vmem:[%s1337 + $0x60] sm:$0xff]
      %v1351 = vld [vmem:[%s1337 + $0x68] sm:$0xff]
      %v1352 = vld [vmem:[%s1337 + $0x70] sm:$0xff]
      %v1353 = vld [vmem:[%s1337 + $0x78] sm:$0xff]
      %v1354 = vld [vmem:[%s1337 + $0x80] sm:$0xff]
      %v1355 = vld [vmem:[%s1337 + $0x88] sm:$0xff]
      %v1356 = vld [vmem:[%s1337 + $0x90] sm:$0xff]
      %v1357 = vld [vmem:[%s1337 + $0x98] sm:$0xff]
      %v1358 = vld [vmem:[%s1337 + $0xa0] sm:$0xff]
      %v1359 = vld [vmem:[%s1337 + $0xa8] sm:$0xff]
      %v1360 = vld [vmem:[%s1337 + $0xb0] sm:$0xff]
      %v1361 = vld [vmem:[%s1337 + $0xb8] sm:$0xff]
      %v1362 = vld [vmem:[%s1337 + $0xc0] sm:$0xff]
      %v1363 = vld [vmem:[%s1337 + $0xc8] sm:$0xff]
      %v1364 = vld [vmem:[%s1337 + $0xd0] sm:$0xff]
      %v1365 = vld [vmem:[%s1337 + $0xd8] sm:$0xff]
      %v1366 = vld [vmem:[%s1337 + $0xe0] sm:$0xff]
      %v1367 = vld [vmem:[%s1337 + $0xe8] sm:$0xff]
      %v1368 = vld [vmem:[%s1337 + $0xf0] sm:$0xff]
      %v1369 = vld [vmem:[%s1337 + $0xf8] sm:$0xff]
      %v1370 = vld [vmem:[%s1337 + $0x100] sm:$0xff]
      %v1371 = vld [vmem:[%s1337 + $0x108] sm:$0xff]
      %v1372 = vld [vmem:[%s1337 + $0x110] sm:$0x7]
      %v1374 = vsel %vm211, %v1338, 0
      %v1377 = vsel %vm211, %v1339, 0
      %v1380 = vsel %vm211, %v1340, 0
      %v1383 = vsel %vm211, %v1341, 0
      %v1386 = vsel %vm211, %v1342, 0
      %v1389 = vsel %vm211, %v1343, 0
      %v1392 = vsel %vm211, %v1344, 0
      %v1395 = vsel %vm211, %v1345, 0
      %v1398 = vsel %vm211, %v1346, 0
      %v1401 = vsel %vm211, %v1347, 0
      %v1404 = vsel %vm211, %v1348, 0
      %v1407 = vsel %vm211, %v1349, 0
      %v1410 = vsel %vm211, %v1350, 0
      %v1413 = vsel %vm211, %v1351, 0
      %v1416 = vsel %vm211, %v1352, 0
      %v1419 = vsel %vm211, %v1353, 0
      %v1422 = vsel %vm211, %v1354, 0
      %v1425 = vsel %vm211, %v1355, 0
      %v1428 = vsel %vm211, %v1356, 0
      %v1431 = vsel %vm211, %v1357, 0
      %v1434 = vsel %vm211, %v1358, 0
      %v1437 = vsel %vm211, %v1359, 0
      %v1440 = vsel %vm211, %v1360, 0
      %v1443 = vsel %vm211, %v1361, 0
      %v1446 = vsel %vm211, %v1362, 0
      %v1449 = vsel %vm211, %v1363, 0
      %v1452 = vsel %vm211, %v1364, 0
      %v1455 = vsel %vm211, %v1365, 0
      %v1458 = vsel %vm211, %v1366, 0
      %v1461 = vsel %vm211, %v1367, 0
      %v1464 = vsel %vm211, %v1368, 0
      %v1467 = vsel %vm211, %v1369, 0
      %v1470 = vsel %vm211, %v1370, 0
      %v1473 = vsel %vm211, %v1371, 0
      %v1476 = vsel %vm211, %v1372, 0
      %1478 = vmatpush.msra.mxu0 0.0
      %1479 = vmatpush.msra.mxu0 0.0
      %1480 = vmatpush.msra.mxu0 0.0
      %1481 = vmatpush.msra.mxu0 0.0
      %1482 = vmatpush.msra.mxu0 0.0
      %1483 = vmatpush.msra.mxu0 0.0
      %1484 = vmatpush.msra.mxu0 0.0
      %1485 = vmatpush.msra.mxu0 0.0
      %1486 = vmatpush.msra.mxu0 0.0
      %1487 = vmatpush.msra.mxu0 0.0
      %1488 = vmatpush.msra.mxu0 0.0
      %1489 = vmatpush.msra.mxu0 %v319
      %1490 = vmatpush.msra.mxu0 %v174
      %1491 = vmatpush.msra.mxu0 %v173
      %1492 = vmatpush.msra.mxu0 %v172
      %1493 = vmatpush.msra.mxu0 %v171
      %1494 = vmatmul.f32.gmra.mxu0 %v1374
      %v1495 = vpop.f32.mrf.mxu0
      %v1496 = vadd.f32 0.0, %v1495
      %1497 = vmatmul.f32.gmra.mxu0 %v1377
      %v1498 = vpop.f32.mrf.mxu0
      %v1499 = vadd.f32 0.0, %v1498
      %1500 = vmatmul.f32.gmra.mxu0 %v1380
      %v1501 = vpop.f32.mrf.mxu0
      %v1502 = vadd.f32 0.0, %v1501
      %1503 = vmatmul.f32.gmra.mxu0 %v1383
      %v1504 = vpop.f32.mrf.mxu0
      %v1505 = vadd.f32 0.0, %v1504
      %1506 = vmatmul.f32.gmra.mxu0 %v1386
      %v1507 = vpop.f32.mrf.mxu0
      %v1508 = vadd.f32 0.0, %v1507
      %1509 = vmatmul.f32.gmra.mxu0 %v1389
      %v1510 = vpop.f32.mrf.mxu0
      %v1511 = vadd.f32 0.0, %v1510
      %1512 = vmatmul.f32.gmra.mxu0 %v1392
      %v1513 = vpop.f32.mrf.mxu0
      %v1514 = vadd.f32 0.0, %v1513
      %1515 = vmatmul.f32.gmra.mxu0 %v1395
      %v1516 = vpop.f32.mrf.mxu0
      %v1517 = vadd.f32 0.0, %v1516
      %1518 = vmatmul.f32.gmra.mxu0 %v1398
      %v1519 = vpop.f32.mrf.mxu0
      %v1520 = vadd.f32 0.0, %v1519
      %1521 = vmatmul.f32.gmra.mxu0 %v1401
      %v1522 = vpop.f32.mrf.mxu0
      %v1523 = vadd.f32 0.0, %v1522
      %1524 = vmatmul.f32.gmra.mxu0 %v1404
      %v1525 = vpop.f32.mrf.mxu0
      %v1526 = vadd.f32 0.0, %v1525
      %1527 = vmatmul.f32.gmra.mxu0 %v1407
      %v1528 = vpop.f32.mrf.mxu0
      %v1529 = vadd.f32 0.0, %v1528
      %1530 = vmatmul.f32.gmra.mxu0 %v1410
      %v1531 = vpop.f32.mrf.mxu0
      %v1532 = vadd.f32 0.0, %v1531
      %1533 = vmatmul.f32.gmra.mxu0 %v1413
      %v1534 = vpop.f32.mrf.mxu0
      %v1535 = vadd.f32 0.0, %v1534
      %1536 = vmatmul.f32.gmra.mxu0 %v1416
      %v1537 = vpop.f32.mrf.mxu0
      %v1538 = vadd.f32 0.0, %v1537
      %1539 = vmatmul.f32.gmra.mxu0 %v1419
      %v1540 = vpop.f32.mrf.mxu0
      %v1541 = vadd.f32 0.0, %v1540
      %1542 = vmatmul.f32.gmra.mxu0 %v1422
      %v1543 = vpop.f32.mrf.mxu0
      %v1544 = vadd.f32 0.0, %v1543
      %1545 = vmatmul.f32.gmra.mxu0 %v1425
      %v1546 = vpop.f32.mrf.mxu0
      %v1547 = vadd.f32 0.0, %v1546
      %1548 = vmatmul.f32.gmra.mxu0 %v1428
      %v1549 = vpop.f32.mrf.mxu0
      %v1550 = vadd.f32 0.0, %v1549
      %1551 = vmatmul.f32.gmra.mxu0 %v1431
      %v1552 = vpop.f32.mrf.mxu0
      %v1553 = vadd.f32 0.0, %v1552
      %1554 = vmatmul.f32.gmra.mxu0 %v1434
      %v1555 = vpop.f32.mrf.mxu0
      %v1556 = vadd.f32 0.0, %v1555
      %1557 = vmatmul.f32.gmra.mxu0 %v1437
      %v1558 = vpop.f32.mrf.mxu0
      %v1559 = vadd.f32 0.0, %v1558
      %1560 = vmatmul.f32.gmra.mxu0 %v1440
      %v1561 = vpop.f32.mrf.mxu0
      %v1562 = vadd.f32 0.0, %v1561
      %1563 = vmatmul.f32.gmra.mxu0 %v1443
      %v1564 = vpop.f32.mrf.mxu0
      %v1565 = vadd.f32 0.0, %v1564
      %1566 = vmatmul.f32.gmra.mxu0 %v1446
      %v1567 = vpop.f32.mrf.mxu0
      %v1568 = vadd.f32 0.0, %v1567
      %1569 = vmatmul.f32.gmra.mxu0 %v1449
      %v1570 = vpop.f32.mrf.mxu0
      %v1571 = vadd.f32 0.0, %v1570
      %1572 = vmatmul.f32.gmra.mxu0 %v1452
      %v1573 = vpop.f32.mrf.mxu0
      %v1574 = vadd.f32 0.0, %v1573
      %1575 = vmatmul.f32.gmra.mxu0 %v1455
      %v1576 = vpop.f32.mrf.mxu0
      %v1577 = vadd.f32 0.0, %v1576
      %1578 = vmatmul.f32.gmra.mxu0 %v1458
      %v1579 = vpop.f32.mrf.mxu0
      %v1580 = vadd.f32 0.0, %v1579
      %1581 = vmatmul.f32.gmra.mxu0 %v1461
      %v1582 = vpop.f32.mrf.mxu0
      %v1583 = vadd.f32 0.0, %v1582
      %1584 = vmatmul.f32.gmra.mxu0 %v1464
      %v1585 = vpop.f32.mrf.mxu0
      %v1586 = vadd.f32 0.0, %v1585
      %1587 = vmatmul.f32.gmra.mxu0 %v1467
      %v1588 = vpop.f32.mrf.mxu0
      %v1589 = vadd.f32 0.0, %v1588
      %1590 = vmatmul.f32.gmra.mxu0 %v1470
      %v1591 = vpop.f32.mrf.mxu0
      %v1592 = vadd.f32 0.0, %v1591
      %1593 = vmatmul.f32.gmra.mxu0 %v1473
      %v1594 = vpop.f32.mrf.mxu0
      %v1595 = vadd.f32 0.0, %v1594
      %1596 = vmatmul.f32.gmra.mxu0 %v1476
      %v1597 = vpop.f32.mrf.mxu0
      %v1598 = vadd.f32 0.0, %v1597
      %1599 = vdwg.mxu0
      %v1600 = vmax.f32 %v1302, %v1496
      %v1601 = vmax.f32 %v1303, %v1499
      %v1602 = vmax.f32 %v1304, %v1502
      %v1603 = vmax.f32 %v1305, %v1505
      %v1604 = vmax.f32 %v1306, %v1508
      %v1605 = vmax.f32 %v1307, %v1511
      %v1606 = vmax.f32 %v1308, %v1514
      %v1607 = vmax.f32 %v1309, %v1517
      %v1608 = vmax.f32 %v1310, %v1520
      %v1609 = vmax.f32 %v1311, %v1523
      %v1610 = vmax.f32 %v1312, %v1526
      %v1611 = vmax.f32 %v1313, %v1529
      %v1612 = vmax.f32 %v1314, %v1532
      %v1613 = vmax.f32 %v1315, %v1535
      %v1614 = vmax.f32 %v1316, %v1538
      %v1615 = vmax.f32 %v1317, %v1541
      %v1616 = vmax.f32 %v1318, %v1544
      %v1617 = vmax.f32 %v1319, %v1547
      %v1618 = vmax.f32 %v1320, %v1550
      %v1619 = vmax.f32 %v1321, %v1553
      %v1620 = vmax.f32 %v1322, %v1556
      %v1621 = vmax.f32 %v1323, %v1559
      %v1622 = vmax.f32 %v1324, %v1562
      %v1623 = vmax.f32 %v1325, %v1565
      %v1624 = vmax.f32 %v1326, %v1568
      %v1625 = vmax.f32 %v1327, %v1571
      %v1626 = vmax.f32 %v1328, %v1574
      %v1627 = vmax.f32 %v1329, %v1577
      %v1628 = vmax.f32 %v1330, %v1580
      %v1629 = vmax.f32 %v1331, %v1583
      %v1630 = vmax.f32 %v1332, %v1586
      %v1631 = vmax.f32 %v1333, %v1589
      %v1632 = vmax.f32 %v1334, %v1592
      %v1633 = vmax.f32 %v1335, %v1595
      %v1634 = vmax.f32 %v1336, %v1598
      %s1635 = scalar_lea.vmem %s165, 1400
      %v1636 = vld [vmem:[%s1635] sm:$0xff]
      %v1637 = vld [vmem:[%s1635 + $0x8] sm:$0xff]
      %v1638 = vld [vmem:[%s1635 + $0x10] sm:$0xff]
      %v1639 = vld [vmem:[%s1635 + $0x18] sm:$0xff]
      %v1640 = vld [vmem:[%s1635 + $0x20] sm:$0xff]
      %v1641 = vld [vmem:[%s1635 + $0x28] sm:$0xff]
      %v1642 = vld [vmem:[%s1635 + $0x30] sm:$0xff]
      %v1643 = vld [vmem:[%s1635 + $0x38] sm:$0xff]
      %v1644 = vld [vmem:[%s1635 + $0x40] sm:$0xff]
      %v1645 = vld [vmem:[%s1635 + $0x48] sm:$0xff]
      %v1646 = vld [vmem:[%s1635 + $0x50] sm:$0xff]
      %v1647 = vld [vmem:[%s1635 + $0x58] sm:$0xff]
      %v1648 = vld [vmem:[%s1635 + $0x60] sm:$0xff]
      %v1649 = vld [vmem:[%s1635 + $0x68] sm:$0xff]
      %v1650 = vld [vmem:[%s1635 + $0x70] sm:$0xff]
      %v1651 = vld [vmem:[%s1635 + $0x78] sm:$0xff]
      %v1652 = vld [vmem:[%s1635 + $0x80] sm:$0xff]
      %v1653 = vld [vmem:[%s1635 + $0x88] sm:$0xff]
      %v1654 = vld [vmem:[%s1635 + $0x90] sm:$0xff]
      %v1655 = vld [vmem:[%s1635 + $0x98] sm:$0xff]
      %v1656 = vld [vmem:[%s1635 + $0xa0] sm:$0xff]
      %v1657 = vld [vmem:[%s1635 + $0xa8] sm:$0xff]
      %v1658 = vld [vmem:[%s1635 + $0xb0] sm:$0xff]
      %v1659 = vld [vmem:[%s1635 + $0xb8] sm:$0xff]
      %v1660 = vld [vmem:[%s1635 + $0xc0] sm:$0xff]
      %v1661 = vld [vmem:[%s1635 + $0xc8] sm:$0xff]
      %v1662 = vld [vmem:[%s1635 + $0xd0] sm:$0xff]
      %v1663 = vld [vmem:[%s1635 + $0xd8] sm:$0xff]
      %v1664 = vld [vmem:[%s1635 + $0xe0] sm:$0xff]
      %v1665 = vld [vmem:[%s1635 + $0xe8] sm:$0xff]
      %v1666 = vld [vmem:[%s1635 + $0xf0] sm:$0xff]
      %v1667 = vld [vmem:[%s1635 + $0xf8] sm:$0xff]
      %v1668 = vld [vmem:[%s1635 + $0x100] sm:$0xff]
      %v1669 = vld [vmem:[%s1635 + $0x108] sm:$0xff]
      %v1670 = vld [vmem:[%s1635 + $0x110] sm:$0x7]
      %v1672 = vsel %vm211, %v1636, 0
      %v1675 = vsel %vm211, %v1637, 0
      %v1678 = vsel %vm211, %v1638, 0
      %v1681 = vsel %vm211, %v1639, 0
      %v1684 = vsel %vm211, %v1640, 0
      %v1687 = vsel %vm211, %v1641, 0
      %v1690 = vsel %vm211, %v1642, 0
      %v1693 = vsel %vm211, %v1643, 0
      %v1696 = vsel %vm211, %v1644, 0
      %v1699 = vsel %vm211, %v1645, 0
      %v1702 = vsel %vm211, %v1646, 0
      %v1705 = vsel %vm211, %v1647, 0
      %v1708 = vsel %vm211, %v1648, 0
      %v1711 = vsel %vm211, %v1649, 0
      %v1714 = vsel %vm211, %v1650, 0
      %v1717 = vsel %vm211, %v1651, 0
      %v1720 = vsel %vm211, %v1652, 0
      %v1723 = vsel %vm211, %v1653, 0
      %v1726 = vsel %vm211, %v1654, 0
      %v1729 = vsel %vm211, %v1655, 0
      %v1732 = vsel %vm211, %v1656, 0
      %v1735 = vsel %vm211, %v1657, 0
      %v1738 = vsel %vm211, %v1658, 0
      %v1741 = vsel %vm211, %v1659, 0
      %v1744 = vsel %vm211, %v1660, 0
      %v1747 = vsel %vm211, %v1661, 0
      %v1750 = vsel %vm211, %v1662, 0
      %v1753 = vsel %vm211, %v1663, 0
      %v1756 = vsel %vm211, %v1664, 0
      %v1759 = vsel %vm211, %v1665, 0
      %v1762 = vsel %vm211, %v1666, 0
      %v1765 = vsel %vm211, %v1667, 0
      %v1768 = vsel %vm211, %v1668, 0
      %v1771 = vsel %vm211, %v1669, 0
      %v1774 = vsel %vm211, %v1670, 0
      %1776 = vmatpush.msra.mxu0 0.0
      %1777 = vmatpush.msra.mxu0 0.0
      %1778 = vmatpush.msra.mxu0 0.0
      %1779 = vmatpush.msra.mxu0 0.0
      %1780 = vmatpush.msra.mxu0 0.0
      %1781 = vmatpush.msra.mxu0 0.0
      %1782 = vmatpush.msra.mxu0 0.0
      %1783 = vmatpush.msra.mxu0 0.0
      %1784 = vmatpush.msra.mxu0 0.0
      %1785 = vmatpush.msra.mxu0 0.0
      %1786 = vmatpush.msra.mxu0 0.0
      %1787 = vmatpush.msra.mxu0 %v319
      %1788 = vmatpush.msra.mxu0 %v174
      %1789 = vmatpush.msra.mxu0 %v173
      %1790 = vmatpush.msra.mxu0 %v172
      %1791 = vmatpush.msra.mxu0 %v171
      %1792 = vmatmul.f32.gmra.mxu0 %v1672
      %v1793 = vpop.f32.mrf.mxu0
      %v1794 = vadd.f32 0.0, %v1793
      %1795 = vmatmul.f32.gmra.mxu0 %v1675
      %v1796 = vpop.f32.mrf.mxu0
      %v1797 = vadd.f32 0.0, %v1796
      %1798 = vmatmul.f32.gmra.mxu0 %v1678
      %v1799 = vpop.f32.mrf.mxu0
      %v1800 = vadd.f32 0.0, %v1799
      %1801 = vmatmul.f32.gmra.mxu0 %v1681
      %v1802 = vpop.f32.mrf.mxu0
      %v1803 = vadd.f32 0.0, %v1802
      %1804 = vmatmul.f32.gmra.mxu0 %v1684
      %v1805 = vpop.f32.mrf.mxu0
      %v1806 = vadd.f32 0.0, %v1805
      %1807 = vmatmul.f32.gmra.mxu0 %v1687
      %v1808 = vpop.f32.mrf.mxu0
      %v1809 = vadd.f32 0.0, %v1808
      %1810 = vmatmul.f32.gmra.mxu0 %v1690
      %v1811 = vpop.f32.mrf.mxu0
      %v1812 = vadd.f32 0.0, %v1811
      %1813 = vmatmul.f32.gmra.mxu0 %v1693
      %v1814 = vpop.f32.mrf.mxu0
      %v1815 = vadd.f32 0.0, %v1814
      %1816 = vmatmul.f32.gmra.mxu0 %v1696
      %v1817 = vpop.f32.mrf.mxu0
      %v1818 = vadd.f32 0.0, %v1817
      %1819 = vmatmul.f32.gmra.mxu0 %v1699
      %v1820 = vpop.f32.mrf.mxu0
      %v1821 = vadd.f32 0.0, %v1820
      %1822 = vmatmul.f32.gmra.mxu0 %v1702
      %v1823 = vpop.f32.mrf.mxu0
      %v1824 = vadd.f32 0.0, %v1823
      %1825 = vmatmul.f32.gmra.mxu0 %v1705
      %v1826 = vpop.f32.mrf.mxu0
      %v1827 = vadd.f32 0.0, %v1826
      %1828 = vmatmul.f32.gmra.mxu0 %v1708
      %v1829 = vpop.f32.mrf.mxu0
      %v1830 = vadd.f32 0.0, %v1829
      %1831 = vmatmul.f32.gmra.mxu0 %v1711
      %v1832 = vpop.f32.mrf.mxu0
      %v1833 = vadd.f32 0.0, %v1832
      %1834 = vmatmul.f32.gmra.mxu0 %v1714
      %v1835 = vpop.f32.mrf.mxu0
      %v1836 = vadd.f32 0.0, %v1835
      %1837 = vmatmul.f32.gmra.mxu0 %v1717
      %v1838 = vpop.f32.mrf.mxu0
      %v1839 = vadd.f32 0.0, %v1838
      %1840 = vmatmul.f32.gmra.mxu0 %v1720
      %v1841 = vpop.f32.mrf.mxu0
      %v1842 = vadd.f32 0.0, %v1841
      %1843 = vmatmul.f32.gmra.mxu0 %v1723
      %v1844 = vpop.f32.mrf.mxu0
      %v1845 = vadd.f32 0.0, %v1844
      %1846 = vmatmul.f32.gmra.mxu0 %v1726
      %v1847 = vpop.f32.mrf.mxu0
      %v1848 = vadd.f32 0.0, %v1847
      %1849 = vmatmul.f32.gmra.mxu0 %v1729
      %v1850 = vpop.f32.mrf.mxu0
      %v1851 = vadd.f32 0.0, %v1850
      %1852 = vmatmul.f32.gmra.mxu0 %v1732
      %v1853 = vpop.f32.mrf.mxu0
      %v1854 = vadd.f32 0.0, %v1853
      %1855 = vmatmul.f32.gmra.mxu0 %v1735
      %v1856 = vpop.f32.mrf.mxu0
      %v1857 = vadd.f32 0.0, %v1856
      %1858 = vmatmul.f32.gmra.mxu0 %v1738
      %v1859 = vpop.f32.mrf.mxu0
      %v1860 = vadd.f32 0.0, %v1859
      %1861 = vmatmul.f32.gmra.mxu0 %v1741
      %v1862 = vpop.f32.mrf.mxu0
      %v1863 = vadd.f32 0.0, %v1862
      %1864 = vmatmul.f32.gmra.mxu0 %v1744
      %v1865 = vpop.f32.mrf.mxu0
      %v1866 = vadd.f32 0.0, %v1865
      %1867 = vmatmul.f32.gmra.mxu0 %v1747
      %v1868 = vpop.f32.mrf.mxu0
      %v1869 = vadd.f32 0.0, %v1868
      %1870 = vmatmul.f32.gmra.mxu0 %v1750
      %v1871 = vpop.f32.mrf.mxu0
      %v1872 = vadd.f32 0.0, %v1871
      %1873 = vmatmul.f32.gmra.mxu0 %v1753
      %v1874 = vpop.f32.mrf.mxu0
      %v1875 = vadd.f32 0.0, %v1874
      %1876 = vmatmul.f32.gmra.mxu0 %v1756
      %v1877 = vpop.f32.mrf.mxu0
      %v1878 = vadd.f32 0.0, %v1877
      %1879 = vmatmul.f32.gmra.mxu0 %v1759
      %v1880 = vpop.f32.mrf.mxu0
      %v1881 = vadd.f32 0.0, %v1880
      %1882 = vmatmul.f32.gmra.mxu0 %v1762
      %v1883 = vpop.f32.mrf.mxu0
      %v1884 = vadd.f32 0.0, %v1883
      %1885 = vmatmul.f32.gmra.mxu0 %v1765
      %v1886 = vpop.f32.mrf.mxu0
      %v1887 = vadd.f32 0.0, %v1886
      %1888 = vmatmul.f32.gmra.mxu0 %v1768
      %v1889 = vpop.f32.mrf.mxu0
      %v1890 = vadd.f32 0.0, %v1889
      %1891 = vmatmul.f32.gmra.mxu0 %v1771
      %v1892 = vpop.f32.mrf.mxu0
      %v1893 = vadd.f32 0.0, %v1892
      %1894 = vmatmul.f32.gmra.mxu0 %v1774
      %v1895 = vpop.f32.mrf.mxu0
      %v1896 = vadd.f32 0.0, %v1895
      %1897 = vdwg.mxu0
      %v1898 = vmax.f32 %v1600, %v1794
      %v1899 = vmax.f32 %v1601, %v1797
      %v1900 = vmax.f32 %v1602, %v1800
      %v1901 = vmax.f32 %v1603, %v1803
      %v1902 = vmax.f32 %v1604, %v1806
      %v1903 = vmax.f32 %v1605, %v1809
      %v1904 = vmax.f32 %v1606, %v1812
      %v1905 = vmax.f32 %v1607, %v1815
      %v1906 = vmax.f32 %v1608, %v1818
      %v1907 = vmax.f32 %v1609, %v1821
      %v1908 = vmax.f32 %v1610, %v1824
      %v1909 = vmax.f32 %v1611, %v1827
      %v1910 = vmax.f32 %v1612, %v1830
      %v1911 = vmax.f32 %v1613, %v1833
      %v1912 = vmax.f32 %v1614, %v1836
      %v1913 = vmax.f32 %v1615, %v1839
      %v1914 = vmax.f32 %v1616, %v1842
      %v1915 = vmax.f32 %v1617, %v1845
      %v1916 = vmax.f32 %v1618, %v1848
      %v1917 = vmax.f32 %v1619, %v1851
      %v1918 = vmax.f32 %v1620, %v1854
      %v1919 = vmax.f32 %v1621, %v1857
      %v1920 = vmax.f32 %v1622, %v1860
      %v1921 = vmax.f32 %v1623, %v1863
      %v1922 = vmax.f32 %v1624, %v1866
      %v1923 = vmax.f32 %v1625, %v1869
      %v1924 = vmax.f32 %v1626, %v1872
      %v1925 = vmax.f32 %v1627, %v1875
      %v1926 = vmax.f32 %v1628, %v1878
      %v1927 = vmax.f32 %v1629, %v1881
      %v1928 = vmax.f32 %v1630, %v1884
      %v1929 = vmax.f32 %v1631, %v1887
      %v1930 = vmax.f32 %v1632, %v1890
      %v1931 = vmax.f32 %v1633, %v1893
      %v1932 = vmax.f32 %v1634, %v1896
      %v1933 = vld [vmem:[%s2] sm:$0x1]
      %v1935 = vperm.slane %v1933, 0
      %v1937 = vadd.f32 %v1898, %v1935
      %v1938 = vadd.f32 %v1899, %v1935
      %v1939 = vadd.f32 %v1900, %v1935
      %v1940 = vadd.f32 %v1901, %v1935
      %v1941 = vadd.f32 %v1902, %v1935
      %v1942 = vadd.f32 %v1903, %v1935
      %v1943 = vadd.f32 %v1904, %v1935
      %v1944 = vadd.f32 %v1905, %v1935
      %v1945 = vadd.f32 %v1906, %v1935
      %v1946 = vadd.f32 %v1907, %v1935
      %v1947 = vadd.f32 %v1908, %v1935
      %v1948 = vadd.f32 %v1909, %v1935
      %v1949 = vadd.f32 %v1910, %v1935
      %v1950 = vadd.f32 %v1911, %v1935
      %v1951 = vadd.f32 %v1912, %v1935
      %v1952 = vadd.f32 %v1913, %v1935
      %v1953 = vadd.f32 %v1914, %v1935
      %v1954 = vadd.f32 %v1915, %v1935
      %v1955 = vadd.f32 %v1916, %v1935
      %v1956 = vadd.f32 %v1917, %v1935
      %v1957 = vadd.f32 %v1918, %v1935
      %v1958 = vadd.f32 %v1919, %v1935
      %v1959 = vadd.f32 %v1920, %v1935
      %v1960 = vadd.f32 %v1921, %v1935
      %v1961 = vadd.f32 %v1922, %v1935
      %v1962 = vadd.f32 %v1923, %v1935
      %v1963 = vadd.f32 %v1924, %v1935
      %v1964 = vadd.f32 %v1925, %v1935
      %v1965 = vadd.f32 %v1926, %v1935
      %v1966 = vadd.f32 %v1927, %v1935
      %v1967 = vadd.f32 %v1928, %v1935
      %v1968 = vadd.f32 %v1929, %v1935
      %v1969 = vadd.f32 %v1930, %v1935
      %v1970 = vadd.f32 %v1931, %v1935
      %v1971 = vadd.f32 %v1932, %v1935
      %v1972 = vmax.f32 %v1937, 0.0
      %v1973 = vmax.f32 %v1938, 0.0
      %v1974 = vmax.f32 %v1939, 0.0
      %v1975 = vmax.f32 %v1940, 0.0
      %v1976 = vmax.f32 %v1941, 0.0
      %v1977 = vmax.f32 %v1942, 0.0
      %v1978 = vmax.f32 %v1943, 0.0
      %v1979 = vmax.f32 %v1944, 0.0
      %v1980 = vmax.f32 %v1945, 0.0
      %v1981 = vmax.f32 %v1946, 0.0
      %v1982 = vmax.f32 %v1947, 0.0
      %v1983 = vmax.f32 %v1948, 0.0
      %v1984 = vmax.f32 %v1949, 0.0
      %v1985 = vmax.f32 %v1950, 0.0
      %v1986 = vmax.f32 %v1951, 0.0
      %v1987 = vmax.f32 %v1952, 0.0
      %v1988 = vmax.f32 %v1953, 0.0
      %v1989 = vmax.f32 %v1954, 0.0
      %v1990 = vmax.f32 %v1955, 0.0
      %v1991 = vmax.f32 %v1956, 0.0
      %v1992 = vmax.f32 %v1957, 0.0
      %v1993 = vmax.f32 %v1958, 0.0
      %v1994 = vmax.f32 %v1959, 0.0
      %v1995 = vmax.f32 %v1960, 0.0
      %v1996 = vmax.f32 %v1961, 0.0
      %v1997 = vmax.f32 %v1962, 0.0
      %v1998 = vmax.f32 %v1963, 0.0
      %v1999 = vmax.f32 %v1964, 0.0
      %v2000 = vmax.f32 %v1965, 0.0
      %v2001 = vmax.f32 %v1966, 0.0
      %v2002 = vmax.f32 %v1967, 0.0
      %v2003 = vmax.f32 %v1968, 0.0
      %v2004 = vmax.f32 %v1969, 0.0
      %v2005 = vmax.f32 %v1970, 0.0
      %v2006 = vmax.f32 %v1971, 0.0
      %vm2007 = vcmask 261120
      %2008 = vst.msk [vmem:[%s170] sm:$0xff] %vm2007, %v1972
      %2009 = vst.msk [vmem:[%s170 + $0x8] sm:$0xff] %vm2007, %v1973
      %2010 = vst.msk [vmem:[%s170 + $0x10] sm:$0xff] %vm2007, %v1974
      %2011 = vst.msk [vmem:[%s170 + $0x18] sm:$0xff] %vm2007, %v1975
      %2012 = vst.msk [vmem:[%s170 + $0x20] sm:$0xff] %vm2007, %v1976
      %2013 = vst.msk [vmem:[%s170 + $0x28] sm:$0xff] %vm2007, %v1977
      %2014 = vst.msk [vmem:[%s170 + $0x30] sm:$0xff] %vm2007, %v1978
      %2015 = vst.msk [vmem:[%s170 + $0x38] sm:$0xff] %vm2007, %v1979
      %2016 = vst.msk [vmem:[%s170 + $0x40] sm:$0xff] %vm2007, %v1980
      %2017 = vst.msk [vmem:[%s170 + $0x48] sm:$0xff] %vm2007, %v1981
      %2018 = vst.msk [vmem:[%s170 + $0x50] sm:$0xff] %vm2007, %v1982
      %2019 = vst.msk [vmem:[%s170 + $0x58] sm:$0xff] %vm2007, %v1983
      %2020 = vst.msk [vmem:[%s170 + $0x60] sm:$0xff] %vm2007, %v1984
      %2021 = vst.msk [vmem:[%s170 + $0x68] sm:$0xff] %vm2007, %v1985
      %2022 = vst.msk [vmem:[%s170 + $0x70] sm:$0xff] %vm2007, %v1986
      %2023 = vst.msk [vmem:[%s170 + $0x78] sm:$0xff] %vm2007, %v1987
      %2024 = vst.msk [vmem:[%s170 + $0x80] sm:$0xff] %vm2007, %v1988
      %2025 = vst.msk [vmem:[%s170 + $0x88] sm:$0xff] %vm2007, %v1989
      %2026 = vst.msk [vmem:[%s170 + $0x90] sm:$0xff] %vm2007, %v1990
      %2027 = vst.msk [vmem:[%s170 + $0x98] sm:$0xff] %vm2007, %v1991
      %2028 = vst.msk [vmem:[%s170 + $0xa0] sm:$0xff] %vm2007, %v1992
      %2029 = vst.msk [vmem:[%s170 + $0xa8] sm:$0xff] %vm2007, %v1993
      %2030 = vst.msk [vmem:[%s170 + $0xb0] sm:$0xff] %vm2007, %v1994
      %2031 = vst.msk [vmem:[%s170 + $0xb8] sm:$0xff] %vm2007, %v1995
      %2032 = vst.msk [vmem:[%s170 + $0xc0] sm:$0xff] %vm2007, %v1996
      %2033 = vst.msk [vmem:[%s170 + $0xc8] sm:$0xff] %vm2007, %v1997
      %2034 = vst.msk [vmem:[%s170 + $0xd0] sm:$0xff] %vm2007, %v1998
      %2035 = vst.msk [vmem:[%s170 + $0xd8] sm:$0xff] %vm2007, %v1999
      %2036 = vst.msk [vmem:[%s170 + $0xe0] sm:$0xff] %vm2007, %v2000
      %2037 = vst.msk [vmem:[%s170 + $0xe8] sm:$0xff] %vm2007, %v2001
      %2038 = vst.msk [vmem:[%s170 + $0xf0] sm:$0xff] %vm2007, %v2002
      %2039 = vst.msk [vmem:[%s170 + $0xf8] sm:$0xff] %vm2007, %v2003
      %2040 = vst.msk [vmem:[%s170 + $0x100] sm:$0xff] %vm2007, %v2004
      %2041 = vst.msk [vmem:[%s170 + $0x108] sm:$0xff] %vm2007, %v2005
      %vm2042 = vcmask 256000
      %2043 = vst.msk [vmem:[%s170 + $0x110] sm:$0x7] %vm2042, %v2006
      %p2044 = scmp.lt.s32.totalorder %s14, 1
      %s2045 = scalar_select %p2044, %s14, 1
      %s2046 = smul.addr %s2045, 35
      %s2047 = smul.addr %s2046, 8
      %s2048 = scalar_lea.vmem %s3, %s2047
      // Predicated region
      $region33: #{_lambda_.3} parent=31 // pred_check
        %p2049 = pneg %p100
      $region34: #{_lambda_.3} parent=31 // pred_check_branch
        %2051 = sbr.rel (%p2049) target = $region36
      $region35: #{_lambda_.3} parent=31 // pred_region
        _
      $region36: #{_lambda_.3} parent=31 // pred_fallthru
        _
    $region32: #{_lambda_.3} parent=5 // pred_fallthru
      _
    %p2052 = scmp.le.s32.totalorder 2, %s9
    // Predicated region
    $region37: #{_lambda_.3} parent=5 // pred_check
      %p2053 = pneg %p2052
    $region38: #{_lambda_.3} parent=5 // pred_check_branch
      %2055 = sbr.rel (%p2053) target = $region40
    $region39: #{_lambda_.3} parent=5 // pred_region
      %s2056 = ssub.s32 %s9, 2
      // Predicated region
      $region41: #{_lambda_.3} parent=39 // pred_check
        %p2057 = pneg %p106
      $region42: #{_lambda_.3} parent=39 // pred_check_branch
        %2059 = sbr.rel (%p2057) target = $region44
      $region43: #{_lambda_.3} parent=39 // pred_region
        %p2060 = scmp.lt.s32.totalorder %s15, 1
        %s2061 = scalar_select %p2060, %s15, 1
        %s2062 = smul.addr %s2061, 35
        %s2063 = smul.addr %s2062, 8
        %s2064 = scalar_lea.vmem %s3, %s2063
      $region44: #{_lambda_.3} parent=39 // pred_fallthru
        _
    $region40: #{_lambda_.3} parent=5 // pred_fallthru
      _
  $region6: #{_lambda_.3} parent=0 // loop_footer
    %s13 = sadd.s32 1, %s9
  $region7: #{_lambda_.3} parent=0 // loop_footer_branch
    %8 = sbr.rel target = $region3
  $region8: #{_lambda_.3} parent=0 // loop_exit
    _

// kernel: _lambda_.4
$region0: #{_lambda_.4}
  #allocation0 [shape = 'u32[]', space=smem, size = 0x4, offset = 0x4, fixed_abs, tag = 'smem constant byte address 0x4 - core index']
  #allocation1 [shape = 'u32[72,128]{1,0:T(1,128)}', space=vmem, size = 0x9000, scoped, tag = 'internal scratch']
  %s0 = inlined_call_operand.vmem [shape: f32[2,6,30,704], index: 0, kind: input, shape index: {}]
  %s1 = inlined_call_operand.vmem [shape: f32[704,64], index: 1, kind: input, shape index: {}]
  %s2 = inlined_call_operand.vmem [shape: f32[1,64], index: 2, kind: input, shape index: {}]
  %s3 = inlined_call_operand.vmem [shape: f32[2,30,64], index: 3, kind: output, shape index: {}]
  %s4 = sld [smem:[#allocation0]]
  $region45: #{_lambda_.4} parent=0
    _
  %s6 = ssub.s32 1, %s4
  %s7 = scalar_select 0, %s6, %s4
  loop: start=0, step=1, limit=4
  $region2: #{_lambda_.4} parent=0 // loop_pre_header
    _
  $region3: #{_lambda_.4} parent=0 // loop_header
    %s9 = sphi 0, %s13
    %p10 = scmp.ge.s32.totalorder %s9, 4
    %s19 = sphi 0, %s21
    %s22 = sphi 0, %s19
    %s23 = sphi 0, %s22
    %s39 = sphi 0, %s23
    %s43 = sphi 0, %s43
    %s45 = sphi 0, %s43
    %s46 = sphi 0, %s45
    %s60 = sphi 0, %s46
    %s64 = sphi 0, %s64
    %s66 = sphi 0, %s64
    %s67 = sphi 0, %s66
    %s81 = sphi 0, %s67
    %s87 = sphi 0, %s89
    %s90 = sphi 0, %s87
    %s91 = sphi 0, %s90
    %s107 = sphi 0, %s91
  $region4: #{_lambda_.4} parent=0 // loop_header_branch
    %12 = sbr.rel (%p10) target = $region8
  $region5: #{_lambda_.4} parent=0 // loop_body
    %s14 = ssub.s32 %s9, 1
    %s15 = ssub.s32 %s9, 2
    %s16 = sadd.s32 %s9, 1
    %s17 = ssub.s32 %s9, %s16
    %p18 = scmp.eq.s32.totalorder %s17, 0
    %s20 = sadd.s32 %s19, 1
    %s21 = scalar_select %p18, %s19, %s20
    %p24 = pneg %p18
    %p25 = scmp.eq.s32.totalorder %s9, 1
    %p26 = por %p24, %p25
    %p27 = scmp.ne.s32.totalorder %s19, %s22
    %p28 = scmp.eq.s32.totalorder %s9, 0
    %p29 = por %p27, %p28
    %p30 = scmp.ne.s32.totalorder %s19, %s22
    %p31 = scmp.eq.s32.totalorder %s14, 1
    %p32 = por %p30, %p31
    %p33 = scmp.ne.s32.totalorder %s22, %s23
    %p34 = scmp.eq.s32.totalorder %s14, 0
    %p35 = por %p33, %p34
    %p36 = scmp.ne.s32.totalorder %s22, %s23
    %p37 = scmp.eq.s32.totalorder %s15, 1
    %p38 = por %p36, %p37
    %p40 = scmp.ne.s32.totalorder %s23, %s39
    %p41 = scmp.eq.s32.totalorder %s15, 0
    %p42 = por %p40, %p41
    %s44 = sadd.s32 %s43, 1
    %p47 = scmp.eq.s32.totalorder %s9, 1
    %p48 = scmp.ne.s32.totalorder %s43, %s45
    %p49 = scmp.eq.s32.totalorder %s9, 0
    %p50 = por %p48, %p49
    %p51 = scmp.ne.s32.totalorder %s43, %s45
    %p52 = scmp.eq.s32.totalorder %s14, 1
    %p53 = por %p51, %p52
    %p54 = scmp.ne.s32.totalorder %s45, %s46
    %p55 = scmp.eq.s32.totalorder %s14, 0
    %p56 = por %p54, %p55
    %p57 = scmp.ne.s32.totalorder %s45, %s46
    %p58 = scmp.eq.s32.totalorder %s15, 1
    %p59 = por %p57, %p58
    %p61 = scmp.ne.s32.totalorder %s46, %s60
    %p62 = scmp.eq.s32.totalorder %s15, 0
    %p63 = por %p61, %p62
    %s65 = sadd.s32 %s64, 1
    %p68 = scmp.eq.s32.totalorder %s9, 1
    %p69 = scmp.ne.s32.totalorder %s64, %s66
    %p70 = scmp.eq.s32.totalorder %s9, 0
    %p71 = por %p69, %p70
    %p72 = scmp.ne.s32.totalorder %s64, %s66
    %p73 = scmp.eq.s32.totalorder %s14, 1
    %p74 = por %p72, %p73
    %p75 = scmp.ne.s32.totalorder %s66, %s67
    %p76 = scmp.eq.s32.totalorder %s14, 0
    %p77 = por %p75, %p76
    %p78 = scmp.ne.s32.totalorder %s66, %s67
    %p79 = scmp.eq.s32.totalorder %s15, 1
    %p80 = por %p78, %p79
    %p82 = scmp.ne.s32.totalorder %s67, %s81
    %p83 = scmp.eq.s32.totalorder %s15, 0
    %p84 = por %p82, %p83
    %s85 = ssub.s32 %s9, %s16
    %p86 = scmp.eq.s32.totalorder %s85, 0
    %s88 = sadd.s32 %s87, 1
    %s89 = scalar_select %p86, %s87, %s88
    %p92 = pneg %p86
    %p93 = scmp.eq.s32.totalorder %s9, 1
    %p94 = por %p92, %p93
    %p95 = scmp.ne.s32.totalorder %s87, %s90
    %p96 = scmp.eq.s32.totalorder %s9, 0
    %p97 = por %p95, %p96
    %p98 = scmp.ne.s32.totalorder %s87, %s90
    %p99 = scmp.eq.s32.totalorder %s14, 1
    %p100 = por %p98, %p99
    %p101 = scmp.ne.s32.totalorder %s90, %s91
    %p102 = scmp.eq.s32.totalorder %s14, 0
    %p103 = por %p101, %p102
    %p104 = scmp.ne.s32.totalorder %s90, %s91
    %p105 = scmp.eq.s32.totalorder %s15, 1
    %p106 = por %p104, %p105
    %p108 = scmp.ne.s32.totalorder %s91, %s107
    %p109 = scmp.eq.s32.totalorder %s15, 0
    %p110 = por %p108, %p109
    %p111 = scmp.le.s32.totalorder 1, %s9
    %p112 = scmp.lt.s32.totalorder %s9, 3
    %p113 = pnand %p111, %p112
    %p114 = pneg %p113
    // Predicated region
    $region9: #{_lambda_.4} parent=5 // pred_check
      _
    $region10: #{_lambda_.4} parent=5 // pred_check_branch
      %116 = sbr.rel (%p113) target = $region12
    $region11: #{_lambda_.4} parent=5 // pred_region
      %s117 = ssub.s32 %s9, 1
      // Predicated region
      $region13: #{_lambda_.4} parent=11 // pred_check
        %p118 = pneg %p56
      $region14: #{_lambda_.4} parent=11 // pred_check_branch
        %120 = sbr.rel (%p118) target = $region16
      $region15: #{_lambda_.4} parent=11 // pred_region
        _
      $region16: #{_lambda_.4} parent=11 // pred_fallthru
        _
      // Predicated region
      $region17: #{_lambda_.4} parent=11 // pred_check
        %p121 = pneg %p77
      $region18: #{_lambda_.4} parent=11 // pred_check_branch
        %123 = sbr.rel (%p121) target = $region20
      $region19: #{_lambda_.4} parent=11 // pred_region
        _
      $region20: #{_lambda_.4} parent=11 // pred_fallthru
        _
    $region12: #{_lambda_.4} parent=5 // pred_fallthru
      _
    %p124 = scmp.lt.s32.totalorder %s9, 2
    // Predicated region
    $region21: #{_lambda_.4} parent=5 // pred_check
      %p125 = pneg %p124
    $region22: #{_lambda_.4} parent=5 // pred_check_branch
      %127 = sbr.rel (%p125) target = $region24
    $region23: #{_lambda_.4} parent=5 // pred_region
      // Predicated region
      $region25: #{_lambda_.4} parent=23 // pred_check
        %p128 = pneg %p29
      $region26: #{_lambda_.4} parent=23 // pred_check_branch
        %130 = sbr.rel (%p128) target = $region28
      $region27: #{_lambda_.4} parent=23 // pred_region
        %p131 = scmp.lt.s32.totalorder %s9, 1
        %s132 = scalar_select %p131, %s9, 1
        %s133 = smul.addr %s132, 144
        %s134 = smul.addr %s133, 8
        %s135 = scalar_lea.vmem %s0, %s134
      $region28: #{_lambda_.4} parent=23 // pred_fallthru
        _
    $region24: #{_lambda_.4} parent=5 // pred_fallthru
      _
    %p136 = scmp.le.s32.totalorder 1, %s9
    %p137 = scmp.lt.s32.totalorder %s9, 3
    %p138 = pnand %p136, %p137
    %p139 = pneg %p138
    // Predicated region
    $region29: #{_lambda_.4} parent=5 // pred_check
      _
    $region30: #{_lambda_.4} parent=5 // pred_check_branch
      %141 = sbr.rel (%p138) target = $region32
    $region31: #{_lambda_.4} parent=5 // pred_region
      %s142 = ssub.s32 %s9, 1
      %p143 = scmp.lt.s32.totalorder %s14, 1
      %s144 = scalar_select %p143, %s14, 1
      %s145 = smul.addr %s144, 144
      %s146 = smul.addr %s145, 8
      %s147 = scalar_lea.vmem %s0, %s146
      %p148 = pneg %p35
      %p149 = pneg %p32
      %p150 = pneg %p56
      %p151 = pneg %p53
      %p152 = pneg %p77
      %p153 = pneg %p74
      %p154 = pneg %p103
      %p155 = pneg %p100
      %p156 = scmp.lt.s32.totalorder %s14, 1
      %s157 = scalar_select %p156, %s14, 1
      %s158 = smul.addr %s157, 4
      %s159 = smul.addr %s158, 8
      %s160 = scalar_lea.vmem %s3, %s159
      %p161 = scmp.lt.s32.totalorder %s14, 1
      %s162 = scalar_select %p161, %s14, 1
      %s163 = smul.addr %s162, 144
      %s164 = smul.addr %s163, 8
      %s165 = scalar_lea.vmem %s0, %s164
      %p166 = scmp.lt.s32.totalorder %s14, 1
      %s167 = scalar_select %p166, %s14, 1
      %s168 = smul.addr %s167, 4
      %s169 = smul.addr %s168, 8
      %s170 = scalar_lea.vmem %s3, %s169
      %v171 = vld [vmem:[%s1] sm:$0xff]
      %v172 = vld [vmem:[%s1 + $0x8] sm:$0xff]
      %v173 = vld [vmem:[%s1 + $0x10] sm:$0xff]
      %v174 = vld [vmem:[%s1 + $0x18] sm:$0xff]
      %v175 = vld [vmem:[%s1 + $0x20] sm:$0xff]
      %v176 = vld [vmem:[%s1 + $0x28] sm:$0xff]
      %v177 = vld [vmem:[%s1 + $0x30] sm:$0xff]
      %v178 = vld [vmem:[%s1 + $0x38] sm:$0xff]
      %v179 = vld [vmem:[%s1 + $0x40] sm:$0xff]
      %v180 = vld [vmem:[%s1 + $0x48] sm:$0xff]
      %v181 = vld [vmem:[%s1 + $0x50] sm:$0xff]
      %v182 = vld [vmem:[%s1 + $0x58] sm:$0xff]
      %v183 = vld [vmem:[%s1 + $0x60] sm:$0xff]
      %v184 = vld [vmem:[%s1 + $0x68] sm:$0xff]
      %v185 = vld [vmem:[%s1 + $0x70] sm:$0xff]
      %v186 = vld [vmem:[%s1 + $0x78] sm:$0xff]
      %v187 = vld [vmem:[%s1 + $0x80] sm:$0xff]
      %v188 = vld [vmem:[%s1 + $0x88] sm:$0xff]
      %v189 = vld [vmem:[%s1 + $0x90] sm:$0xff]
      %v190 = vld [vmem:[%s1 + $0x98] sm:$0xff]
      %v191 = vld [vmem:[%s1 + $0xa0] sm:$0xff]
      %v192 = vld [vmem:[%s1 + $0xa8] sm:$0xff]
      %v193 = vld [vmem:[%s1 + $0xb0] sm:$0xff]
      %v194 = vld [vmem:[%s1 + $0xb8] sm:$0xff]
      %v195 = vld [vmem:[%s1 + $0xc0] sm:$0xff]
      %v196 = vld [vmem:[%s1 + $0xc8] sm:$0xff]
      %v197 = vld [vmem:[%s1 + $0xd0] sm:$0xff]
      %v198 = vld [vmem:[%s1 + $0xd8] sm:$0xff]
      %v199 = vld [vmem:[%s1 + $0xe0] sm:$0xff]
      %v200 = vld [vmem:[%s1 + $0xe8] sm:$0xff]
      %v201 = vld [vmem:[%s1 + $0xf0] sm:$0xff]
      %v202 = vld [vmem:[%s1 + $0xf8] sm:$0xff]
      %v203 = vld [vmem:[%s1 + $0x100] sm:$0xff]
      %v204 = vld [vmem:[%s1 + $0x108] sm:$0xff]
      %v205 = vld [vmem:[%s1 + $0x110] sm:$0xff]
      %v206 = vld [vmem:[%s1 + $0x118] sm:$0xff]
      %v207 = vld [vmem:[%s1 + $0x120] sm:$0xff]
      %v208 = vld [vmem:[%s1 + $0x128] sm:$0xff]
      %v209 = vld [vmem:[%s1 + $0x130] sm:$0xff]
      %v210 = vld [vmem:[%s1 + $0x138] sm:$0xff]
      %v211 = vld [vmem:[%s1 + $0x140] sm:$0xff]
      %v212 = vld [vmem:[%s1 + $0x148] sm:$0xff]
      %v213 = vld [vmem:[%s1 + $0x150] sm:$0xff]
      %v214 = vld [vmem:[%s1 + $0x158] sm:$0xff]
      %v215 = vld [vmem:[%s1 + $0x160] sm:$0xff]
      %v216 = vld [vmem:[%s1 + $0x168] sm:$0xff]
      %v217 = vld [vmem:[%s1 + $0x170] sm:$0xff]
      %v218 = vld [vmem:[%s1 + $0x178] sm:$0xff]
      %v219 = vld [vmem:[%s1 + $0x180] sm:$0xff]
      %v220 = vld [vmem:[%s1 + $0x188] sm:$0xff]
      %v221 = vld [vmem:[%s1 + $0x190] sm:$0xff]
      %v222 = vld [vmem:[%s1 + $0x198] sm:$0xff]
      %v223 = vld [vmem:[%s1 + $0x1a0] sm:$0xff]
      %v224 = vld [vmem:[%s1 + $0x1a8] sm:$0xff]
      %v225 = vld [vmem:[%s1 + $0x1b0] sm:$0xff]
      %v226 = vld [vmem:[%s1 + $0x1b8] sm:$0xff]
      %v227 = vld [vmem:[%s1 + $0x1c0] sm:$0xff]
      %v228 = vld [vmem:[%s1 + $0x1c8] sm:$0xff]
      %v229 = vld [vmem:[%s1 + $0x1d0] sm:$0xff]
      %v230 = vld [vmem:[%s1 + $0x1d8] sm:$0xff]
      %v231 = vld [vmem:[%s1 + $0x1e0] sm:$0xff]
      %v232 = vld [vmem:[%s1 + $0x1e8] sm:$0xff]
      %v233 = vld [vmem:[%s1 + $0x1f0] sm:$0xff]
      %v234 = vld [vmem:[%s1 + $0x1f8] sm:$0xff]
      %v235 = vld [vmem:[%s1 + $0x200] sm:$0xff]
      %v236 = vld [vmem:[%s1 + $0x208] sm:$0xff]
      %v237 = vld [vmem:[%s1 + $0x210] sm:$0xff]
      %v238 = vld [vmem:[%s1 + $0x218] sm:$0xff]
      %v239 = vld [vmem:[%s1 + $0x220] sm:$0xff]
      %v240 = vld [vmem:[%s1 + $0x228] sm:$0xff]
      %v241 = vld [vmem:[%s1 + $0x230] sm:$0xff]
      %v242 = vld [vmem:[%s1 + $0x238] sm:$0xff]
      %v243 = vld [vmem:[%s1 + $0x240] sm:$0xff]
      %v244 = vld [vmem:[%s1 + $0x248] sm:$0xff]
      %v245 = vld [vmem:[%s1 + $0x250] sm:$0xff]
      %v246 = vld [vmem:[%s1 + $0x258] sm:$0xff]
      %v247 = vld [vmem:[%s1 + $0x260] sm:$0xff]
      %v248 = vld [vmem:[%s1 + $0x268] sm:$0xff]
      %v249 = vld [vmem:[%s1 + $0x270] sm:$0xff]
      %v250 = vld [vmem:[%s1 + $0x278] sm:$0xff]
      %v251 = vld [vmem:[%s1 + $0x280] sm:$0xff]
      %v252 = vld [vmem:[%s1 + $0x288] sm:$0xff]
      %v253 = vld [vmem:[%s1 + $0x290] sm:$0xff]
      %v254 = vld [vmem:[%s1 + $0x298] sm:$0xff]
      %v255 = vld [vmem:[%s1 + $0x2a0] sm:$0xff]
      %v256 = vld [vmem:[%s1 + $0x2a8] sm:$0xff]
      %v257 = vld [vmem:[%s1 + $0x2b0] sm:$0xff]
      %v258 = vld [vmem:[%s1 + $0x2b8] sm:$0xff]
      %v259 = vld [vmem:[%s165] sm:$0xff]
      %v260 = vld [vmem:[%s165 + $0x8] sm:$0xff]
      %v261 = vld [vmem:[%s165 + $0x10] sm:$0xff]
      %v262 = vld [vmem:[%s165 + $0x18] sm:$0xff]
      %v263 = vld [vmem:[%s165 + $0x20] sm:$0xff]
      %v264 = vld [vmem:[%s165 + $0x28] sm:$0xff]
      %v265 = vld [vmem:[%s165 + $0x30] sm:$0xff]
      %v266 = vld [vmem:[%s165 + $0x38] sm:$0xff]
      %v267 = vld [vmem:[%s165 + $0x40] sm:$0xff]
      %v268 = vld [vmem:[%s165 + $0x48] sm:$0xff]
      %v269 = vld [vmem:[%s165 + $0x50] sm:$0xff]
      %v270 = vld [vmem:[%s165 + $0x58] sm:$0xff]
      %v271 = vld [vmem:[%s165 + $0x60] sm:$0xff]
      %v272 = vld [vmem:[%s165 + $0x68] sm:$0xff]
      %v273 = vld [vmem:[%s165 + $0x70] sm:$0xff]
      %v274 = vld [vmem:[%s165 + $0x78] sm:$0xff]
      %v275 = vld [vmem:[%s165 + $0x80] sm:$0xff]
      %v276 = vld [vmem:[%s165 + $0x88] sm:$0xff]
      %v277 = vld [vmem:[%s165 + $0x90] sm:$0x3f]
      %v278 = vld [vmem:[%s165 + $0x98] sm:$0x3f]
      %v279 = vld [vmem:[%s165 + $0xa0] sm:$0x3f]
      %v280 = vld [vmem:[%s165 + $0xa8] sm:$0x3f]
      %v281 = vld [vmem:[%s165 + $0xb0] sm:$0x3f]
      %v282 = vld [vmem:[%s165 + $0xb8] sm:$0x3f]
      %vm283 = vcmask 523264
      %v285 = vsel %vm283, %v264, 0
      %v288 = vsel %vm283, %v270, 0
      %v291 = vsel %vm283, %v276, 0
      %v294 = vsel %vm283, %v282, 0
      %296 = vmatpush.msra.mxu0 %v186
      %297 = vmatpush.msra.mxu0 %v185
      %298 = vmatpush.msra.mxu0 %v184
      %299 = vmatpush.msra.mxu0 %v183
      %300 = vmatpush.msra.mxu0 %v182
      %301 = vmatpush.msra.mxu0 %v181
      %302 = vmatpush.msra.mxu0 %v180
      %303 = vmatpush.msra.mxu0 %v179
      %304 = vmatpush.msra.mxu0 %v178
      %305 = vmatpush.msra.mxu0 %v177
      %306 = vmatpush.msra.mxu0 %v176
      %307 = vmatpush.msra.mxu0 %v175
      %308 = vmatpush.msra.mxu0 %v174
      %309 = vmatpush.msra.mxu0 %v173
      %310 = vmatpush.msra.mxu0 %v172
      %311 = vmatpush.msra.mxu0 %v171
      %312 = vmatmul.f32.gmra.mxu0 %v259
      %v313 = vpop.f32.mrf.mxu0
      %v314 = vadd.f32 0.0, %v313
      %315 = vmatmul.f32.gmra.mxu0 %v265
      %v316 = vpop.f32.mrf.mxu0
      %v317 = vadd.f32 0.0, %v316
      %318 = vmatmul.f32.gmra.mxu0 %v271
      %v319 = vpop.f32.mrf.mxu0
      %v320 = vadd.f32 0.0, %v319
      %321 = vmatmul.f32.gmra.mxu0 %v277
      %v322 = vpop.f32.mrf.mxu0
      %v323 = vadd.f32 0.0, %v322
      %324 = vdwg.mxu0
      %325 = vmatpush.msra.mxu0 %v202
      %326 = vmatpush.msra.mxu0 %v201
      %327 = vmatpush.msra.mxu0 %v200
      %328 = vmatpush.msra.mxu0 %v199
      %329 = vmatpush.msra.mxu0 %v198
      %330 = vmatpush.msra.mxu0 %v197
      %331 = vmatpush.msra.mxu0 %v196
      %332 = vmatpush.msra.mxu0 %v195
      %333 = vmatpush.msra.mxu0 %v194
      %334 = vmatpush.msra.mxu0 %v193
      %335 = vmatpush.msra.mxu0 %v192
      %336 = vmatpush.msra.mxu0 %v191
      %337 = vmatpush.msra.mxu0 %v190
      %338 = vmatpush.msra.mxu0 %v189
      %339 = vmatpush.msra.mxu0 %v188
      %340 = vmatpush.msra.mxu0 %v187
      %341 = vmatmul.f32.gmra.mxu0 %v260
      %v342 = vpop.f32.mrf.mxu0
      %v343 = vadd.f32 %v314, %v342
      %344 = vmatmul.f32.gmra.mxu0 %v266
      %v345 = vpop.f32.mrf.mxu0
      %v346 = vadd.f32 %v317, %v345
      %347 = vmatmul.f32.gmra.mxu0 %v272
      %v348 = vpop.f32.mrf.mxu0
      %v349 = vadd.f32 %v320, %v348
      %350 = vmatmul.f32.gmra.mxu0 %v278
      %v351 = vpop.f32.mrf.mxu0
      %v352 = vadd.f32 %v323, %v351
      %353 = vdwg.mxu0
      %354 = vmatpush.msra.mxu0 %v218
      %355 = vmatpush.msra.mxu0 %v217
      %356 = vmatpush.msra.mxu0 %v216
      %357 = vmatpush.msra.mxu0 %v215
      %358 = vmatpush.msra.mxu0 %v214
      %359 = vmatpush.msra.mxu0 %v213
      %360 = vmatpush.msra.mxu0 %v212
      %361 = vmatpush.msra.mxu0 %v211
      %362 = vmatpush.msra.mxu0 %v210
      %363 = vmatpush.msra.mxu0 %v209
      %364 = vmatpush.msra.mxu0 %v208
      %365 = vmatpush.msra.mxu0 %v207
      %366 = vmatpush.msra.mxu0 %v206
      %367 = vmatpush.msra.mxu0 %v205
      %368 = vmatpush.msra.mxu0 %v204
      %369 = vmatpush.msra.mxu0 %v203
      %370 = vmatmul.f32.gmra.mxu0 %v261
      %v371 = vpop.f32.mrf.mxu0
      %v372 = vadd.f32 %v343, %v371
      %373 = vmatmul.f32.gmra.mxu0 %v267
      %v374 = vpop.f32.mrf.mxu0
      %v375 = vadd.f32 %v346, %v374
      %376 = vmatmul.f32.gmra.mxu0 %v273
      %v377 = vpop.f32.mrf.mxu0
      %v378 = vadd.f32 %v349, %v377
      %379 = vmatmul.f32.gmra.mxu0 %v279
      %v380 = vpop.f32.mrf.mxu0
      %v381 = vadd.f32 %v352, %v380
      %382 = vdwg.mxu0
      %383 = vmatpush.msra.mxu0 %v234
      %384 = vmatpush.msra.mxu0 %v233
      %385 = vmatpush.msra.mxu0 %v232
      %386 = vmatpush.msra.mxu0 %v231
      %387 = vmatpush.msra.mxu0 %v230
      %388 = vmatpush.msra.mxu0 %v229
      %389 = vmatpush.msra.mxu0 %v228
      %390 = vmatpush.msra.mxu0 %v227
      %391 = vmatpush.msra.mxu0 %v226
      %392 = vmatpush.msra.mxu0 %v225
      %393 = vmatpush.msra.mxu0 %v224
      %394 = vmatpush.msra.mxu0 %v223
      %395 = vmatpush.msra.mxu0 %v222
      %396 = vmatpush.msra.mxu0 %v221
      %397 = vmatpush.msra.mxu0 %v220
      %398 = vmatpush.msra.mxu0 %v219
      %399 = vmatmul.f32.gmra.mxu0 %v262
      %v400 = vpop.f32.mrf.mxu0
      %v401 = vadd.f32 %v372, %v400
      %402 = vmatmul.f32.gmra.mxu0 %v268
      %v403 = vpop.f32.mrf.mxu0
      %v404 = vadd.f32 %v375, %v403
      %405 = vmatmul.f32.gmra.mxu0 %v274
      %v406 = vpop.f32.mrf.mxu0
      %v407 = vadd.f32 %v378, %v406
      %408 = vmatmul.f32.gmra.mxu0 %v280
      %v409 = vpop.f32.mrf.mxu0
      %v410 = vadd.f32 %v381, %v409
      %411 = vdwg.mxu0
      %412 = vmatpush.msra.mxu0 %v250
      %413 = vmatpush.msra.mxu0 %v249
      %414 = vmatpush.msra.mxu0 %v248
      %415 = vmatpush.msra.mxu0 %v247
      %416 = vmatpush.msra.mxu0 %v246
      %417 = vmatpush.msra.mxu0 %v245
      %418 = vmatpush.msra.mxu0 %v244
      %419 = vmatpush.msra.mxu0 %v243
      %420 = vmatpush.msra.mxu0 %v242
      %421 = vmatpush.msra.mxu0 %v241
      %422 = vmatpush.msra.mxu0 %v240
      %423 = vmatpush.msra.mxu0 %v239
      %424 = vmatpush.msra.mxu0 %v238
      %425 = vmatpush.msra.mxu0 %v237
      %426 = vmatpush.msra.mxu0 %v236
      %427 = vmatpush.msra.mxu0 %v235
      %428 = vmatmul.f32.gmra.mxu0 %v263
      %v429 = vpop.f32.mrf.mxu0
      %v430 = vadd.f32 %v401, %v429
      %431 = vmatmul.f32.gmra.mxu0 %v269
      %v432 = vpop.f32.mrf.mxu0
      %v433 = vadd.f32 %v404, %v432
      %434 = vmatmul.f32.gmra.mxu0 %v275
      %v435 = vpop.f32.mrf.mxu0
      %v436 = vadd.f32 %v407, %v435
      %437 = vmatmul.f32.gmra.mxu0 %v281
      %v438 = vpop.f32.mrf.mxu0
      %v439 = vadd.f32 %v410, %v438
      %440 = vdwg.mxu0
      %441 = vmatpush.msra.mxu0 0.0
      %442 = vmatpush.msra.mxu0 0.0
      %443 = vmatpush.msra.mxu0 0.0
      %444 = vmatpush.msra.mxu0 0.0
      %445 = vmatpush.msra.mxu0 0.0
      %446 = vmatpush.msra.mxu0 0.0
      %447 = vmatpush.msra.mxu0 0.0
      %448 = vmatpush.msra.mxu0 0.0
      %449 = vmatpush.msra.mxu0 %v258
      %450 = vmatpush.msra.mxu0 %v257
      %451 = vmatpush.msra.mxu0 %v256
      %452 = vmatpush.msra.mxu0 %v255
      %453 = vmatpush.msra.mxu0 %v254
      %454 = vmatpush.msra.mxu0 %v253
      %455 = vmatpush.msra.mxu0 %v252
      %456 = vmatpush.msra.mxu0 %v251
      %457 = vmatmul.f32.gmra.mxu0 %v285
      %v458 = vpop.f32.mrf.mxu0
      %v459 = vadd.f32 %v430, %v458
      %460 = vmatmul.f32.gmra.mxu0 %v288
      %v461 = vpop.f32.mrf.mxu0
      %v462 = vadd.f32 %v433, %v461
      %463 = vmatmul.f32.gmra.mxu0 %v291
      %v464 = vpop.f32.mrf.mxu0
      %v465 = vadd.f32 %v436, %v464
      %466 = vmatmul.f32.gmra.mxu0 %v294
      %v467 = vpop.f32.mrf.mxu0
      %v468 = vadd.f32 %v439, %v467
      %469 = vdwg.mxu0
      %s470 = scalar_lea.vmem %s165, 192
      %v471 = vld [vmem:[%s470] sm:$0xff]
      %v472 = vld [vmem:[%s470 + $0x8] sm:$0xff]
      %v473 = vld [vmem:[%s470 + $0x10] sm:$0xff]
      %v474 = vld [vmem:[%s470 + $0x18] sm:$0xff]
      %v475 = vld [vmem:[%s470 + $0x20] sm:$0xff]
      %v476 = vld [vmem:[%s470 + $0x28] sm:$0xff]
      %v477 = vld [vmem:[%s470 + $0x30] sm:$0xff]
      %v478 = vld [vmem:[%s470 + $0x38] sm:$0xff]
      %v479 = vld [vmem:[%s470 + $0x40] sm:$0xff]
      %v480 = vld [vmem:[%s470 + $0x48] sm:$0xff]
      %v481 = vld [vmem:[%s470 + $0x50] sm:$0xff]
      %v482 = vld [vmem:[%s470 + $0x58] sm:$0xff]
      %v483 = vld [vmem:[%s470 + $0x60] sm:$0xff]
      %v484 = vld [vmem:[%s470 + $0x68] sm:$0xff]
      %v485 = vld [vmem:[%s470 + $0x70] sm:$0xff]
      %v486 = vld [vmem:[%s470 + $0x78] sm:$0xff]
      %v487 = vld [vmem:[%s470 + $0x80] sm:$0xff]
      %v488 = vld [vmem:[%s470 + $0x88] sm:$0xff]
      %v489 = vld [vmem:[%s470 + $0x90] sm:$0x3f]
      %v490 = vld [vmem:[%s470 + $0x98] sm:$0x3f]
      %v491 = vld [vmem:[%s470 + $0xa0] sm:$0x3f]
      %v492 = vld [vmem:[%s470 + $0xa8] sm:$0x3f]
      %v493 = vld [vmem:[%s470 + $0xb0] sm:$0x3f]
      %v494 = vld [vmem:[%s470 + $0xb8] sm:$0x3f]
      %v496 = vsel %vm283, %v476, 0
      %v499 = vsel %vm283, %v482, 0
      %v502 = vsel %vm283, %v488, 0
      %v505 = vsel %vm283, %v494, 0
      %507 = vmatpush.msra.mxu0 %v186
      %508 = vmatpush.msra.mxu0 %v185
      %509 = vmatpush.msra.mxu0 %v184
      %510 = vmatpush.msra.mxu0 %v183
      %511 = vmatpush.msra.mxu0 %v182
      %512 = vmatpush.msra.mxu0 %v181
      %513 = vmatpush.msra.mxu0 %v180
      %514 = vmatpush.msra.mxu0 %v179
      %515 = vmatpush.msra.mxu0 %v178
      %516 = vmatpush.msra.mxu0 %v177
      %517 = vmatpush.msra.mxu0 %v176
      %518 = vmatpush.msra.mxu0 %v175
      %519 = vmatpush.msra.mxu0 %v174
      %520 = vmatpush.msra.mxu0 %v173
      %521 = vmatpush.msra.mxu0 %v172
      %522 = vmatpush.msra.mxu0 %v171
      %523 = vmatmul.f32.gmra.mxu0 %v471
      %v524 = vpop.f32.mrf.mxu0
      %v525 = vadd.f32 0.0, %v524
      %526 = vmatmul.f32.gmra.mxu0 %v477
      %v527 = vpop.f32.mrf.mxu0
      %v528 = vadd.f32 0.0, %v527
      %529 = vmatmul.f32.gmra.mxu0 %v483
      %v530 = vpop.f32.mrf.mxu0
      %v531 = vadd.f32 0.0, %v530
      %532 = vmatmul.f32.gmra.mxu0 %v489
      %v533 = vpop.f32.mrf.mxu0
      %v534 = vadd.f32 0.0, %v533
      %535 = vdwg.mxu0
      %536 = vmatpush.msra.mxu0 %v202
      %537 = vmatpush.msra.mxu0 %v201
      %538 = vmatpush.msra.mxu0 %v200
      %539 = vmatpush.msra.mxu0 %v199
      %540 = vmatpush.msra.mxu0 %v198
      %541 = vmatpush.msra.mxu0 %v197
      %542 = vmatpush.msra.mxu0 %v196
      %543 = vmatpush.msra.mxu0 %v195
      %544 = vmatpush.msra.mxu0 %v194
      %545 = vmatpush.msra.mxu0 %v193
      %546 = vmatpush.msra.mxu0 %v192
      %547 = vmatpush.msra.mxu0 %v191
      %548 = vmatpush.msra.mxu0 %v190
      %549 = vmatpush.msra.mxu0 %v189
      %550 = vmatpush.msra.mxu0 %v188
      %551 = vmatpush.msra.mxu0 %v187
      %552 = vmatmul.f32.gmra.mxu0 %v472
      %v553 = vpop.f32.mrf.mxu0
      %v554 = vadd.f32 %v525, %v553
      %555 = vmatmul.f32.gmra.mxu0 %v478
      %v556 = vpop.f32.mrf.mxu0
      %v557 = vadd.f32 %v528, %v556
      %558 = vmatmul.f32.gmra.mxu0 %v484
      %v559 = vpop.f32.mrf.mxu0
      %v560 = vadd.f32 %v531, %v559
      %561 = vmatmul.f32.gmra.mxu0 %v490
      %v562 = vpop.f32.mrf.mxu0
      %v563 = vadd.f32 %v534, %v562
      %564 = vdwg.mxu0
      %565 = vmatpush.msra.mxu0 %v218
      %566 = vmatpush.msra.mxu0 %v217
      %567 = vmatpush.msra.mxu0 %v216
      %568 = vmatpush.msra.mxu0 %v215
      %569 = vmatpush.msra.mxu0 %v214
      %570 = vmatpush.msra.mxu0 %v213
      %571 = vmatpush.msra.mxu0 %v212
      %572 = vmatpush.msra.mxu0 %v211
      %573 = vmatpush.msra.mxu0 %v210
      %574 = vmatpush.msra.mxu0 %v209
      %575 = vmatpush.msra.mxu0 %v208
      %576 = vmatpush.msra.mxu0 %v207
      %577 = vmatpush.msra.mxu0 %v206
      %578 = vmatpush.msra.mxu0 %v205
      %579 = vmatpush.msra.mxu0 %v204
      %580 = vmatpush.msra.mxu0 %v203
      %581 = vmatmul.f32.gmra.mxu0 %v473
      %v582 = vpop.f32.mrf.mxu0
      %v583 = vadd.f32 %v554, %v582
      %584 = vmatmul.f32.gmra.mxu0 %v479
      %v585 = vpop.f32.mrf.mxu0
      %v586 = vadd.f32 %v557, %v585
      %587 = vmatmul.f32.gmra.mxu0 %v485
      %v588 = vpop.f32.mrf.mxu0
      %v589 = vadd.f32 %v560, %v588
      %590 = vmatmul.f32.gmra.mxu0 %v491
      %v591 = vpop.f32.mrf.mxu0
      %v592 = vadd.f32 %v563, %v591
      %593 = vdwg.mxu0
      %594 = vmatpush.msra.mxu0 %v234
      %595 = vmatpush.msra.mxu0 %v233
      %596 = vmatpush.msra.mxu0 %v232
      %597 = vmatpush.msra.mxu0 %v231
      %598 = vmatpush.msra.mxu0 %v230
      %599 = vmatpush.msra.mxu0 %v229
      %600 = vmatpush.msra.mxu0 %v228
      %601 = vmatpush.msra.mxu0 %v227
      %602 = vmatpush.msra.mxu0 %v226
      %603 = vmatpush.msra.mxu0 %v225
      %604 = vmatpush.msra.mxu0 %v224
      %605 = vmatpush.msra.mxu0 %v223
      %606 = vmatpush.msra.mxu0 %v222
      %607 = vmatpush.msra.mxu0 %v221
      %608 = vmatpush.msra.mxu0 %v220
      %609 = vmatpush.msra.mxu0 %v219
      %610 = vmatmul.f32.gmra.mxu0 %v474
      %v611 = vpop.f32.mrf.mxu0
      %v612 = vadd.f32 %v583, %v611
      %613 = vmatmul.f32.gmra.mxu0 %v480
      %v614 = vpop.f32.mrf.mxu0
      %v615 = vadd.f32 %v586, %v614
      %616 = vmatmul.f32.gmra.mxu0 %v486
      %v617 = vpop.f32.mrf.mxu0
      %v618 = vadd.f32 %v589, %v617
      %619 = vmatmul.f32.gmra.mxu0 %v492
      %v620 = vpop.f32.mrf.mxu0
      %v621 = vadd.f32 %v592, %v620
      %622 = vdwg.mxu0
      %623 = vmatpush.msra.mxu0 %v250
      %624 = vmatpush.msra.mxu0 %v249
      %625 = vmatpush.msra.mxu0 %v248
      %626 = vmatpush.msra.mxu0 %v247
      %627 = vmatpush.msra.mxu0 %v246
      %628 = vmatpush.msra.mxu0 %v245
      %629 = vmatpush.msra.mxu0 %v244
      %630 = vmatpush.msra.mxu0 %v243
      %631 = vmatpush.msra.mxu0 %v242
      %632 = vmatpush.msra.mxu0 %v241
      %633 = vmatpush.msra.mxu0 %v240
      %634 = vmatpush.msra.mxu0 %v239
      %635 = vmatpush.msra.mxu0 %v238
      %636 = vmatpush.msra.mxu0 %v237
      %637 = vmatpush.msra.mxu0 %v236
      %638 = vmatpush.msra.mxu0 %v235
      %639 = vmatmul.f32.gmra.mxu0 %v475
      %v640 = vpop.f32.mrf.mxu0
      %v641 = vadd.f32 %v612, %v640
      %642 = vmatmul.f32.gmra.mxu0 %v481
      %v643 = vpop.f32.mrf.mxu0
      %v644 = vadd.f32 %v615, %v643
      %645 = vmatmul.f32.gmra.mxu0 %v487
      %v646 = vpop.f32.mrf.mxu0
      %v647 = vadd.f32 %v618, %v646
      %648 = vmatmul.f32.gmra.mxu0 %v493
      %v649 = vpop.f32.mrf.mxu0
      %v650 = vadd.f32 %v621, %v649
      %651 = vdwg.mxu0
      %652 = vmatpush.msra.mxu0 0.0
      %653 = vmatpush.msra.mxu0 0.0
      %654 = vmatpush.msra.mxu0 0.0
      %655 = vmatpush.msra.mxu0 0.0
      %656 = vmatpush.msra.mxu0 0.0
      %657 = vmatpush.msra.mxu0 0.0
      %658 = vmatpush.msra.mxu0 0.0
      %659 = vmatpush.msra.mxu0 0.0
      %660 = vmatpush.msra.mxu0 %v258
      %661 = vmatpush.msra.mxu0 %v257
      %662 = vmatpush.msra.mxu0 %v256
      %663 = vmatpush.msra.mxu0 %v255
      %664 = vmatpush.msra.mxu0 %v254
      %665 = vmatpush.msra.mxu0 %v253
      %666 = vmatpush.msra.mxu0 %v252
      %667 = vmatpush.msra.mxu0 %v251
      %668 = vmatmul.f32.gmra.mxu0 %v496
      %v669 = vpop.f32.mrf.mxu0
      %v670 = vadd.f32 %v641, %v669
      %671 = vmatmul.f32.gmra.mxu0 %v499
      %v672 = vpop.f32.mrf.mxu0
      %v673 = vadd.f32 %v644, %v672
      %674 = vmatmul.f32.gmra.mxu0 %v502
      %v675 = vpop.f32.mrf.mxu0
      %v676 = vadd.f32 %v647, %v675
      %677 = vmatmul.f32.gmra.mxu0 %v505
      %v678 = vpop.f32.mrf.mxu0
      %v679 = vadd.f32 %v650, %v678
      %680 = vdwg.mxu0
      %v681 = vmax.f32 %v459, %v670
      %v682 = vmax.f32 %v462, %v673
      %v683 = vmax.f32 %v465, %v676
      %v684 = vmax.f32 %v468, %v679
      %s685 = scalar_lea.vmem %s165, 384
      %v686 = vld [vmem:[%s685] sm:$0xff]
      %v687 = vld [vmem:[%s685 + $0x8] sm:$0xff]
      %v688 = vld [vmem:[%s685 + $0x10] sm:$0xff]
      %v689 = vld [vmem:[%s685 + $0x18] sm:$0xff]
      %v690 = vld [vmem:[%s685 + $0x20] sm:$0xff]
      %v691 = vld [vmem:[%s685 + $0x28] sm:$0xff]
      %v692 = vld [vmem:[%s685 + $0x30] sm:$0xff]
      %v693 = vld [vmem:[%s685 + $0x38] sm:$0xff]
      %v694 = vld [vmem:[%s685 + $0x40] sm:$0xff]
      %v695 = vld [vmem:[%s685 + $0x48] sm:$0xff]
      %v696 = vld [vmem:[%s685 + $0x50] sm:$0xff]
      %v697 = vld [vmem:[%s685 + $0x58] sm:$0xff]
      %v698 = vld [vmem:[%s685 + $0x60] sm:$0xff]
      %v699 = vld [vmem:[%s685 + $0x68] sm:$0xff]
      %v700 = vld [vmem:[%s685 + $0x70] sm:$0xff]
      %v701 = vld [vmem:[%s685 + $0x78] sm:$0xff]
      %v702 = vld [vmem:[%s685 + $0x80] sm:$0xff]
      %v703 = vld [vmem:[%s685 + $0x88] sm:$0xff]
      %v704 = vld [vmem:[%s685 + $0x90] sm:$0x3f]
      %v705 = vld [vmem:[%s685 + $0x98] sm:$0x3f]
      %v706 = vld [vmem:[%s685 + $0xa0] sm:$0x3f]
      %v707 = vld [vmem:[%s685 + $0xa8] sm:$0x3f]
      %v708 = vld [vmem:[%s685 + $0xb0] sm:$0x3f]
      %v709 = vld [vmem:[%s685 + $0xb8] sm:$0x3f]
      %v711 = vsel %vm283, %v691, 0
      %v714 = vsel %vm283, %v697, 0
      %v717 = vsel %vm283, %v703, 0
      %v720 = vsel %vm283, %v709, 0
      %722 = vmatpush.msra.mxu0 %v186
      %723 = vmatpush.msra.mxu0 %v185
      %724 = vmatpush.msra.mxu0 %v184
      %725 = vmatpush.msra.mxu0 %v183
      %726 = vmatpush.msra.mxu0 %v182
      %727 = vmatpush.msra.mxu0 %v181
      %728 = vmatpush.msra.mxu0 %v180
      %729 = vmatpush.msra.mxu0 %v179
      %730 = vmatpush.msra.mxu0 %v178
      %731 = vmatpush.msra.mxu0 %v177
      %732 = vmatpush.msra.mxu0 %v176
      %733 = vmatpush.msra.mxu0 %v175
      %734 = vmatpush.msra.mxu0 %v174
      %735 = vmatpush.msra.mxu0 %v173
      %736 = vmatpush.msra.mxu0 %v172
      %737 = vmatpush.msra.mxu0 %v171
      %738 = vmatmul.f32.gmra.mxu0 %v686
      %v739 = vpop.f32.mrf.mxu0
      %v740 = vadd.f32 0.0, %v739
      %741 = vmatmul.f32.gmra.mxu0 %v692
      %v742 = vpop.f32.mrf.mxu0
      %v743 = vadd.f32 0.0, %v742
      %744 = vmatmul.f32.gmra.mxu0 %v698
      %v745 = vpop.f32.mrf.mxu0
      %v746 = vadd.f32 0.0, %v745
      %747 = vmatmul.f32.gmra.mxu0 %v704
      %v748 = vpop.f32.mrf.mxu0
      %v749 = vadd.f32 0.0, %v748
      %750 = vdwg.mxu0
      %751 = vmatpush.msra.mxu0 %v202
      %752 = vmatpush.msra.mxu0 %v201
      %753 = vmatpush.msra.mxu0 %v200
      %754 = vmatpush.msra.mxu0 %v199
      %755 = vmatpush.msra.mxu0 %v198
      %756 = vmatpush.msra.mxu0 %v197
      %757 = vmatpush.msra.mxu0 %v196
      %758 = vmatpush.msra.mxu0 %v195
      %759 = vmatpush.msra.mxu0 %v194
      %760 = vmatpush.msra.mxu0 %v193
      %761 = vmatpush.msra.mxu0 %v192
      %762 = vmatpush.msra.mxu0 %v191
      %763 = vmatpush.msra.mxu0 %v190
      %764 = vmatpush.msra.mxu0 %v189
      %765 = vmatpush.msra.mxu0 %v188
      %766 = vmatpush.msra.mxu0 %v187
      %767 = vmatmul.f32.gmra.mxu0 %v687
      %v768 = vpop.f32.mrf.mxu0
      %v769 = vadd.f32 %v740, %v768
      %770 = vmatmul.f32.gmra.mxu0 %v693
      %v771 = vpop.f32.mrf.mxu0
      %v772 = vadd.f32 %v743, %v771
      %773 = vmatmul.f32.gmra.mxu0 %v699
      %v774 = vpop.f32.mrf.mxu0
      %v775 = vadd.f32 %v746, %v774
      %776 = vmatmul.f32.gmra.mxu0 %v705
      %v777 = vpop.f32.mrf.mxu0
      %v778 = vadd.f32 %v749, %v777
      %779 = vdwg.mxu0
      %780 = vmatpush.msra.mxu0 %v218
      %781 = vmatpush.msra.mxu0 %v217
      %782 = vmatpush.msra.mxu0 %v216
      %783 = vmatpush.msra.mxu0 %v215
      %784 = vmatpush.msra.mxu0 %v214
      %785 = vmatpush.msra.mxu0 %v213
      %786 = vmatpush.msra.mxu0 %v212
      %787 = vmatpush.msra.mxu0 %v211
      %788 = vmatpush.msra.mxu0 %v210
      %789 = vmatpush.msra.mxu0 %v209
      %790 = vmatpush.msra.mxu0 %v208
      %791 = vmatpush.msra.mxu0 %v207
      %792 = vmatpush.msra.mxu0 %v206
      %793 = vmatpush.msra.mxu0 %v205
      %794 = vmatpush.msra.mxu0 %v204
      %795 = vmatpush.msra.mxu0 %v203
      %796 = vmatmul.f32.gmra.mxu0 %v688
      %v797 = vpop.f32.mrf.mxu0
      %v798 = vadd.f32 %v769, %v797
      %799 = vmatmul.f32.gmra.mxu0 %v694
      %v800 = vpop.f32.mrf.mxu0
      %v801 = vadd.f32 %v772, %v800
      %802 = vmatmul.f32.gmra.mxu0 %v700
      %v803 = vpop.f32.mrf.mxu0
      %v804 = vadd.f32 %v775, %v803
      %805 = vmatmul.f32.gmra.mxu0 %v706
      %v806 = vpop.f32.mrf.mxu0
      %v807 = vadd.f32 %v778, %v806
      %808 = vdwg.mxu0
      %809 = vmatpush.msra.mxu0 %v234
      %810 = vmatpush.msra.mxu0 %v233
      %811 = vmatpush.msra.mxu0 %v232
      %812 = vmatpush.msra.mxu0 %v231
      %813 = vmatpush.msra.mxu0 %v230
      %814 = vmatpush.msra.mxu0 %v229
      %815 = vmatpush.msra.mxu0 %v228
      %816 = vmatpush.msra.mxu0 %v227
      %817 = vmatpush.msra.mxu0 %v226
      %818 = vmatpush.msra.mxu0 %v225
      %819 = vmatpush.msra.mxu0 %v224
      %820 = vmatpush.msra.mxu0 %v223
      %821 = vmatpush.msra.mxu0 %v222
      %822 = vmatpush.msra.mxu0 %v221
      %823 = vmatpush.msra.mxu0 %v220
      %824 = vmatpush.msra.mxu0 %v219
      %825 = vmatmul.f32.gmra.mxu0 %v689
      %v826 = vpop.f32.mrf.mxu0
      %v827 = vadd.f32 %v798, %v826
      %828 = vmatmul.f32.gmra.mxu0 %v695
      %v829 = vpop.f32.mrf.mxu0
      %v830 = vadd.f32 %v801, %v829
      %831 = vmatmul.f32.gmra.mxu0 %v701
      %v832 = vpop.f32.mrf.mxu0
      %v833 = vadd.f32 %v804, %v832
      %834 = vmatmul.f32.gmra.mxu0 %v707
      %v835 = vpop.f32.mrf.mxu0
      %v836 = vadd.f32 %v807, %v835
      %837 = vdwg.mxu0
      %838 = vmatpush.msra.mxu0 %v250
      %839 = vmatpush.msra.mxu0 %v249
      %840 = vmatpush.msra.mxu0 %v248
      %841 = vmatpush.msra.mxu0 %v247
      %842 = vmatpush.msra.mxu0 %v246
      %843 = vmatpush.msra.mxu0 %v245
      %844 = vmatpush.msra.mxu0 %v244
      %845 = vmatpush.msra.mxu0 %v243
      %846 = vmatpush.msra.mxu0 %v242
      %847 = vmatpush.msra.mxu0 %v241
      %848 = vmatpush.msra.mxu0 %v240
      %849 = vmatpush.msra.mxu0 %v239
      %850 = vmatpush.msra.mxu0 %v238
      %851 = vmatpush.msra.mxu0 %v237
      %852 = vmatpush.msra.mxu0 %v236
      %853 = vmatpush.msra.mxu0 %v235
      %854 = vmatmul.f32.gmra.mxu0 %v690
      %v855 = vpop.f32.mrf.mxu0
      %v856 = vadd.f32 %v827, %v855
      %857 = vmatmul.f32.gmra.mxu0 %v696
      %v858 = vpop.f32.mrf.mxu0
      %v859 = vadd.f32 %v830, %v858
      %860 = vmatmul.f32.gmra.mxu0 %v702
      %v861 = vpop.f32.mrf.mxu0
      %v862 = vadd.f32 %v833, %v861
      %863 = vmatmul.f32.gmra.mxu0 %v708
      %v864 = vpop.f32.mrf.mxu0
      %v865 = vadd.f32 %v836, %v864
      %866 = vdwg.mxu0
      %867 = vmatpush.msra.mxu0 0.0
      %868 = vmatpush.msra.mxu0 0.0
      %869 = vmatpush.msra.mxu0 0.0
      %870 = vmatpush.msra.mxu0 0.0
      %871 = vmatpush.msra.mxu0 0.0
      %872 = vmatpush.msra.mxu0 0.0
      %873 = vmatpush.msra.mxu0 0.0
      %874 = vmatpush.msra.mxu0 0.0
      %875 = vmatpush.msra.mxu0 %v258
      %876 = vmatpush.msra.mxu0 %v257
      %877 = vmatpush.msra.mxu0 %v256
      %878 = vmatpush.msra.mxu0 %v255
      %879 = vmatpush.msra.mxu0 %v254
      %880 = vmatpush.msra.mxu0 %v253
      %881 = vmatpush.msra.mxu0 %v252
      %882 = vmatpush.msra.mxu0 %v251
      %883 = vmatmul.f32.gmra.mxu0 %v711
      %v884 = vpop.f32.mrf.mxu0
      %v885 = vadd.f32 %v856, %v884
      %886 = vmatmul.f32.gmra.mxu0 %v714
      %v887 = vpop.f32.mrf.mxu0
      %v888 = vadd.f32 %v859, %v887
      %889 = vmatmul.f32.gmra.mxu0 %v717
      %v890 = vpop.f32.mrf.mxu0
      %v891 = vadd.f32 %v862, %v890
      %892 = vmatmul.f32.gmra.mxu0 %v720
      %v893 = vpop.f32.mrf.mxu0
      %v894 = vadd.f32 %v865, %v893
      %895 = vdwg.mxu0
      %v896 = vmax.f32 %v681, %v885
      %v897 = vmax.f32 %v682, %v888
      %v898 = vmax.f32 %v683, %v891
      %v899 = vmax.f32 %v684, %v894
      %s900 = scalar_lea.vmem %s165, 576
      %v901 = vld [vmem:[%s900] sm:$0xff]
      %v902 = vld [vmem:[%s900 + $0x8] sm:$0xff]
      %v903 = vld [vmem:[%s900 + $0x10] sm:$0xff]
      %v904 = vld [vmem:[%s900 + $0x18] sm:$0xff]
      %v905 = vld [vmem:[%s900 + $0x20] sm:$0xff]
      %v906 = vld [vmem:[%s900 + $0x28] sm:$0xff]
      %v907 = vld [vmem:[%s900 + $0x30] sm:$0xff]
      %v908 = vld [vmem:[%s900 + $0x38] sm:$0xff]
      %v909 = vld [vmem:[%s900 + $0x40] sm:$0xff]
      %v910 = vld [vmem:[%s900 + $0x48] sm:$0xff]
      %v911 = vld [vmem:[%s900 + $0x50] sm:$0xff]
      %v912 = vld [vmem:[%s900 + $0x58] sm:$0xff]
      %v913 = vld [vmem:[%s900 + $0x60] sm:$0xff]
      %v914 = vld [vmem:[%s900 + $0x68] sm:$0xff]
      %v915 = vld [vmem:[%s900 + $0x70] sm:$0xff]
      %v916 = vld [vmem:[%s900 + $0x78] sm:$0xff]
      %v917 = vld [vmem:[%s900 + $0x80] sm:$0xff]
      %v918 = vld [vmem:[%s900 + $0x88] sm:$0xff]
      %v919 = vld [vmem:[%s900 + $0x90] sm:$0x3f]
      %v920 = vld [vmem:[%s900 + $0x98] sm:$0x3f]
      %v921 = vld [vmem:[%s900 + $0xa0] sm:$0x3f]
      %v922 = vld [vmem:[%s900 + $0xa8] sm:$0x3f]
      %v923 = vld [vmem:[%s900 + $0xb0] sm:$0x3f]
      %v924 = vld [vmem:[%s900 + $0xb8] sm:$0x3f]
      %v926 = vsel %vm283, %v906, 0
      %v929 = vsel %vm283, %v912, 0
      %v932 = vsel %vm283, %v918, 0
      %v935 = vsel %vm283, %v924, 0
      %937 = vmatpush.msra.mxu0 %v186
      %938 = vmatpush.msra.mxu0 %v185
      %939 = vmatpush.msra.mxu0 %v184
      %940 = vmatpush.msra.mxu0 %v183
      %941 = vmatpush.msra.mxu0 %v182
      %942 = vmatpush.msra.mxu0 %v181
      %943 = vmatpush.msra.mxu0 %v180
      %944 = vmatpush.msra.mxu0 %v179
      %945 = vmatpush.msra.mxu0 %v178
      %946 = vmatpush.msra.mxu0 %v177
      %947 = vmatpush.msra.mxu0 %v176
      %948 = vmatpush.msra.mxu0 %v175
      %949 = vmatpush.msra.mxu0 %v174
      %950 = vmatpush.msra.mxu0 %v173
      %951 = vmatpush.msra.mxu0 %v172
      %952 = vmatpush.msra.mxu0 %v171
      %953 = vmatmul.f32.gmra.mxu0 %v901
      %v954 = vpop.f32.mrf.mxu0
      %v955 = vadd.f32 0.0, %v954
      %956 = vmatmul.f32.gmra.mxu0 %v907
      %v957 = vpop.f32.mrf.mxu0
      %v958 = vadd.f32 0.0, %v957
      %959 = vmatmul.f32.gmra.mxu0 %v913
      %v960 = vpop.f32.mrf.mxu0
      %v961 = vadd.f32 0.0, %v960
      %962 = vmatmul.f32.gmra.mxu0 %v919
      %v963 = vpop.f32.mrf.mxu0
      %v964 = vadd.f32 0.0, %v963
      %965 = vdwg.mxu0
      %966 = vmatpush.msra.mxu0 %v202
      %967 = vmatpush.msra.mxu0 %v201
      %968 = vmatpush.msra.mxu0 %v200
      %969 = vmatpush.msra.mxu0 %v199
      %970 = vmatpush.msra.mxu0 %v198
      %971 = vmatpush.msra.mxu0 %v197
      %972 = vmatpush.msra.mxu0 %v196
      %973 = vmatpush.msra.mxu0 %v195
      %974 = vmatpush.msra.mxu0 %v194
      %975 = vmatpush.msra.mxu0 %v193
      %976 = vmatpush.msra.mxu0 %v192
      %977 = vmatpush.msra.mxu0 %v191
      %978 = vmatpush.msra.mxu0 %v190
      %979 = vmatpush.msra.mxu0 %v189
      %980 = vmatpush.msra.mxu0 %v188
      %981 = vmatpush.msra.mxu0 %v187
      %982 = vmatmul.f32.gmra.mxu0 %v902
      %v983 = vpop.f32.mrf.mxu0
      %v984 = vadd.f32 %v955, %v983
      %985 = vmatmul.f32.gmra.mxu0 %v908
      %v986 = vpop.f32.mrf.mxu0
      %v987 = vadd.f32 %v958, %v986
      %988 = vmatmul.f32.gmra.mxu0 %v914
      %v989 = vpop.f32.mrf.mxu0
      %v990 = vadd.f32 %v961, %v989
      %991 = vmatmul.f32.gmra.mxu0 %v920
      %v992 = vpop.f32.mrf.mxu0
      %v993 = vadd.f32 %v964, %v992
      %994 = vdwg.mxu0
      %995 = vmatpush.msra.mxu0 %v218
      %996 = vmatpush.msra.mxu0 %v217
      %997 = vmatpush.msra.mxu0 %v216
      %998 = vmatpush.msra.mxu0 %v215
      %999 = vmatpush.msra.mxu0 %v214
      %1000 = vmatpush.msra.mxu0 %v213
      %1001 = vmatpush.msra.mxu0 %v212
      %1002 = vmatpush.msra.mxu0 %v211
      %1003 = vmatpush.msra.mxu0 %v210
      %1004 = vmatpush.msra.mxu0 %v209
      %1005 = vmatpush.msra.mxu0 %v208
      %1006 = vmatpush.msra.mxu0 %v207
      %1007 = vmatpush.msra.mxu0 %v206
      %1008 = vmatpush.msra.mxu0 %v205
      %1009 = vmatpush.msra.mxu0 %v204
      %1010 = vmatpush.msra.mxu0 %v203
      %1011 = vmatmul.f32.gmra.mxu0 %v903
      %v1012 = vpop.f32.mrf.mxu0
      %v1013 = vadd.f32 %v984, %v1012
      %1014 = vmatmul.f32.gmra.mxu0 %v909
      %v1015 = vpop.f32.mrf.mxu0
      %v1016 = vadd.f32 %v987, %v1015
      %1017 = vmatmul.f32.gmra.mxu0 %v915
      %v1018 = vpop.f32.mrf.mxu0
      %v1019 = vadd.f32 %v990, %v1018
      %1020 = vmatmul.f32.gmra.mxu0 %v921
      %v1021 = vpop.f32.mrf.mxu0
      %v1022 = vadd.f32 %v993, %v1021
      %1023 = vdwg.mxu0
      %1024 = vmatpush.msra.mxu0 %v234
      %1025 = vmatpush.msra.mxu0 %v233
      %1026 = vmatpush.msra.mxu0 %v232
      %1027 = vmatpush.msra.mxu0 %v231
      %1028 = vmatpush.msra.mxu0 %v230
      %1029 = vmatpush.msra.mxu0 %v229
      %1030 = vmatpush.msra.mxu0 %v228
      %1031 = vmatpush.msra.mxu0 %v227
      %1032 = vmatpush.msra.mxu0 %v226
      %1033 = vmatpush.msra.mxu0 %v225
      %1034 = vmatpush.msra.mxu0 %v224
      %1035 = vmatpush.msra.mxu0 %v223
      %1036 = vmatpush.msra.mxu0 %v222
      %1037 = vmatpush.msra.mxu0 %v221
      %1038 = vmatpush.msra.mxu0 %v220
      %1039 = vmatpush.msra.mxu0 %v219
      %1040 = vmatmul.f32.gmra.mxu0 %v904
      %v1041 = vpop.f32.mrf.mxu0
      %v1042 = vadd.f32 %v1013, %v1041
      %1043 = vmatmul.f32.gmra.mxu0 %v910
      %v1044 = vpop.f32.mrf.mxu0
      %v1045 = vadd.f32 %v1016, %v1044
      %1046 = vmatmul.f32.gmra.mxu0 %v916
      %v1047 = vpop.f32.mrf.mxu0
      %v1048 = vadd.f32 %v1019, %v1047
      %1049 = vmatmul.f32.gmra.mxu0 %v922
      %v1050 = vpop.f32.mrf.mxu0
      %v1051 = vadd.f32 %v1022, %v1050
      %1052 = vdwg.mxu0
      %1053 = vmatpush.msra.mxu0 %v250
      %1054 = vmatpush.msra.mxu0 %v249
      %1055 = vmatpush.msra.mxu0 %v248
      %1056 = vmatpush.msra.mxu0 %v247
      %1057 = vmatpush.msra.mxu0 %v246
      %1058 = vmatpush.msra.mxu0 %v245
      %1059 = vmatpush.msra.mxu0 %v244
      %1060 = vmatpush.msra.mxu0 %v243
      %1061 = vmatpush.msra.mxu0 %v242
      %1062 = vmatpush.msra.mxu0 %v241
      %1063 = vmatpush.msra.mxu0 %v240
      %1064 = vmatpush.msra.mxu0 %v239
      %1065 = vmatpush.msra.mxu0 %v238
      %1066 = vmatpush.msra.mxu0 %v237
      %1067 = vmatpush.msra.mxu0 %v236
      %1068 = vmatpush.msra.mxu0 %v235
      %1069 = vmatmul.f32.gmra.mxu0 %v905
      %v1070 = vpop.f32.mrf.mxu0
      %v1071 = vadd.f32 %v1042, %v1070
      %1072 = vmatmul.f32.gmra.mxu0 %v911
      %v1073 = vpop.f32.mrf.mxu0
      %v1074 = vadd.f32 %v1045, %v1073
      %1075 = vmatmul.f32.gmra.mxu0 %v917
      %v1076 = vpop.f32.mrf.mxu0
      %v1077 = vadd.f32 %v1048, %v1076
      %1078 = vmatmul.f32.gmra.mxu0 %v923
      %v1079 = vpop.f32.mrf.mxu0
      %v1080 = vadd.f32 %v1051, %v1079
      %1081 = vdwg.mxu0
      %1082 = vmatpush.msra.mxu0 0.0
      %1083 = vmatpush.msra.mxu0 0.0
      %1084 = vmatpush.msra.mxu0 0.0
      %1085 = vmatpush.msra.mxu0 0.0
      %1086 = vmatpush.msra.mxu0 0.0
      %1087 = vmatpush.msra.mxu0 0.0
      %1088 = vmatpush.msra.mxu0 0.0
      %1089 = vmatpush.msra.mxu0 0.0
      %1090 = vmatpush.msra.mxu0 %v258
      %1091 = vmatpush.msra.mxu0 %v257
      %1092 = vmatpush.msra.mxu0 %v256
      %1093 = vmatpush.msra.mxu0 %v255
      %1094 = vmatpush.msra.mxu0 %v254
      %1095 = vmatpush.msra.mxu0 %v253
      %1096 = vmatpush.msra.mxu0 %v252
      %1097 = vmatpush.msra.mxu0 %v251
      %1098 = vmatmul.f32.gmra.mxu0 %v926
      %v1099 = vpop.f32.mrf.mxu0
      %v1100 = vadd.f32 %v1071, %v1099
      %1101 = vmatmul.f32.gmra.mxu0 %v929
      %v1102 = vpop.f32.mrf.mxu0
      %v1103 = vadd.f32 %v1074, %v1102
      %1104 = vmatmul.f32.gmra.mxu0 %v932
      %v1105 = vpop.f32.mrf.mxu0
      %v1106 = vadd.f32 %v1077, %v1105
      %1107 = vmatmul.f32.gmra.mxu0 %v935
      %v1108 = vpop.f32.mrf.mxu0
      %v1109 = vadd.f32 %v1080, %v1108
      %1110 = vdwg.mxu0
      %v1111 = vmax.f32 %v896, %v1100
      %v1112 = vmax.f32 %v897, %v1103
      %v1113 = vmax.f32 %v898, %v1106
      %v1114 = vmax.f32 %v899, %v1109
      %s1115 = scalar_lea.vmem %s165, 768
      %v1116 = vld [vmem:[%s1115] sm:$0xff]
      %v1117 = vld [vmem:[%s1115 + $0x8] sm:$0xff]
      %v1118 = vld [vmem:[%s1115 + $0x10] sm:$0xff]
      %v1119 = vld [vmem:[%s1115 + $0x18] sm:$0xff]
      %v1120 = vld [vmem:[%s1115 + $0x20] sm:$0xff]
      %v1121 = vld [vmem:[%s1115 + $0x28] sm:$0xff]
      %v1122 = vld [vmem:[%s1115 + $0x30] sm:$0xff]
      %v1123 = vld [vmem:[%s1115 + $0x38] sm:$0xff]
      %v1124 = vld [vmem:[%s1115 + $0x40] sm:$0xff]
      %v1125 = vld [vmem:[%s1115 + $0x48] sm:$0xff]
      %v1126 = vld [vmem:[%s1115 + $0x50] sm:$0xff]
      %v1127 = vld [vmem:[%s1115 + $0x58] sm:$0xff]
      %v1128 = vld [vmem:[%s1115 + $0x60] sm:$0xff]
      %v1129 = vld [vmem:[%s1115 + $0x68] sm:$0xff]
      %v1130 = vld [vmem:[%s1115 + $0x70] sm:$0xff]
      %v1131 = vld [vmem:[%s1115 + $0x78] sm:$0xff]
      %v1132 = vld [vmem:[%s1115 + $0x80] sm:$0xff]
      %v1133 = vld [vmem:[%s1115 + $0x88] sm:$0xff]
      %v1134 = vld [vmem:[%s1115 + $0x90] sm:$0x3f]
      %v1135 = vld [vmem:[%s1115 + $0x98] sm:$0x3f]
      %v1136 = vld [vmem:[%s1115 + $0xa0] sm:$0x3f]
      %v1137 = vld [vmem:[%s1115 + $0xa8] sm:$0x3f]
      %v1138 = vld [vmem:[%s1115 + $0xb0] sm:$0x3f]
      %v1139 = vld [vmem:[%s1115 + $0xb8] sm:$0x3f]
      %v1141 = vsel %vm283, %v1121, 0
      %v1144 = vsel %vm283, %v1127, 0
      %v1147 = vsel %vm283, %v1133, 0
      %v1150 = vsel %vm283, %v1139, 0
      %1152 = vmatpush.msra.mxu0 %v186
      %1153 = vmatpush.msra.mxu0 %v185
      %1154 = vmatpush.msra.mxu0 %v184
      %1155 = vmatpush.msra.mxu0 %v183
      %1156 = vmatpush.msra.mxu0 %v182
      %1157 = vmatpush.msra.mxu0 %v181
      %1158 = vmatpush.msra.mxu0 %v180
      %1159 = vmatpush.msra.mxu0 %v179
      %1160 = vmatpush.msra.mxu0 %v178
      %1161 = vmatpush.msra.mxu0 %v177
      %1162 = vmatpush.msra.mxu0 %v176
      %1163 = vmatpush.msra.mxu0 %v175
      %1164 = vmatpush.msra.mxu0 %v174
      %1165 = vmatpush.msra.mxu0 %v173
      %1166 = vmatpush.msra.mxu0 %v172
      %1167 = vmatpush.msra.mxu0 %v171
      %1168 = vmatmul.f32.gmra.mxu0 %v1116
      %v1169 = vpop.f32.mrf.mxu0
      %v1170 = vadd.f32 0.0, %v1169
      %1171 = vmatmul.f32.gmra.mxu0 %v1122
      %v1172 = vpop.f32.mrf.mxu0
      %v1173 = vadd.f32 0.0, %v1172
      %1174 = vmatmul.f32.gmra.mxu0 %v1128
      %v1175 = vpop.f32.mrf.mxu0
      %v1176 = vadd.f32 0.0, %v1175
      %1177 = vmatmul.f32.gmra.mxu0 %v1134
      %v1178 = vpop.f32.mrf.mxu0
      %v1179 = vadd.f32 0.0, %v1178
      %1180 = vdwg.mxu0
      %1181 = vmatpush.msra.mxu0 %v202
      %1182 = vmatpush.msra.mxu0 %v201
      %1183 = vmatpush.msra.mxu0 %v200
      %1184 = vmatpush.msra.mxu0 %v199
      %1185 = vmatpush.msra.mxu0 %v198
      %1186 = vmatpush.msra.mxu0 %v197
      %1187 = vmatpush.msra.mxu0 %v196
      %1188 = vmatpush.msra.mxu0 %v195
      %1189 = vmatpush.msra.mxu0 %v194
      %1190 = vmatpush.msra.mxu0 %v193
      %1191 = vmatpush.msra.mxu0 %v192
      %1192 = vmatpush.msra.mxu0 %v191
      %1193 = vmatpush.msra.mxu0 %v190
      %1194 = vmatpush.msra.mxu0 %v189
      %1195 = vmatpush.msra.mxu0 %v188
      %1196 = vmatpush.msra.mxu0 %v187
      %1197 = vmatmul.f32.gmra.mxu0 %v1117
      %v1198 = vpop.f32.mrf.mxu0
      %v1199 = vadd.f32 %v1170, %v1198
      %1200 = vmatmul.f32.gmra.mxu0 %v1123
      %v1201 = vpop.f32.mrf.mxu0
      %v1202 = vadd.f32 %v1173, %v1201
      %1203 = vmatmul.f32.gmra.mxu0 %v1129
      %v1204 = vpop.f32.mrf.mxu0
      %v1205 = vadd.f32 %v1176, %v1204
      %1206 = vmatmul.f32.gmra.mxu0 %v1135
      %v1207 = vpop.f32.mrf.mxu0
      %v1208 = vadd.f32 %v1179, %v1207
      %1209 = vdwg.mxu0
      %1210 = vmatpush.msra.mxu0 %v218
      %1211 = vmatpush.msra.mxu0 %v217
      %1212 = vmatpush.msra.mxu0 %v216
      %1213 = vmatpush.msra.mxu0 %v215
      %1214 = vmatpush.msra.mxu0 %v214
      %1215 = vmatpush.msra.mxu0 %v213
      %1216 = vmatpush.msra.mxu0 %v212
      %1217 = vmatpush.msra.mxu0 %v211
      %1218 = vmatpush.msra.mxu0 %v210
      %1219 = vmatpush.msra.mxu0 %v209
      %1220 = vmatpush.msra.mxu0 %v208
      %1221 = vmatpush.msra.mxu0 %v207
      %1222 = vmatpush.msra.mxu0 %v206
      %1223 = vmatpush.msra.mxu0 %v205
      %1224 = vmatpush.msra.mxu0 %v204
      %1225 = vmatpush.msra.mxu0 %v203
      %1226 = vmatmul.f32.gmra.mxu0 %v1118
      %v1227 = vpop.f32.mrf.mxu0
      %v1228 = vadd.f32 %v1199, %v1227
      %1229 = vmatmul.f32.gmra.mxu0 %v1124
      %v1230 = vpop.f32.mrf.mxu0
      %v1231 = vadd.f32 %v1202, %v1230
      %1232 = vmatmul.f32.gmra.mxu0 %v1130
      %v1233 = vpop.f32.mrf.mxu0
      %v1234 = vadd.f32 %v1205, %v1233
      %1235 = vmatmul.f32.gmra.mxu0 %v1136
      %v1236 = vpop.f32.mrf.mxu0
      %v1237 = vadd.f32 %v1208, %v1236
      %1238 = vdwg.mxu0
      %1239 = vmatpush.msra.mxu0 %v234
      %1240 = vmatpush.msra.mxu0 %v233
      %1241 = vmatpush.msra.mxu0 %v232
      %1242 = vmatpush.msra.mxu0 %v231
      %1243 = vmatpush.msra.mxu0 %v230
      %1244 = vmatpush.msra.mxu0 %v229
      %1245 = vmatpush.msra.mxu0 %v228
      %1246 = vmatpush.msra.mxu0 %v227
      %1247 = vmatpush.msra.mxu0 %v226
      %1248 = vmatpush.msra.mxu0 %v225
      %1249 = vmatpush.msra.mxu0 %v224
      %1250 = vmatpush.msra.mxu0 %v223
      %1251 = vmatpush.msra.mxu0 %v222
      %1252 = vmatpush.msra.mxu0 %v221
      %1253 = vmatpush.msra.mxu0 %v220
      %1254 = vmatpush.msra.mxu0 %v219
      %1255 = vmatmul.f32.gmra.mxu0 %v1119
      %v1256 = vpop.f32.mrf.mxu0
      %v1257 = vadd.f32 %v1228, %v1256
      %1258 = vmatmul.f32.gmra.mxu0 %v1125
      %v1259 = vpop.f32.mrf.mxu0
      %v1260 = vadd.f32 %v1231, %v1259
      %1261 = vmatmul.f32.gmra.mxu0 %v1131
      %v1262 = vpop.f32.mrf.mxu0
      %v1263 = vadd.f32 %v1234, %v1262
      %1264 = vmatmul.f32.gmra.mxu0 %v1137
      %v1265 = vpop.f32.mrf.mxu0
      %v1266 = vadd.f32 %v1237, %v1265
      %1267 = vdwg.mxu0
      %1268 = vmatpush.msra.mxu0 %v250
      %1269 = vmatpush.msra.mxu0 %v249
      %1270 = vmatpush.msra.mxu0 %v248
      %1271 = vmatpush.msra.mxu0 %v247
      %1272 = vmatpush.msra.mxu0 %v246
      %1273 = vmatpush.msra.mxu0 %v245
      %1274 = vmatpush.msra.mxu0 %v244
      %1275 = vmatpush.msra.mxu0 %v243
      %1276 = vmatpush.msra.mxu0 %v242
      %1277 = vmatpush.msra.mxu0 %v241
      %1278 = vmatpush.msra.mxu0 %v240
      %1279 = vmatpush.msra.mxu0 %v239
      %1280 = vmatpush.msra.mxu0 %v238
      %1281 = vmatpush.msra.mxu0 %v237
      %1282 = vmatpush.msra.mxu0 %v236
      %1283 = vmatpush.msra.mxu0 %v235
      %1284 = vmatmul.f32.gmra.mxu0 %v1120
      %v1285 = vpop.f32.mrf.mxu0
      %v1286 = vadd.f32 %v1257, %v1285
      %1287 = vmatmul.f32.gmra.mxu0 %v1126
      %v1288 = vpop.f32.mrf.mxu0
      %v1289 = vadd.f32 %v1260, %v1288
      %1290 = vmatmul.f32.gmra.mxu0 %v1132
      %v1291 = vpop.f32.mrf.mxu0
      %v1292 = vadd.f32 %v1263, %v1291
      %1293 = vmatmul.f32.gmra.mxu0 %v1138
      %v1294 = vpop.f32.mrf.mxu0
      %v1295 = vadd.f32 %v1266, %v1294
      %1296 = vdwg.mxu0
      %1297 = vmatpush.msra.mxu0 0.0
      %1298 = vmatpush.msra.mxu0 0.0
      %1299 = vmatpush.msra.mxu0 0.0
      %1300 = vmatpush.msra.mxu0 0.0
      %1301 = vmatpush.msra.mxu0 0.0
      %1302 = vmatpush.msra.mxu0 0.0
      %1303 = vmatpush.msra.mxu0 0.0
      %1304 = vmatpush.msra.mxu0 0.0
      %1305 = vmatpush.msra.mxu0 %v258
      %1306 = vmatpush.msra.mxu0 %v257
      %1307 = vmatpush.msra.mxu0 %v256
      %1308 = vmatpush.msra.mxu0 %v255
      %1309 = vmatpush.msra.mxu0 %v254
      %1310 = vmatpush.msra.mxu0 %v253
      %1311 = vmatpush.msra.mxu0 %v252
      %1312 = vmatpush.msra.mxu0 %v251
      %1313 = vmatmul.f32.gmra.mxu0 %v1141
      %v1314 = vpop.f32.mrf.mxu0
      %v1315 = vadd.f32 %v1286, %v1314
      %1316 = vmatmul.f32.gmra.mxu0 %v1144
      %v1317 = vpop.f32.mrf.mxu0
      %v1318 = vadd.f32 %v1289, %v1317
      %1319 = vmatmul.f32.gmra.mxu0 %v1147
      %v1320 = vpop.f32.mrf.mxu0
      %v1321 = vadd.f32 %v1292, %v1320
      %1322 = vmatmul.f32.gmra.mxu0 %v1150
      %v1323 = vpop.f32.mrf.mxu0
      %v1324 = vadd.f32 %v1295, %v1323
      %1325 = vdwg.mxu0
      %v1326 = vmax.f32 %v1111, %v1315
      %v1327 = vmax.f32 %v1112, %v1318
      %v1328 = vmax.f32 %v1113, %v1321
      %v1329 = vmax.f32 %v1114, %v1324
      %s1330 = scalar_lea.vmem %s165, 960
      %v1331 = vld [vmem:[%s1330] sm:$0xff]
      %v1332 = vld [vmem:[%s1330 + $0x8] sm:$0xff]
      %v1333 = vld [vmem:[%s1330 + $0x10] sm:$0xff]
      %v1334 = vld [vmem:[%s1330 + $0x18] sm:$0xff]
      %v1335 = vld [vmem:[%s1330 + $0x20] sm:$0xff]
      %v1336 = vld [vmem:[%s1330 + $0x28] sm:$0xff]
      %v1337 = vld [vmem:[%s1330 + $0x30] sm:$0xff]
      %v1338 = vld [vmem:[%s1330 + $0x38] sm:$0xff]
      %v1339 = vld [vmem:[%s1330 + $0x40] sm:$0xff]
      %v1340 = vld [vmem:[%s1330 + $0x48] sm:$0xff]
      %v1341 = vld [vmem:[%s1330 + $0x50] sm:$0xff]
      %v1342 = vld [vmem:[%s1330 + $0x58] sm:$0xff]
      %v1343 = vld [vmem:[%s1330 + $0x60] sm:$0xff]
      %v1344 = vld [vmem:[%s1330 + $0x68] sm:$0xff]
      %v1345 = vld [vmem:[%s1330 + $0x70] sm:$0xff]
      %v1346 = vld [vmem:[%s1330 + $0x78] sm:$0xff]
      %v1347 = vld [vmem:[%s1330 + $0x80] sm:$0xff]
      %v1348 = vld [vmem:[%s1330 + $0x88] sm:$0xff]
      %v1349 = vld [vmem:[%s1330 + $0x90] sm:$0x3f]
      %v1350 = vld [vmem:[%s1330 + $0x98] sm:$0x3f]
      %v1351 = vld [vmem:[%s1330 + $0xa0] sm:$0x3f]
      %v1352 = vld [vmem:[%s1330 + $0xa8] sm:$0x3f]
      %v1353 = vld [vmem:[%s1330 + $0xb0] sm:$0x3f]
      %v1354 = vld [vmem:[%s1330 + $0xb8] sm:$0x3f]
      %v1356 = vsel %vm283, %v1336, 0
      %v1359 = vsel %vm283, %v1342, 0
      %v1362 = vsel %vm283, %v1348, 0
      %v1365 = vsel %vm283, %v1354, 0
      %1367 = vmatpush.msra.mxu0 %v186
      %1368 = vmatpush.msra.mxu0 %v185
      %1369 = vmatpush.msra.mxu0 %v184
      %1370 = vmatpush.msra.mxu0 %v183
      %1371 = vmatpush.msra.mxu0 %v182
      %1372 = vmatpush.msra.mxu0 %v181
      %1373 = vmatpush.msra.mxu0 %v180
      %1374 = vmatpush.msra.mxu0 %v179
      %1375 = vmatpush.msra.mxu0 %v178
      %1376 = vmatpush.msra.mxu0 %v177
      %1377 = vmatpush.msra.mxu0 %v176
      %1378 = vmatpush.msra.mxu0 %v175
      %1379 = vmatpush.msra.mxu0 %v174
      %1380 = vmatpush.msra.mxu0 %v173
      %1381 = vmatpush.msra.mxu0 %v172
      %1382 = vmatpush.msra.mxu0 %v171
      %1383 = vmatmul.f32.gmra.mxu0 %v1331
      %v1384 = vpop.f32.mrf.mxu0
      %v1385 = vadd.f32 0.0, %v1384
      %1386 = vmatmul.f32.gmra.mxu0 %v1337
      %v1387 = vpop.f32.mrf.mxu0
      %v1388 = vadd.f32 0.0, %v1387
      %1389 = vmatmul.f32.gmra.mxu0 %v1343
      %v1390 = vpop.f32.mrf.mxu0
      %v1391 = vadd.f32 0.0, %v1390
      %1392 = vmatmul.f32.gmra.mxu0 %v1349
      %v1393 = vpop.f32.mrf.mxu0
      %v1394 = vadd.f32 0.0, %v1393
      %1395 = vdwg.mxu0
      %1396 = vmatpush.msra.mxu0 %v202
      %1397 = vmatpush.msra.mxu0 %v201
      %1398 = vmatpush.msra.mxu0 %v200
      %1399 = vmatpush.msra.mxu0 %v199
      %1400 = vmatpush.msra.mxu0 %v198
      %1401 = vmatpush.msra.mxu0 %v197
      %1402 = vmatpush.msra.mxu0 %v196
      %1403 = vmatpush.msra.mxu0 %v195
      %1404 = vmatpush.msra.mxu0 %v194
      %1405 = vmatpush.msra.mxu0 %v193
      %1406 = vmatpush.msra.mxu0 %v192
      %1407 = vmatpush.msra.mxu0 %v191
      %1408 = vmatpush.msra.mxu0 %v190
      %1409 = vmatpush.msra.mxu0 %v189
      %1410 = vmatpush.msra.mxu0 %v188
      %1411 = vmatpush.msra.mxu0 %v187
      %1412 = vmatmul.f32.gmra.mxu0 %v1332
      %v1413 = vpop.f32.mrf.mxu0
      %v1414 = vadd.f32 %v1385, %v1413
      %1415 = vmatmul.f32.gmra.mxu0 %v1338
      %v1416 = vpop.f32.mrf.mxu0
      %v1417 = vadd.f32 %v1388, %v1416
      %1418 = vmatmul.f32.gmra.mxu0 %v1344
      %v1419 = vpop.f32.mrf.mxu0
      %v1420 = vadd.f32 %v1391, %v1419
      %1421 = vmatmul.f32.gmra.mxu0 %v1350
      %v1422 = vpop.f32.mrf.mxu0
      %v1423 = vadd.f32 %v1394, %v1422
      %1424 = vdwg.mxu0
      %1425 = vmatpush.msra.mxu0 %v218
      %1426 = vmatpush.msra.mxu0 %v217
      %1427 = vmatpush.msra.mxu0 %v216
      %1428 = vmatpush.msra.mxu0 %v215
      %1429 = vmatpush.msra.mxu0 %v214
      %1430 = vmatpush.msra.mxu0 %v213
      %1431 = vmatpush.msra.mxu0 %v212
      %1432 = vmatpush.msra.mxu0 %v211
      %1433 = vmatpush.msra.mxu0 %v210
      %1434 = vmatpush.msra.mxu0 %v209
      %1435 = vmatpush.msra.mxu0 %v208
      %1436 = vmatpush.msra.mxu0 %v207
      %1437 = vmatpush.msra.mxu0 %v206
      %1438 = vmatpush.msra.mxu0 %v205
      %1439 = vmatpush.msra.mxu0 %v204
      %1440 = vmatpush.msra.mxu0 %v203
      %1441 = vmatmul.f32.gmra.mxu0 %v1333
      %v1442 = vpop.f32.mrf.mxu0
      %v1443 = vadd.f32 %v1414, %v1442
      %1444 = vmatmul.f32.gmra.mxu0 %v1339
      %v1445 = vpop.f32.mrf.mxu0
      %v1446 = vadd.f32 %v1417, %v1445
      %1447 = vmatmul.f32.gmra.mxu0 %v1345
      %v1448 = vpop.f32.mrf.mxu0
      %v1449 = vadd.f32 %v1420, %v1448
      %1450 = vmatmul.f32.gmra.mxu0 %v1351
      %v1451 = vpop.f32.mrf.mxu0
      %v1452 = vadd.f32 %v1423, %v1451
      %1453 = vdwg.mxu0
      %1454 = vmatpush.msra.mxu0 %v234
      %1455 = vmatpush.msra.mxu0 %v233
      %1456 = vmatpush.msra.mxu0 %v232
      %1457 = vmatpush.msra.mxu0 %v231
      %1458 = vmatpush.msra.mxu0 %v230
      %1459 = vmatpush.msra.mxu0 %v229
      %1460 = vmatpush.msra.mxu0 %v228
      %1461 = vmatpush.msra.mxu0 %v227
      %1462 = vmatpush.msra.mxu0 %v226
      %1463 = vmatpush.msra.mxu0 %v225
      %1464 = vmatpush.msra.mxu0 %v224
      %1465 = vmatpush.msra.mxu0 %v223
      %1466 = vmatpush.msra.mxu0 %v222
      %1467 = vmatpush.msra.mxu0 %v221
      %1468 = vmatpush.msra.mxu0 %v220
      %1469 = vmatpush.msra.mxu0 %v219
      %1470 = vmatmul.f32.gmra.mxu0 %v1334
      %v1471 = vpop.f32.mrf.mxu0
      %v1472 = vadd.f32 %v1443, %v1471
      %1473 = vmatmul.f32.gmra.mxu0 %v1340
      %v1474 = vpop.f32.mrf.mxu0
      %v1475 = vadd.f32 %v1446, %v1474
      %1476 = vmatmul.f32.gmra.mxu0 %v1346
      %v1477 = vpop.f32.mrf.mxu0
      %v1478 = vadd.f32 %v1449, %v1477
      %1479 = vmatmul.f32.gmra.mxu0 %v1352
      %v1480 = vpop.f32.mrf.mxu0
      %v1481 = vadd.f32 %v1452, %v1480
      %1482 = vdwg.mxu0
      %1483 = vmatpush.msra.mxu0 %v250
      %1484 = vmatpush.msra.mxu0 %v249
      %1485 = vmatpush.msra.mxu0 %v248
      %1486 = vmatpush.msra.mxu0 %v247
      %1487 = vmatpush.msra.mxu0 %v246
      %1488 = vmatpush.msra.mxu0 %v245
      %1489 = vmatpush.msra.mxu0 %v244
      %1490 = vmatpush.msra.mxu0 %v243
      %1491 = vmatpush.msra.mxu0 %v242
      %1492 = vmatpush.msra.mxu0 %v241
      %1493 = vmatpush.msra.mxu0 %v240
      %1494 = vmatpush.msra.mxu0 %v239
      %1495 = vmatpush.msra.mxu0 %v238
      %1496 = vmatpush.msra.mxu0 %v237
      %1497 = vmatpush.msra.mxu0 %v236
      %1498 = vmatpush.msra.mxu0 %v235
      %1499 = vmatmul.f32.gmra.mxu0 %v1335
      %v1500 = vpop.f32.mrf.mxu0
      %v1501 = vadd.f32 %v1472, %v1500
      %1502 = vmatmul.f32.gmra.mxu0 %v1341
      %v1503 = vpop.f32.mrf.mxu0
      %v1504 = vadd.f32 %v1475, %v1503
      %1505 = vmatmul.f32.gmra.mxu0 %v1347
      %v1506 = vpop.f32.mrf.mxu0
      %v1507 = vadd.f32 %v1478, %v1506
      %1508 = vmatmul.f32.gmra.mxu0 %v1353
      %v1509 = vpop.f32.mrf.mxu0
      %v1510 = vadd.f32 %v1481, %v1509
      %1511 = vdwg.mxu0
      %1512 = vmatpush.msra.mxu0 0.0
      %1513 = vmatpush.msra.mxu0 0.0
      %1514 = vmatpush.msra.mxu0 0.0
      %1515 = vmatpush.msra.mxu0 0.0
      %1516 = vmatpush.msra.mxu0 0.0
      %1517 = vmatpush.msra.mxu0 0.0
      %1518 = vmatpush.msra.mxu0 0.0
      %1519 = vmatpush.msra.mxu0 0.0
      %1520 = vmatpush.msra.mxu0 %v258
      %1521 = vmatpush.msra.mxu0 %v257
      %1522 = vmatpush.msra.mxu0 %v256
      %1523 = vmatpush.msra.mxu0 %v255
      %1524 = vmatpush.msra.mxu0 %v254
      %1525 = vmatpush.msra.mxu0 %v253
      %1526 = vmatpush.msra.mxu0 %v252
      %1527 = vmatpush.msra.mxu0 %v251
      %1528 = vmatmul.f32.gmra.mxu0 %v1356
      %v1529 = vpop.f32.mrf.mxu0
      %v1530 = vadd.f32 %v1501, %v1529
      %1531 = vmatmul.f32.gmra.mxu0 %v1359
      %v1532 = vpop.f32.mrf.mxu0
      %v1533 = vadd.f32 %v1504, %v1532
      %1534 = vmatmul.f32.gmra.mxu0 %v1362
      %v1535 = vpop.f32.mrf.mxu0
      %v1536 = vadd.f32 %v1507, %v1535
      %1537 = vmatmul.f32.gmra.mxu0 %v1365
      %v1538 = vpop.f32.mrf.mxu0
      %v1539 = vadd.f32 %v1510, %v1538
      %1540 = vdwg.mxu0
      %v1541 = vmax.f32 %v1326, %v1530
      %v1542 = vmax.f32 %v1327, %v1533
      %v1543 = vmax.f32 %v1328, %v1536
      %v1544 = vmax.f32 %v1329, %v1539
      %v1545 = vld [vmem:[%s2] sm:$0x1]
      %v1547 = vperm.slane %v1545, 0
      %v1549 = vadd.f32 %v1541, %v1547
      %v1550 = vadd.f32 %v1542, %v1547
      %v1551 = vadd.f32 %v1543, %v1547
      %v1552 = vadd.f32 %v1544, %v1547
      %v1553 = vmax.f32 %v1549, 0.0
      %v1554 = vmax.f32 %v1550, 0.0
      %v1555 = vmax.f32 %v1551, 0.0
      %v1556 = vmax.f32 %v1552, 0.0
      %1557 = vst.msk [vmem:[%s170] sm:$0xff] %vm283, %v1553
      %1558 = vst.msk [vmem:[%s170 + $0x8] sm:$0xff] %vm283, %v1554
      %1559 = vst.msk [vmem:[%s170 + $0x10] sm:$0xff] %vm283, %v1555
      %vm1560 = vcmask 521216
      %1561 = vst.msk [vmem:[%s170 + $0x18] sm:$0x3f] %vm1560, %v1556
      %p1562 = scmp.lt.s32.totalorder %s14, 1
      %s1563 = scalar_select %p1562, %s14, 1
      %s1564 = smul.addr %s1563, 4
      %s1565 = smul.addr %s1564, 8
      %s1566 = scalar_lea.vmem %s3, %s1565
      // Predicated region
      $region33: #{_lambda_.4} parent=31 // pred_check
        %p1567 = pneg %p100
      $region34: #{_lambda_.4} parent=31 // pred_check_branch
        %1569 = sbr.rel (%p1567) target = $region36
      $region35: #{_lambda_.4} parent=31 // pred_region
        _
      $region36: #{_lambda_.4} parent=31 // pred_fallthru
        _
    $region32: #{_lambda_.4} parent=5 // pred_fallthru
      _
    %p1570 = scmp.le.s32.totalorder 2, %s9
    // Predicated region
    $region37: #{_lambda_.4} parent=5 // pred_check
      %p1571 = pneg %p1570
    $region38: #{_lambda_.4} parent=5 // pred_check_branch
      %1573 = sbr.rel (%p1571) target = $region40
    $region39: #{_lambda_.4} parent=5 // pred_region
      %s1574 = ssub.s32 %s9, 2
      // Predicated region
      $region41: #{_lambda_.4} parent=39 // pred_check
        %p1575 = pneg %p106
      $region42: #{_lambda_.4} parent=39 // pred_check_branch
        %1577 = sbr.rel (%p1575) target = $region44
      $region43: #{_lambda_.4} parent=39 // pred_region
        %p1578 = scmp.lt.s32.totalorder %s15, 1
        %s1579 = scalar_select %p1578, %s15, 1
        %s1580 = smul.addr %s1579, 4
        %s1581 = smul.addr %s1580, 8
        %s1582 = scalar_lea.vmem %s3, %s1581
      $region44: #{_lambda_.4} parent=39 // pred_fallthru
        _
    $region40: #{_lambda_.4} parent=5 // pred_fallthru
      _
  $region6: #{_lambda_.4} parent=0 // loop_footer
    %s13 = sadd.s32 1, %s9
  $region7: #{_lambda_.4} parent=0 // loop_footer_branch
    %8 = sbr.rel target = $region3
  $region8: #{_lambda_.4} parent=0 // loop_exit
    _

// kernel: _lambda_.5
$region0: #{_lambda_.5}
  #allocation0 [shape = 'u32[]', space=smem, size = 0x4, offset = 0x4, fixed_abs, tag = 'smem constant byte address 0x4 - core index']
  #allocation1 [shape = 'u32[72,128]{1,0:T(1,128)}', space=vmem, size = 0x9000, scoped, tag = 'internal scratch']
  %s0 = inlined_call_operand.vmem [shape: f32[2,1920], index: 0, kind: input, shape index: {}]
  %s1 = inlined_call_operand.vmem [shape: f32[1920,256], index: 1, kind: input, shape index: {}]
  %s2 = inlined_call_operand.vmem [shape: f32[1,256], index: 2, kind: input, shape index: {}]
  %s3 = inlined_call_operand.vmem [shape: f32[256,2], index: 3, kind: input, shape index: {}]
  %s4 = inlined_call_operand.vmem [shape: f32[1,2], index: 4, kind: input, shape index: {}]
  %s5 = inlined_call_operand.hbm [shape: f32[2,2], index: 5, kind: output, shape index: {}]
  %s6 = sld [smem:[#allocation0]]
  $region30: #{_lambda_.5} parent=0
    _
  %s8 = ssub.s32 1, %s6
  %s9 = scalar_select 0, %s8, %s6
  $region1: #{_lambda_.5} parent=0
    #allocation2 [shape = 'u8[1024]{0}', space=vmem, size = 0x400, scoped, tag = 'output window, operand 0, single buffered']
    #allocation3 [shape = 's32[1]{0}', space=sflag, size = 0x4, scoped, tag = 'scoped memory for _lambda_.5']
    %10 = vsyncpa [#allocation3], 0
    // Predicated region
    $region2: #{_lambda_.5} parent=1 // pred_check
      _
    $region3: #{_lambda_.5} parent=1 // pred_check_branch
      %12 = sbr.rel (0) target = $region5
    $region4: #{_lambda_.5} parent=1 // pred_region
      _
    $region5: #{_lambda_.5} parent=1 // pred_fallthru
      _
    // Predicated region
    $region6: #{_lambda_.5} parent=1 // pred_check
      _
    $region7: #{_lambda_.5} parent=1 // pred_check_branch
      %14 = sbr.rel (0) target = $region9
    $region8: #{_lambda_.5} parent=1 // pred_region
      _
    $region9: #{_lambda_.5} parent=1 // pred_fallthru
      _
    // Predicated region
    $region10: #{_lambda_.5} parent=1 // pred_check
      _
    $region11: #{_lambda_.5} parent=1 // pred_check_branch
      %16 = sbr.rel (0) target = $region13
    $region12: #{_lambda_.5} parent=1 // pred_region
      _
    $region13: #{_lambda_.5} parent=1 // pred_fallthru
      _
    // Predicated region
    $region14: #{_lambda_.5} parent=1 // pred_check
      _
    $region15: #{_lambda_.5} parent=1 // pred_check_branch
      %18 = sbr.rel (0) target = $region17
    $region16: #{_lambda_.5} parent=1 // pred_region
      _
    $region17: #{_lambda_.5} parent=1 // pred_fallthru
      _
    // Predicated region
    $region18: #{_lambda_.5} parent=1 // pred_check
      _
    $region19: #{_lambda_.5} parent=1 // pred_check_branch
      %20 = sbr.rel (0) target = $region21
    $region20: #{_lambda_.5} parent=1 // pred_region
      _
    $region21: #{_lambda_.5} parent=1 // pred_fallthru
      _
    %v21 = vld [vmem:[%s0] sm:$0xff]
    %v22 = vld [vmem:[%s0 + $0x8] sm:$0xff]
    %v23 = vld [vmem:[%s0 + $0x10] sm:$0xff]
    %v24 = vld [vmem:[%s0 + $0x18] sm:$0x3f]
    %v25 = vld [vmem:[%s1] sm:$0xff]
    %v26 = vld [vmem:[%s1 + $0x8] sm:$0xff]
    %v27 = vld [vmem:[%s1 + $0x10] sm:$0xff]
    %v28 = vld [vmem:[%s1 + $0x18] sm:$0xff]
    %v29 = vld [vmem:[%s1 + $0x20] sm:$0xff]
    %v30 = vld [vmem:[%s1 + $0x28] sm:$0xff]
    %v31 = vld [vmem:[%s1 + $0x30] sm:$0xff]
    %v32 = vld [vmem:[%s1 + $0x38] sm:$0xff]
    %v33 = vld [vmem:[%s1 + $0x40] sm:$0xff]
    %v34 = vld [vmem:[%s1 + $0x48] sm:$0xff]
    %v35 = vld [vmem:[%s1 + $0x50] sm:$0xff]
    %v36 = vld [vmem:[%s1 + $0x58] sm:$0xff]
    %v37 = vld [vmem:[%s1 + $0x60] sm:$0xff]
    %v38 = vld [vmem:[%s1 + $0x68] sm:$0xff]
    %v39 = vld [vmem:[%s1 + $0x70] sm:$0xff]
    %v40 = vld [vmem:[%s1 + $0x78] sm:$0xff]
    %v41 = vld [vmem:[%s1 + $0x80] sm:$0xff]
    %v42 = vld [vmem:[%s1 + $0x88] sm:$0xff]
    %v43 = vld [vmem:[%s1 + $0x90] sm:$0xff]
    %v44 = vld [vmem:[%s1 + $0x98] sm:$0xff]
    %v45 = vld [vmem:[%s1 + $0xa0] sm:$0xff]
    %v46 = vld [vmem:[%s1 + $0xa8] sm:$0xff]
    %v47 = vld [vmem:[%s1 + $0xb0] sm:$0xff]
    %v48 = vld [vmem:[%s1 + $0xb8] sm:$0xff]
    %v49 = vld [vmem:[%s1 + $0xc0] sm:$0xff]
    %v50 = vld [vmem:[%s1 + $0xc8] sm:$0xff]
    %v51 = vld [vmem:[%s1 + $0xd0] sm:$0xff]
    %v52 = vld [vmem:[%s1 + $0xd8] sm:$0xff]
    %v53 = vld [vmem:[%s1 + $0xe0] sm:$0xff]
    %v54 = vld [vmem:[%s1 + $0xe8] sm:$0xff]
    %v55 = vld [vmem:[%s1 + $0xf0] sm:$0xff]
    %v56 = vld [vmem:[%s1 + $0xf8] sm:$0xff]
    %v57 = vld [vmem:[%s1 + $0x100] sm:$0xff]
    %v58 = vld [vmem:[%s1 + $0x108] sm:$0xff]
    %v59 = vld [vmem:[%s1 + $0x110] sm:$0xff]
    %v60 = vld [vmem:[%s1 + $0x118] sm:$0xff]
    %v61 = vld [vmem:[%s1 + $0x120] sm:$0xff]
    %v62 = vld [vmem:[%s1 + $0x128] sm:$0xff]
    %v63 = vld [vmem:[%s1 + $0x130] sm:$0xff]
    %v64 = vld [vmem:[%s1 + $0x138] sm:$0xff]
    %v65 = vld [vmem:[%s1 + $0x140] sm:$0xff]
    %v66 = vld [vmem:[%s1 + $0x148] sm:$0xff]
    %v67 = vld [vmem:[%s1 + $0x150] sm:$0xff]
    %v68 = vld [vmem:[%s1 + $0x158] sm:$0xff]
    %v69 = vld [vmem:[%s1 + $0x160] sm:$0xff]
    %v70 = vld [vmem:[%s1 + $0x168] sm:$0xff]
    %v71 = vld [vmem:[%s1 + $0x170] sm:$0xff]
    %v72 = vld [vmem:[%s1 + $0x178] sm:$0xff]
    %v73 = vld [vmem:[%s1 + $0x180] sm:$0xff]
    %v74 = vld [vmem:[%s1 + $0x188] sm:$0xff]
    %v75 = vld [vmem:[%s1 + $0x190] sm:$0xff]
    %v76 = vld [vmem:[%s1 + $0x198] sm:$0xff]
    %v77 = vld [vmem:[%s1 + $0x1a0] sm:$0xff]
    %v78 = vld [vmem:[%s1 + $0x1a8] sm:$0xff]
    %v79 = vld [vmem:[%s1 + $0x1b0] sm:$0xff]
    %v80 = vld [vmem:[%s1 + $0x1b8] sm:$0xff]
    %v81 = vld [vmem:[%s1 + $0x1c0] sm:$0xff]
    %v82 = vld [vmem:[%s1 + $0x1c8] sm:$0xff]
    %v83 = vld [vmem:[%s1 + $0x1d0] sm:$0xff]
    %v84 = vld [vmem:[%s1 + $0x1d8] sm:$0xff]
    %v85 = vld [vmem:[%s1 + $0x1e0] sm:$0xff]
    %v86 = vld [vmem:[%s1 + $0x1e8] sm:$0xff]
    %v87 = vld [vmem:[%s1 + $0x1f0] sm:$0xff]
    %v88 = vld [vmem:[%s1 + $0x1f8] sm:$0xff]
    %v89 = vld [vmem:[%s1 + $0x200] sm:$0xff]
    %v90 = vld [vmem:[%s1 + $0x208] sm:$0xff]
    %v91 = vld [vmem:[%s1 + $0x210] sm:$0xff]
    %v92 = vld [vmem:[%s1 + $0x218] sm:$0xff]
    %v93 = vld [vmem:[%s1 + $0x220] sm:$0xff]
    %v94 = vld [vmem:[%s1 + $0x228] sm:$0xff]
    %v95 = vld [vmem:[%s1 + $0x230] sm:$0xff]
    %v96 = vld [vmem:[%s1 + $0x238] sm:$0xff]
    %v97 = vld [vmem:[%s1 + $0x240] sm:$0xff]
    %v98 = vld [vmem:[%s1 + $0x248] sm:$0xff]
    %v99 = vld [vmem:[%s1 + $0x250] sm:$0xff]
    %v100 = vld [vmem:[%s1 + $0x258] sm:$0xff]
    %v101 = vld [vmem:[%s1 + $0x260] sm:$0xff]
    %v102 = vld [vmem:[%s1 + $0x268] sm:$0xff]
    %v103 = vld [vmem:[%s1 + $0x270] sm:$0xff]
    %v104 = vld [vmem:[%s1 + $0x278] sm:$0xff]
    %v105 = vld [vmem:[%s1 + $0x280] sm:$0xff]
    %v106 = vld [vmem:[%s1 + $0x288] sm:$0xff]
    %v107 = vld [vmem:[%s1 + $0x290] sm:$0xff]
    %v108 = vld [vmem:[%s1 + $0x298] sm:$0xff]
    %v109 = vld [vmem:[%s1 + $0x2a0] sm:$0xff]
    %v110 = vld [vmem:[%s1 + $0x2a8] sm:$0xff]
    %v111 = vld [vmem:[%s1 + $0x2b0] sm:$0xff]
    %v112 = vld [vmem:[%s1 + $0x2b8] sm:$0xff]
    %v113 = vld [vmem:[%s1 + $0x2c0] sm:$0xff]
    %v114 = vld [vmem:[%s1 + $0x2c8] sm:$0xff]
    %v115 = vld [vmem:[%s1 + $0x2d0] sm:$0xff]
    %v116 = vld [vmem:[%s1 + $0x2d8] sm:$0xff]
    %v117 = vld [vmem:[%s1 + $0x2e0] sm:$0xff]
    %v118 = vld [vmem:[%s1 + $0x2e8] sm:$0xff]
    %v119 = vld [vmem:[%s1 + $0x2f0] sm:$0xff]
    %v120 = vld [vmem:[%s1 + $0x2f8] sm:$0xff]
    %v121 = vld [vmem:[%s1 + $0x300] sm:$0xff]
    %v122 = vld [vmem:[%s1 + $0x308] sm:$0xff]
    %v123 = vld [vmem:[%s1 + $0x310] sm:$0xff]
    %v124 = vld [vmem:[%s1 + $0x318] sm:$0xff]
    %v125 = vld [vmem:[%s1 + $0x320] sm:$0xff]
    %v126 = vld [vmem:[%s1 + $0x328] sm:$0xff]
    %v127 = vld [vmem:[%s1 + $0x330] sm:$0xff]
    %v128 = vld [vmem:[%s1 + $0x338] sm:$0xff]
    %v129 = vld [vmem:[%s1 + $0x340] sm:$0xff]
    %v130 = vld [vmem:[%s1 + $0x348] sm:$0xff]
    %v131 = vld [vmem:[%s1 + $0x350] sm:$0xff]
    %v132 = vld [vmem:[%s1 + $0x358] sm:$0xff]
    %v133 = vld [vmem:[%s1 + $0x360] sm:$0xff]
    %v134 = vld [vmem:[%s1 + $0x368] sm:$0xff]
    %v135 = vld [vmem:[%s1 + $0x370] sm:$0xff]
    %v136 = vld [vmem:[%s1 + $0x378] sm:$0xff]
    %v137 = vld [vmem:[%s1 + $0x380] sm:$0xff]
    %v138 = vld [vmem:[%s1 + $0x388] sm:$0xff]
    %v139 = vld [vmem:[%s1 + $0x390] sm:$0xff]
    %v140 = vld [vmem:[%s1 + $0x398] sm:$0xff]
    %v141 = vld [vmem:[%s1 + $0x3a0] sm:$0xff]
    %v142 = vld [vmem:[%s1 + $0x3a8] sm:$0xff]
    %v143 = vld [vmem:[%s1 + $0x3b0] sm:$0xff]
    %v144 = vld [vmem:[%s1 + $0x3b8] sm:$0xff]
    %v145 = vld [vmem:[%s1 + $0x3c0] sm:$0xff]
    %v146 = vld [vmem:[%s1 + $0x3c8] sm:$0xff]
    %v147 = vld [vmem:[%s1 + $0x3d0] sm:$0xff]
    %v148 = vld [vmem:[%s1 + $0x3d8] sm:$0xff]
    %v149 = vld [vmem:[%s1 + $0x3e0] sm:$0xff]
    %v150 = vld [vmem:[%s1 + $0x3e8] sm:$0xff]
    %v151 = vld [vmem:[%s1 + $0x3f0] sm:$0xff]
    %v152 = vld [vmem:[%s1 + $0x3f8] sm:$0xff]
    %v153 = vld [vmem:[%s1 + $0x400] sm:$0xff]
    %v154 = vld [vmem:[%s1 + $0x408] sm:$0xff]
    %v155 = vld [vmem:[%s1 + $0x410] sm:$0xff]
    %v156 = vld [vmem:[%s1 + $0x418] sm:$0xff]
    %v157 = vld [vmem:[%s1 + $0x420] sm:$0xff]
    %v158 = vld [vmem:[%s1 + $0x428] sm:$0xff]
    %v159 = vld [vmem:[%s1 + $0x430] sm:$0xff]
    %v160 = vld [vmem:[%s1 + $0x438] sm:$0xff]
    %v161 = vld [vmem:[%s1 + $0x440] sm:$0xff]
    %v162 = vld [vmem:[%s1 + $0x448] sm:$0xff]
    %v163 = vld [vmem:[%s1 + $0x450] sm:$0xff]
    %v164 = vld [vmem:[%s1 + $0x458] sm:$0xff]
    %v165 = vld [vmem:[%s1 + $0x460] sm:$0xff]
    %v166 = vld [vmem:[%s1 + $0x468] sm:$0xff]
    %v167 = vld [vmem:[%s1 + $0x470] sm:$0xff]
    %v168 = vld [vmem:[%s1 + $0x478] sm:$0xff]
    %v169 = vld [vmem:[%s1 + $0x480] sm:$0xff]
    %v170 = vld [vmem:[%s1 + $0x488] sm:$0xff]
    %v171 = vld [vmem:[%s1 + $0x490] sm:$0xff]
    %v172 = vld [vmem:[%s1 + $0x498] sm:$0xff]
    %v173 = vld [vmem:[%s1 + $0x4a0] sm:$0xff]
    %v174 = vld [vmem:[%s1 + $0x4a8] sm:$0xff]
    %v175 = vld [vmem:[%s1 + $0x4b0] sm:$0xff]
    %v176 = vld [vmem:[%s1 + $0x4b8] sm:$0xff]
    %v177 = vld [vmem:[%s1 + $0x4c0] sm:$0xff]
    %v178 = vld [vmem:[%s1 + $0x4c8] sm:$0xff]
    %v179 = vld [vmem:[%s1 + $0x4d0] sm:$0xff]
    %v180 = vld [vmem:[%s1 + $0x4d8] sm:$0xff]
    %v181 = vld [vmem:[%s1 + $0x4e0] sm:$0xff]
    %v182 = vld [vmem:[%s1 + $0x4e8] sm:$0xff]
    %v183 = vld [vmem:[%s1 + $0x4f0] sm:$0xff]
    %v184 = vld [vmem:[%s1 + $0x4f8] sm:$0xff]
    %v185 = vld [vmem:[%s1 + $0x500] sm:$0xff]
    %v186 = vld [vmem:[%s1 + $0x508] sm:$0xff]
    %v187 = vld [vmem:[%s1 + $0x510] sm:$0xff]
    %v188 = vld [vmem:[%s1 + $0x518] sm:$0xff]
    %v189 = vld [vmem:[%s1 + $0x520] sm:$0xff]
    %v190 = vld [vmem:[%s1 + $0x528] sm:$0xff]
    %v191 = vld [vmem:[%s1 + $0x530] sm:$0xff]
    %v192 = vld [vmem:[%s1 + $0x538] sm:$0xff]
    %v193 = vld [vmem:[%s1 + $0x540] sm:$0xff]
    %v194 = vld [vmem:[%s1 + $0x548] sm:$0xff]
    %v195 = vld [vmem:[%s1 + $0x550] sm:$0xff]
    %v196 = vld [vmem:[%s1 + $0x558] sm:$0xff]
    %v197 = vld [vmem:[%s1 + $0x560] sm:$0xff]
    %v198 = vld [vmem:[%s1 + $0x568] sm:$0xff]
    %v199 = vld [vmem:[%s1 + $0x570] sm:$0xff]
    %v200 = vld [vmem:[%s1 + $0x578] sm:$0xff]
    %v201 = vld [vmem:[%s1 + $0x580] sm:$0xff]
    %v202 = vld [vmem:[%s1 + $0x588] sm:$0xff]
    %v203 = vld [vmem:[%s1 + $0x590] sm:$0xff]
    %v204 = vld [vmem:[%s1 + $0x598] sm:$0xff]
    %v205 = vld [vmem:[%s1 + $0x5a0] sm:$0xff]
    %v206 = vld [vmem:[%s1 + $0x5a8] sm:$0xff]
    %v207 = vld [vmem:[%s1 + $0x5b0] sm:$0xff]
    %v208 = vld [vmem:[%s1 + $0x5b8] sm:$0xff]
    %v209 = vld [vmem:[%s1 + $0x5c0] sm:$0xff]
    %v210 = vld [vmem:[%s1 + $0x5c8] sm:$0xff]
    %v211 = vld [vmem:[%s1 + $0x5d0] sm:$0xff]
    %v212 = vld [vmem:[%s1 + $0x5d8] sm:$0xff]
    %v213 = vld [vmem:[%s1 + $0x5e0] sm:$0xff]
    %v214 = vld [vmem:[%s1 + $0x5e8] sm:$0xff]
    %v215 = vld [vmem:[%s1 + $0x5f0] sm:$0xff]
    %v216 = vld [vmem:[%s1 + $0x5f8] sm:$0xff]
    %v217 = vld [vmem:[%s1 + $0x600] sm:$0xff]
    %v218 = vld [vmem:[%s1 + $0x608] sm:$0xff]
    %v219 = vld [vmem:[%s1 + $0x610] sm:$0xff]
    %v220 = vld [vmem:[%s1 + $0x618] sm:$0xff]
    %v221 = vld [vmem:[%s1 + $0x620] sm:$0xff]
    %v222 = vld [vmem:[%s1 + $0x628] sm:$0xff]
    %v223 = vld [vmem:[%s1 + $0x630] sm:$0xff]
    %v224 = vld [vmem:[%s1 + $0x638] sm:$0xff]
    %v225 = vld [vmem:[%s1 + $0x640] sm:$0xff]
    %v226 = vld [vmem:[%s1 + $0x648] sm:$0xff]
    %v227 = vld [vmem:[%s1 + $0x650] sm:$0xff]
    %v228 = vld [vmem:[%s1 + $0x658] sm:$0xff]
    %v229 = vld [vmem:[%s1 + $0x660] sm:$0xff]
    %v230 = vld [vmem:[%s1 + $0x668] sm:$0xff]
    %v231 = vld [vmem:[%s1 + $0x670] sm:$0xff]
    %v232 = vld [vmem:[%s1 + $0x678] sm:$0xff]
    %v233 = vld [vmem:[%s1 + $0x680] sm:$0xff]
    %v234 = vld [vmem:[%s1 + $0x688] sm:$0xff]
    %v235 = vld [vmem:[%s1 + $0x690] sm:$0xff]
    %v236 = vld [vmem:[%s1 + $0x698] sm:$0xff]
    %v237 = vld [vmem:[%s1 + $0x6a0] sm:$0xff]
    %v238 = vld [vmem:[%s1 + $0x6a8] sm:$0xff]
    %v239 = vld [vmem:[%s1 + $0x6b0] sm:$0xff]
    %v240 = vld [vmem:[%s1 + $0x6b8] sm:$0xff]
    %v241 = vld [vmem:[%s1 + $0x6c0] sm:$0xff]
    %v242 = vld [vmem:[%s1 + $0x6c8] sm:$0xff]
    %v243 = vld [vmem:[%s1 + $0x6d0] sm:$0xff]
    %v244 = vld [vmem:[%s1 + $0x6d8] sm:$0xff]
    %v245 = vld [vmem:[%s1 + $0x6e0] sm:$0xff]
    %v246 = vld [vmem:[%s1 + $0x6e8] sm:$0xff]
    %v247 = vld [vmem:[%s1 + $0x6f0] sm:$0xff]
    %v248 = vld [vmem:[%s1 + $0x6f8] sm:$0xff]
    %v249 = vld [vmem:[%s1 + $0x700] sm:$0xff]
    %v250 = vld [vmem:[%s1 + $0x708] sm:$0xff]
    %v251 = vld [vmem:[%s1 + $0x710] sm:$0xff]
    %v252 = vld [vmem:[%s1 + $0x718] sm:$0xff]
    %v253 = vld [vmem:[%s1 + $0x720] sm:$0xff]
    %v254 = vld [vmem:[%s1 + $0x728] sm:$0xff]
    %v255 = vld [vmem:[%s1 + $0x730] sm:$0xff]
    %v256 = vld [vmem:[%s1 + $0x738] sm:$0xff]
    %v257 = vld [vmem:[%s1 + $0x740] sm:$0xff]
    %v258 = vld [vmem:[%s1 + $0x748] sm:$0xff]
    %v259 = vld [vmem:[%s1 + $0x750] sm:$0xff]
    %v260 = vld [vmem:[%s1 + $0x758] sm:$0xff]
    %v261 = vld [vmem:[%s1 + $0x760] sm:$0xff]
    %v262 = vld [vmem:[%s1 + $0x768] sm:$0xff]
    %v263 = vld [vmem:[%s1 + $0x770] sm:$0xff]
    %v264 = vld [vmem:[%s1 + $0x778] sm:$0xff]
    %v265 = vld [vmem:[%s1 + $0x780] sm:$0xff]
    %v266 = vld [vmem:[%s1 + $0x788] sm:$0xff]
    %v267 = vld [vmem:[%s1 + $0x790] sm:$0xff]
    %v268 = vld [vmem:[%s1 + $0x798] sm:$0xff]
    %v269 = vld [vmem:[%s1 + $0x7a0] sm:$0xff]
    %v270 = vld [vmem:[%s1 + $0x7a8] sm:$0xff]
    %v271 = vld [vmem:[%s1 + $0x7b0] sm:$0xff]
    %v272 = vld [vmem:[%s1 + $0x7b8] sm:$0xff]
    %v273 = vld [vmem:[%s1 + $0x7c0] sm:$0xff]
    %v274 = vld [vmem:[%s1 + $0x7c8] sm:$0xff]
    %v275 = vld [vmem:[%s1 + $0x7d0] sm:$0xff]
    %v276 = vld [vmem:[%s1 + $0x7d8] sm:$0xff]
    %v277 = vld [vmem:[%s1 + $0x7e0] sm:$0xff]
    %v278 = vld [vmem:[%s1 + $0x7e8] sm:$0xff]
    %v279 = vld [vmem:[%s1 + $0x7f0] sm:$0xff]
    %v280 = vld [vmem:[%s1 + $0x7f8] sm:$0xff]
    %v281 = vld [vmem:[%s1 + $0x800] sm:$0xff]
    %v282 = vld [vmem:[%s1 + $0x808] sm:$0xff]
    %v283 = vld [vmem:[%s1 + $0x810] sm:$0xff]
    %v284 = vld [vmem:[%s1 + $0x818] sm:$0xff]
    %v285 = vld [vmem:[%s1 + $0x820] sm:$0xff]
    %v286 = vld [vmem:[%s1 + $0x828] sm:$0xff]
    %v287 = vld [vmem:[%s1 + $0x830] sm:$0xff]
    %v288 = vld [vmem:[%s1 + $0x838] sm:$0xff]
    %v289 = vld [vmem:[%s1 + $0x840] sm:$0xff]
    %v290 = vld [vmem:[%s1 + $0x848] sm:$0xff]
    %v291 = vld [vmem:[%s1 + $0x850] sm:$0xff]
    %v292 = vld [vmem:[%s1 + $0x858] sm:$0xff]
    %v293 = vld [vmem:[%s1 + $0x860] sm:$0xff]
    %v294 = vld [vmem:[%s1 + $0x868] sm:$0xff]
    %v295 = vld [vmem:[%s1 + $0x870] sm:$0xff]
    %v296 = vld [vmem:[%s1 + $0x878] sm:$0xff]
    %v297 = vld [vmem:[%s1 + $0x880] sm:$0xff]
    %v298 = vld [vmem:[%s1 + $0x888] sm:$0xff]
    %v299 = vld [vmem:[%s1 + $0x890] sm:$0xff]
    %v300 = vld [vmem:[%s1 + $0x898] sm:$0xff]
    %v301 = vld [vmem:[%s1 + $0x8a0] sm:$0xff]
    %v302 = vld [vmem:[%s1 + $0x8a8] sm:$0xff]
    %v303 = vld [vmem:[%s1 + $0x8b0] sm:$0xff]
    %v304 = vld [vmem:[%s1 + $0x8b8] sm:$0xff]
    %v305 = vld [vmem:[%s1 + $0x8c0] sm:$0xff]
    %v306 = vld [vmem:[%s1 + $0x8c8] sm:$0xff]
    %v307 = vld [vmem:[%s1 + $0x8d0] sm:$0xff]
    %v308 = vld [vmem:[%s1 + $0x8d8] sm:$0xff]
    %v309 = vld [vmem:[%s1 + $0x8e0] sm:$0xff]
    %v310 = vld [vmem:[%s1 + $0x8e8] sm:$0xff]
    %v311 = vld [vmem:[%s1 + $0x8f0] sm:$0xff]
    %v312 = vld [vmem:[%s1 + $0x8f8] sm:$0xff]
    %v313 = vld [vmem:[%s1 + $0x900] sm:$0xff]
    %v314 = vld [vmem:[%s1 + $0x908] sm:$0xff]
    %v315 = vld [vmem:[%s1 + $0x910] sm:$0xff]
    %v316 = vld [vmem:[%s1 + $0x918] sm:$0xff]
    %v317 = vld [vmem:[%s1 + $0x920] sm:$0xff]
    %v318 = vld [vmem:[%s1 + $0x928] sm:$0xff]
    %v319 = vld [vmem:[%s1 + $0x930] sm:$0xff]
    %v320 = vld [vmem:[%s1 + $0x938] sm:$0xff]
    %v321 = vld [vmem:[%s1 + $0x940] sm:$0xff]
    %v322 = vld [vmem:[%s1 + $0x948] sm:$0xff]
    %v323 = vld [vmem:[%s1 + $0x950] sm:$0xff]
    %v324 = vld [vmem:[%s1 + $0x958] sm:$0xff]
    %v325 = vld [vmem:[%s1 + $0x960] sm:$0xff]
    %v326 = vld [vmem:[%s1 + $0x968] sm:$0xff]
    %v327 = vld [vmem:[%s1 + $0x970] sm:$0xff]
    %v328 = vld [vmem:[%s1 + $0x978] sm:$0xff]
    %v329 = vld [vmem:[%s1 + $0x980] sm:$0xff]
    %v330 = vld [vmem:[%s1 + $0x988] sm:$0xff]
    %v331 = vld [vmem:[%s1 + $0x990] sm:$0xff]
    %v332 = vld [vmem:[%s1 + $0x998] sm:$0xff]
    %v333 = vld [vmem:[%s1 + $0x9a0] sm:$0xff]
    %v334 = vld [vmem:[%s1 + $0x9a8] sm:$0xff]
    %v335 = vld [vmem:[%s1 + $0x9b0] sm:$0xff]
    %v336 = vld [vmem:[%s1 + $0x9b8] sm:$0xff]
    %v337 = vld [vmem:[%s1 + $0x9c0] sm:$0xff]
    %v338 = vld [vmem:[%s1 + $0x9c8] sm:$0xff]
    %v339 = vld [vmem:[%s1 + $0x9d0] sm:$0xff]
    %v340 = vld [vmem:[%s1 + $0x9d8] sm:$0xff]
    %v341 = vld [vmem:[%s1 + $0x9e0] sm:$0xff]
    %v342 = vld [vmem:[%s1 + $0x9e8] sm:$0xff]
    %v343 = vld [vmem:[%s1 + $0x9f0] sm:$0xff]
    %v344 = vld [vmem:[%s1 + $0x9f8] sm:$0xff]
    %v345 = vld [vmem:[%s1 + $0xa00] sm:$0xff]
    %v346 = vld [vmem:[%s1 + $0xa08] sm:$0xff]
    %v347 = vld [vmem:[%s1 + $0xa10] sm:$0xff]
    %v348 = vld [vmem:[%s1 + $0xa18] sm:$0xff]
    %v349 = vld [vmem:[%s1 + $0xa20] sm:$0xff]
    %v350 = vld [vmem:[%s1 + $0xa28] sm:$0xff]
    %v351 = vld [vmem:[%s1 + $0xa30] sm:$0xff]
    %v352 = vld [vmem:[%s1 + $0xa38] sm:$0xff]
    %v353 = vld [vmem:[%s1 + $0xa40] sm:$0xff]
    %v354 = vld [vmem:[%s1 + $0xa48] sm:$0xff]
    %v355 = vld [vmem:[%s1 + $0xa50] sm:$0xff]
    %v356 = vld [vmem:[%s1 + $0xa58] sm:$0xff]
    %v357 = vld [vmem:[%s1 + $0xa60] sm:$0xff]
    %v358 = vld [vmem:[%s1 + $0xa68] sm:$0xff]
    %v359 = vld [vmem:[%s1 + $0xa70] sm:$0xff]
    %v360 = vld [vmem:[%s1 + $0xa78] sm:$0xff]
    %v361 = vld [vmem:[%s1 + $0xa80] sm:$0xff]
    %v362 = vld [vmem:[%s1 + $0xa88] sm:$0xff]
    %v363 = vld [vmem:[%s1 + $0xa90] sm:$0xff]
    %v364 = vld [vmem:[%s1 + $0xa98] sm:$0xff]
    %v365 = vld [vmem:[%s1 + $0xaa0] sm:$0xff]
    %v366 = vld [vmem:[%s1 + $0xaa8] sm:$0xff]
    %v367 = vld [vmem:[%s1 + $0xab0] sm:$0xff]
    %v368 = vld [vmem:[%s1 + $0xab8] sm:$0xff]
    %v369 = vld [vmem:[%s1 + $0xac0] sm:$0xff]
    %v370 = vld [vmem:[%s1 + $0xac8] sm:$0xff]
    %v371 = vld [vmem:[%s1 + $0xad0] sm:$0xff]
    %v372 = vld [vmem:[%s1 + $0xad8] sm:$0xff]
    %v373 = vld [vmem:[%s1 + $0xae0] sm:$0xff]
    %v374 = vld [vmem:[%s1 + $0xae8] sm:$0xff]
    %v375 = vld [vmem:[%s1 + $0xaf0] sm:$0xff]
    %v376 = vld [vmem:[%s1 + $0xaf8] sm:$0xff]
    %v377 = vld [vmem:[%s1 + $0xb00] sm:$0xff]
    %v378 = vld [vmem:[%s1 + $0xb08] sm:$0xff]
    %v379 = vld [vmem:[%s1 + $0xb10] sm:$0xff]
    %v380 = vld [vmem:[%s1 + $0xb18] sm:$0xff]
    %v381 = vld [vmem:[%s1 + $0xb20] sm:$0xff]
    %v382 = vld [vmem:[%s1 + $0xb28] sm:$0xff]
    %v383 = vld [vmem:[%s1 + $0xb30] sm:$0xff]
    %v384 = vld [vmem:[%s1 + $0xb38] sm:$0xff]
    %v385 = vld [vmem:[%s1 + $0xb40] sm:$0xff]
    %v386 = vld [vmem:[%s1 + $0xb48] sm:$0xff]
    %v387 = vld [vmem:[%s1 + $0xb50] sm:$0xff]
    %v388 = vld [vmem:[%s1 + $0xb58] sm:$0xff]
    %v389 = vld [vmem:[%s1 + $0xb60] sm:$0xff]
    %v390 = vld [vmem:[%s1 + $0xb68] sm:$0xff]
    %v391 = vld [vmem:[%s1 + $0xb70] sm:$0xff]
    %v392 = vld [vmem:[%s1 + $0xb78] sm:$0xff]
    %v393 = vld [vmem:[%s1 + $0xb80] sm:$0xff]
    %v394 = vld [vmem:[%s1 + $0xb88] sm:$0xff]
    %v395 = vld [vmem:[%s1 + $0xb90] sm:$0xff]
    %v396 = vld [vmem:[%s1 + $0xb98] sm:$0xff]
    %v397 = vld [vmem:[%s1 + $0xba0] sm:$0xff]
    %v398 = vld [vmem:[%s1 + $0xba8] sm:$0xff]
    %v399 = vld [vmem:[%s1 + $0xbb0] sm:$0xff]
    %v400 = vld [vmem:[%s1 + $0xbb8] sm:$0xff]
    %v401 = vld [vmem:[%s1 + $0xbc0] sm:$0xff]
    %v402 = vld [vmem:[%s1 + $0xbc8] sm:$0xff]
    %v403 = vld [vmem:[%s1 + $0xbd0] sm:$0xff]
    %v404 = vld [vmem:[%s1 + $0xbd8] sm:$0xff]
    %v405 = vld [vmem:[%s1 + $0xbe0] sm:$0xff]
    %v406 = vld [vmem:[%s1 + $0xbe8] sm:$0xff]
    %v407 = vld [vmem:[%s1 + $0xbf0] sm:$0xff]
    %v408 = vld [vmem:[%s1 + $0xbf8] sm:$0xff]
    %v409 = vld [vmem:[%s1 + $0xc00] sm:$0xff]
    %v410 = vld [vmem:[%s1 + $0xc08] sm:$0xff]
    %v411 = vld [vmem:[%s1 + $0xc10] sm:$0xff]
    %v412 = vld [vmem:[%s1 + $0xc18] sm:$0xff]
    %v413 = vld [vmem:[%s1 + $0xc20] sm:$0xff]
    %v414 = vld [vmem:[%s1 + $0xc28] sm:$0xff]
    %v415 = vld [vmem:[%s1 + $0xc30] sm:$0xff]
    %v416 = vld [vmem:[%s1 + $0xc38] sm:$0xff]
    %v417 = vld [vmem:[%s1 + $0xc40] sm:$0xff]
    %v418 = vld [vmem:[%s1 + $0xc48] sm:$0xff]
    %v419 = vld [vmem:[%s1 + $0xc50] sm:$0xff]
    %v420 = vld [vmem:[%s1 + $0xc58] sm:$0xff]
    %v421 = vld [vmem:[%s1 + $0xc60] sm:$0xff]
    %v422 = vld [vmem:[%s1 + $0xc68] sm:$0xff]
    %v423 = vld [vmem:[%s1 + $0xc70] sm:$0xff]
    %v424 = vld [vmem:[%s1 + $0xc78] sm:$0xff]
    %v425 = vld [vmem:[%s1 + $0xc80] sm:$0xff]
    %v426 = vld [vmem:[%s1 + $0xc88] sm:$0xff]
    %v427 = vld [vmem:[%s1 + $0xc90] sm:$0xff]
    %v428 = vld [vmem:[%s1 + $0xc98] sm:$0xff]
    %v429 = vld [vmem:[%s1 + $0xca0] sm:$0xff]
    %v430 = vld [vmem:[%s1 + $0xca8] sm:$0xff]
    %v431 = vld [vmem:[%s1 + $0xcb0] sm:$0xff]
    %v432 = vld [vmem:[%s1 + $0xcb8] sm:$0xff]
    %v433 = vld [vmem:[%s1 + $0xcc0] sm:$0xff]
    %v434 = vld [vmem:[%s1 + $0xcc8] sm:$0xff]
    %v435 = vld [vmem:[%s1 + $0xcd0] sm:$0xff]
    %v436 = vld [vmem:[%s1 + $0xcd8] sm:$0xff]
    %v437 = vld [vmem:[%s1 + $0xce0] sm:$0xff]
    %v438 = vld [vmem:[%s1 + $0xce8] sm:$0xff]
    %v439 = vld [vmem:[%s1 + $0xcf0] sm:$0xff]
    %v440 = vld [vmem:[%s1 + $0xcf8] sm:$0xff]
    %v441 = vld [vmem:[%s1 + $0xd00] sm:$0xff]
    %v442 = vld [vmem:[%s1 + $0xd08] sm:$0xff]
    %v443 = vld [vmem:[%s1 + $0xd10] sm:$0xff]
    %v444 = vld [vmem:[%s1 + $0xd18] sm:$0xff]
    %v445 = vld [vmem:[%s1 + $0xd20] sm:$0xff]
    %v446 = vld [vmem:[%s1 + $0xd28] sm:$0xff]
    %v447 = vld [vmem:[%s1 + $0xd30] sm:$0xff]
    %v448 = vld [vmem:[%s1 + $0xd38] sm:$0xff]
    %v449 = vld [vmem:[%s1 + $0xd40] sm:$0xff]
    %v450 = vld [vmem:[%s1 + $0xd48] sm:$0xff]
    %v451 = vld [vmem:[%s1 + $0xd50] sm:$0xff]
    %v452 = vld [vmem:[%s1 + $0xd58] sm:$0xff]
    %v453 = vld [vmem:[%s1 + $0xd60] sm:$0xff]
    %v454 = vld [vmem:[%s1 + $0xd68] sm:$0xff]
    %v455 = vld [vmem:[%s1 + $0xd70] sm:$0xff]
    %v456 = vld [vmem:[%s1 + $0xd78] sm:$0xff]
    %v457 = vld [vmem:[%s1 + $0xd80] sm:$0xff]
    %v458 = vld [vmem:[%s1 + $0xd88] sm:$0xff]
    %v459 = vld [vmem:[%s1 + $0xd90] sm:$0xff]
    %v460 = vld [vmem:[%s1 + $0xd98] sm:$0xff]
    %v461 = vld [vmem:[%s1 + $0xda0] sm:$0xff]
    %v462 = vld [vmem:[%s1 + $0xda8] sm:$0xff]
    %v463 = vld [vmem:[%s1 + $0xdb0] sm:$0xff]
    %v464 = vld [vmem:[%s1 + $0xdb8] sm:$0xff]
    %v465 = vld [vmem:[%s1 + $0xdc0] sm:$0xff]
    %v466 = vld [vmem:[%s1 + $0xdc8] sm:$0xff]
    %v467 = vld [vmem:[%s1 + $0xdd0] sm:$0xff]
    %v468 = vld [vmem:[%s1 + $0xdd8] sm:$0xff]
    %v469 = vld [vmem:[%s1 + $0xde0] sm:$0xff]
    %v470 = vld [vmem:[%s1 + $0xde8] sm:$0xff]
    %v471 = vld [vmem:[%s1 + $0xdf0] sm:$0xff]
    %v472 = vld [vmem:[%s1 + $0xdf8] sm:$0xff]
    %v473 = vld [vmem:[%s1 + $0xe00] sm:$0xff]
    %v474 = vld [vmem:[%s1 + $0xe08] sm:$0xff]
    %v475 = vld [vmem:[%s1 + $0xe10] sm:$0xff]
    %v476 = vld [vmem:[%s1 + $0xe18] sm:$0xff]
    %v477 = vld [vmem:[%s1 + $0xe20] sm:$0xff]
    %v478 = vld [vmem:[%s1 + $0xe28] sm:$0xff]
    %v479 = vld [vmem:[%s1 + $0xe30] sm:$0xff]
    %v480 = vld [vmem:[%s1 + $0xe38] sm:$0xff]
    %v481 = vld [vmem:[%s1 + $0xe40] sm:$0xff]
    %v482 = vld [vmem:[%s1 + $0xe48] sm:$0xff]
    %v483 = vld [vmem:[%s1 + $0xe50] sm:$0xff]
    %v484 = vld [vmem:[%s1 + $0xe58] sm:$0xff]
    %v485 = vld [vmem:[%s1 + $0xe60] sm:$0xff]
    %v486 = vld [vmem:[%s1 + $0xe68] sm:$0xff]
    %v487 = vld [vmem:[%s1 + $0xe70] sm:$0xff]
    %v488 = vld [vmem:[%s1 + $0xe78] sm:$0xff]
    %v489 = vld [vmem:[%s1 + $0xe80] sm:$0xff]
    %v490 = vld [vmem:[%s1 + $0xe88] sm:$0xff]
    %v491 = vld [vmem:[%s1 + $0xe90] sm:$0xff]
    %v492 = vld [vmem:[%s1 + $0xe98] sm:$0xff]
    %v493 = vld [vmem:[%s1 + $0xea0] sm:$0xff]
    %v494 = vld [vmem:[%s1 + $0xea8] sm:$0xff]
    %v495 = vld [vmem:[%s1 + $0xeb0] sm:$0xff]
    %v496 = vld [vmem:[%s1 + $0xeb8] sm:$0xff]
    %v497 = vld [vmem:[%s1 + $0xec0] sm:$0xff]
    %v498 = vld [vmem:[%s1 + $0xec8] sm:$0xff]
    %v499 = vld [vmem:[%s1 + $0xed0] sm:$0xff]
    %v500 = vld [vmem:[%s1 + $0xed8] sm:$0xff]
    %v501 = vld [vmem:[%s1 + $0xee0] sm:$0xff]
    %v502 = vld [vmem:[%s1 + $0xee8] sm:$0xff]
    %v503 = vld [vmem:[%s1 + $0xef0] sm:$0xff]
    %v504 = vld [vmem:[%s1 + $0xef8] sm:$0xff]
    %v505 = vld [vmem:[%s2] sm:$0x3]
    %v507 = vperm.slane %v505, 0
    %v508 = vperm.slane %v505, 1
    %515 = vst [vmem:[#allocation1] ss:$4 sm:$0xff] %v21
    %s516 = scalar_lea.vmem [#allocation1], 32
    %517 = vst [vmem:[%s516] ss:$4 sm:$0xff] %v22
    %v518 = vld.sshfl [vmem:[#allocation1] sm:$0xff pattern:$0x73625140]
    %v519 = vld.sshfl [vmem:[#allocation1 + $0x8] sm:$0xff pattern:$0x73625140]
    %v520 = vld.sshfl [vmem:[#allocation1 + $0x10] sm:$0xff pattern:$0x73625140]
    %v521 = vld.sshfl [vmem:[#allocation1 + $0x18] sm:$0xff pattern:$0x73625140]
    %v522 = vld.sshfl [vmem:[#allocation1 + $0x20] sm:$0xff pattern:$0x73625140]
    %v523 = vld.sshfl [vmem:[#allocation1 + $0x28] sm:$0xff pattern:$0x73625140]
    %v524 = vld.sshfl [vmem:[#allocation1 + $0x30] sm:$0xff pattern:$0x73625140]
    %v525 = vld.sshfl [vmem:[#allocation1 + $0x38] sm:$0xff pattern:$0x73625140]
    %526 = vst [vmem:[#allocation1] ss:$4 sm:$0xff] %v23
    %527 = vst [vmem:[%s516] ss:$4 sm:$0xff] %v24
    %v528 = vld.sshfl [vmem:[#allocation1] sm:$0xff pattern:$0x73625140]
    %v529 = vld.sshfl [vmem:[#allocation1 + $0x8] sm:$0xff pattern:$0x73625140]
    %v530 = vld.sshfl [vmem:[#allocation1 + $0x10] sm:$0xff pattern:$0x73625140]
    %v531 = vld.sshfl [vmem:[#allocation1 + $0x18] sm:$0xff pattern:$0x73625140]
    %v532 = vld.sshfl [vmem:[#allocation1 + $0x20] sm:$0xff pattern:$0x73625140]
    %v533 = vld.sshfl [vmem:[#allocation1 + $0x28] sm:$0xff pattern:$0x73625140]
    %v534 = vld.sshfl [vmem:[#allocation1 + $0x30] sm:$0xff pattern:$0x73625140]
    %550 = vmatpush.msra.mxu0 %v55
    %551 = vmatpush.msra.mxu0 %v53
    %552 = vmatpush.msra.mxu0 %v51
    %553 = vmatpush.msra.mxu0 %v49
    %554 = vmatpush.msra.mxu0 %v47
    %555 = vmatpush.msra.mxu0 %v45
    %556 = vmatpush.msra.mxu0 %v43
    %557 = vmatpush.msra.mxu0 %v41
    %558 = vmatpush.msra.mxu0 %v39
    %559 = vmatpush.msra.mxu0 %v37
    %560 = vmatpush.msra.mxu0 %v35
    %561 = vmatpush.msra.mxu0 %v33
    %562 = vmatpush.msra.mxu0 %v31
    %563 = vmatpush.msra.mxu0 %v29
    %564 = vmatpush.msra.mxu0 %v27
    %565 = vmatpush.msra.mxu0 %v25
    %566 = vmatmul.f32.gmra.mxu0 %v518
    %v567 = vpop.f32.mrf.mxu0
    %v568 = vadd.f32 %v507, %v567
    %569 = vdwg.mxu0
    %570 = vmatpush.msra.mxu0 %v87
    %571 = vmatpush.msra.mxu0 %v85
    %572 = vmatpush.msra.mxu0 %v83
    %573 = vmatpush.msra.mxu0 %v81
    %574 = vmatpush.msra.mxu0 %v79
    %575 = vmatpush.msra.mxu0 %v77
    %576 = vmatpush.msra.mxu0 %v75
    %577 = vmatpush.msra.mxu0 %v73
    %578 = vmatpush.msra.mxu0 %v71
    %579 = vmatpush.msra.mxu0 %v69
    %580 = vmatpush.msra.mxu0 %v67
    %581 = vmatpush.msra.mxu0 %v65
    %582 = vmatpush.msra.mxu0 %v63
    %583 = vmatpush.msra.mxu0 %v61
    %584 = vmatpush.msra.mxu0 %v59
    %585 = vmatpush.msra.mxu0 %v57
    %586 = vmatmul.f32.gmra.mxu0 %v519
    %v587 = vpop.f32.mrf.mxu0
    %v588 = vadd.f32 %v568, %v587
    %589 = vdwg.mxu0
    %590 = vmatpush.msra.mxu0 %v119
    %591 = vmatpush.msra.mxu0 %v117
    %592 = vmatpush.msra.mxu0 %v115
    %593 = vmatpush.msra.mxu0 %v113
    %594 = vmatpush.msra.mxu0 %v111
    %595 = vmatpush.msra.mxu0 %v109
    %596 = vmatpush.msra.mxu0 %v107
    %597 = vmatpush.msra.mxu0 %v105
    %598 = vmatpush.msra.mxu0 %v103
    %599 = vmatpush.msra.mxu0 %v101
    %600 = vmatpush.msra.mxu0 %v99
    %601 = vmatpush.msra.mxu0 %v97
    %602 = vmatpush.msra.mxu0 %v95
    %603 = vmatpush.msra.mxu0 %v93
    %604 = vmatpush.msra.mxu0 %v91
    %605 = vmatpush.msra.mxu0 %v89
    %606 = vmatmul.f32.gmra.mxu0 %v520
    %v607 = vpop.f32.mrf.mxu0
    %v608 = vadd.f32 %v588, %v607
    %609 = vdwg.mxu0
    %610 = vmatpush.msra.mxu0 %v151
    %611 = vmatpush.msra.mxu0 %v149
    %612 = vmatpush.msra.mxu0 %v147
    %613 = vmatpush.msra.mxu0 %v145
    %614 = vmatpush.msra.mxu0 %v143
    %615 = vmatpush.msra.mxu0 %v141
    %616 = vmatpush.msra.mxu0 %v139
    %617 = vmatpush.msra.mxu0 %v137
    %618 = vmatpush.msra.mxu0 %v135
    %619 = vmatpush.msra.mxu0 %v133
    %620 = vmatpush.msra.mxu0 %v131
    %621 = vmatpush.msra.mxu0 %v129
    %622 = vmatpush.msra.mxu0 %v127
    %623 = vmatpush.msra.mxu0 %v125
    %624 = vmatpush.msra.mxu0 %v123
    %625 = vmatpush.msra.mxu0 %v121
    %626 = vmatmul.f32.gmra.mxu0 %v521
    %v627 = vpop.f32.mrf.mxu0
    %v628 = vadd.f32 %v608, %v627
    %629 = vdwg.mxu0
    %630 = vmatpush.msra.mxu0 %v183
    %631 = vmatpush.msra.mxu0 %v181
    %632 = vmatpush.msra.mxu0 %v179
    %633 = vmatpush.msra.mxu0 %v177
    %634 = vmatpush.msra.mxu0 %v175
    %635 = vmatpush.msra.mxu0 %v173
    %636 = vmatpush.msra.mxu0 %v171
    %637 = vmatpush.msra.mxu0 %v169
    %638 = vmatpush.msra.mxu0 %v167
    %639 = vmatpush.msra.mxu0 %v165
    %640 = vmatpush.msra.mxu0 %v163
    %641 = vmatpush.msra.mxu0 %v161
    %642 = vmatpush.msra.mxu0 %v159
    %643 = vmatpush.msra.mxu0 %v157
    %644 = vmatpush.msra.mxu0 %v155
    %645 = vmatpush.msra.mxu0 %v153
    %646 = vmatmul.f32.gmra.mxu0 %v522
    %v647 = vpop.f32.mrf.mxu0
    %v648 = vadd.f32 %v628, %v647
    %649 = vdwg.mxu0
    %650 = vmatpush.msra.mxu0 %v215
    %651 = vmatpush.msra.mxu0 %v213
    %652 = vmatpush.msra.mxu0 %v211
    %653 = vmatpush.msra.mxu0 %v209
    %654 = vmatpush.msra.mxu0 %v207
    %655 = vmatpush.msra.mxu0 %v205
    %656 = vmatpush.msra.mxu0 %v203
    %657 = vmatpush.msra.mxu0 %v201
    %658 = vmatpush.msra.mxu0 %v199
    %659 = vmatpush.msra.mxu0 %v197
    %660 = vmatpush.msra.mxu0 %v195
    %661 = vmatpush.msra.mxu0 %v193
    %662 = vmatpush.msra.mxu0 %v191
    %663 = vmatpush.msra.mxu0 %v189
    %664 = vmatpush.msra.mxu0 %v187
    %665 = vmatpush.msra.mxu0 %v185
    %666 = vmatmul.f32.gmra.mxu0 %v523
    %v667 = vpop.f32.mrf.mxu0
    %v668 = vadd.f32 %v648, %v667
    %669 = vdwg.mxu0
    %670 = vmatpush.msra.mxu0 %v247
    %671 = vmatpush.msra.mxu0 %v245
    %672 = vmatpush.msra.mxu0 %v243
    %673 = vmatpush.msra.mxu0 %v241
    %674 = vmatpush.msra.mxu0 %v239
    %675 = vmatpush.msra.mxu0 %v237
    %676 = vmatpush.msra.mxu0 %v235
    %677 = vmatpush.msra.mxu0 %v233
    %678 = vmatpush.msra.mxu0 %v231
    %679 = vmatpush.msra.mxu0 %v229
    %680 = vmatpush.msra.mxu0 %v227
    %681 = vmatpush.msra.mxu0 %v225
    %682 = vmatpush.msra.mxu0 %v223
    %683 = vmatpush.msra.mxu0 %v221
    %684 = vmatpush.msra.mxu0 %v219
    %685 = vmatpush.msra.mxu0 %v217
    %686 = vmatmul.f32.gmra.mxu0 %v524
    %v687 = vpop.f32.mrf.mxu0
    %v688 = vadd.f32 %v668, %v687
    %689 = vdwg.mxu0
    %690 = vmatpush.msra.mxu0 %v279
    %691 = vmatpush.msra.mxu0 %v277
    %692 = vmatpush.msra.mxu0 %v275
    %693 = vmatpush.msra.mxu0 %v273
    %694 = vmatpush.msra.mxu0 %v271
    %695 = vmatpush.msra.mxu0 %v269
    %696 = vmatpush.msra.mxu0 %v267
    %697 = vmatpush.msra.mxu0 %v265
    %698 = vmatpush.msra.mxu0 %v263
    %699 = vmatpush.msra.mxu0 %v261
    %700 = vmatpush.msra.mxu0 %v259
    %701 = vmatpush.msra.mxu0 %v257
    %702 = vmatpush.msra.mxu0 %v255
    %703 = vmatpush.msra.mxu0 %v253
    %704 = vmatpush.msra.mxu0 %v251
    %705 = vmatpush.msra.mxu0 %v249
    %706 = vmatmul.f32.gmra.mxu0 %v525
    %v707 = vpop.f32.mrf.mxu0
    %v708 = vadd.f32 %v688, %v707
    %709 = vdwg.mxu0
    %710 = vmatpush.msra.mxu0 %v311
    %711 = vmatpush.msra.mxu0 %v309
    %712 = vmatpush.msra.mxu0 %v307
    %713 = vmatpush.msra.mxu0 %v305
    %714 = vmatpush.msra.mxu0 %v303
    %715 = vmatpush.msra.mxu0 %v301
    %716 = vmatpush.msra.mxu0 %v299
    %717 = vmatpush.msra.mxu0 %v297
    %718 = vmatpush.msra.mxu0 %v295
    %719 = vmatpush.msra.mxu0 %v293
    %720 = vmatpush.msra.mxu0 %v291
    %721 = vmatpush.msra.mxu0 %v289
    %722 = vmatpush.msra.mxu0 %v287
    %723 = vmatpush.msra.mxu0 %v285
    %724 = vmatpush.msra.mxu0 %v283
    %725 = vmatpush.msra.mxu0 %v281
    %726 = vmatmul.f32.gmra.mxu0 %v528
    %v727 = vpop.f32.mrf.mxu0
    %v728 = vadd.f32 %v708, %v727
    %729 = vdwg.mxu0
    %730 = vmatpush.msra.mxu0 %v343
    %731 = vmatpush.msra.mxu0 %v341
    %732 = vmatpush.msra.mxu0 %v339
    %733 = vmatpush.msra.mxu0 %v337
    %734 = vmatpush.msra.mxu0 %v335
    %735 = vmatpush.msra.mxu0 %v333
    %736 = vmatpush.msra.mxu0 %v331
    %737 = vmatpush.msra.mxu0 %v329
    %738 = vmatpush.msra.mxu0 %v327
    %739 = vmatpush.msra.mxu0 %v325
    %740 = vmatpush.msra.mxu0 %v323
    %741 = vmatpush.msra.mxu0 %v321
    %742 = vmatpush.msra.mxu0 %v319
    %743 = vmatpush.msra.mxu0 %v317
    %744 = vmatpush.msra.mxu0 %v315
    %745 = vmatpush.msra.mxu0 %v313
    %746 = vmatmul.f32.gmra.mxu0 %v529
    %v747 = vpop.f32.mrf.mxu0
    %v748 = vadd.f32 %v728, %v747
    %749 = vdwg.mxu0
    %750 = vmatpush.msra.mxu0 %v375
    %751 = vmatpush.msra.mxu0 %v373
    %752 = vmatpush.msra.mxu0 %v371
    %753 = vmatpush.msra.mxu0 %v369
    %754 = vmatpush.msra.mxu0 %v367
    %755 = vmatpush.msra.mxu0 %v365
    %756 = vmatpush.msra.mxu0 %v363
    %757 = vmatpush.msra.mxu0 %v361
    %758 = vmatpush.msra.mxu0 %v359
    %759 = vmatpush.msra.mxu0 %v357
    %760 = vmatpush.msra.mxu0 %v355
    %761 = vmatpush.msra.mxu0 %v353
    %762 = vmatpush.msra.mxu0 %v351
    %763 = vmatpush.msra.mxu0 %v349
    %764 = vmatpush.msra.mxu0 %v347
    %765 = vmatpush.msra.mxu0 %v345
    %766 = vmatmul.f32.gmra.mxu0 %v530
    %v767 = vpop.f32.mrf.mxu0
    %v768 = vadd.f32 %v748, %v767
    %769 = vdwg.mxu0
    %770 = vmatpush.msra.mxu0 %v407
    %771 = vmatpush.msra.mxu0 %v405
    %772 = vmatpush.msra.mxu0 %v403
    %773 = vmatpush.msra.mxu0 %v401
    %774 = vmatpush.msra.mxu0 %v399
    %775 = vmatpush.msra.mxu0 %v397
    %776 = vmatpush.msra.mxu0 %v395
    %777 = vmatpush.msra.mxu0 %v393
    %778 = vmatpush.msra.mxu0 %v391
    %779 = vmatpush.msra.mxu0 %v389
    %780 = vmatpush.msra.mxu0 %v387
    %781 = vmatpush.msra.mxu0 %v385
    %782 = vmatpush.msra.mxu0 %v383
    %783 = vmatpush.msra.mxu0 %v381
    %784 = vmatpush.msra.mxu0 %v379
    %785 = vmatpush.msra.mxu0 %v377
    %786 = vmatmul.f32.gmra.mxu0 %v531
    %v787 = vpop.f32.mrf.mxu0
    %v788 = vadd.f32 %v768, %v787
    %789 = vdwg.mxu0
    %790 = vmatpush.msra.mxu0 %v439
    %791 = vmatpush.msra.mxu0 %v437
    %792 = vmatpush.msra.mxu0 %v435
    %793 = vmatpush.msra.mxu0 %v433
    %794 = vmatpush.msra.mxu0 %v431
    %795 = vmatpush.msra.mxu0 %v429
    %796 = vmatpush.msra.mxu0 %v427
    %797 = vmatpush.msra.mxu0 %v425
    %798 = vmatpush.msra.mxu0 %v423
    %799 = vmatpush.msra.mxu0 %v421
    %800 = vmatpush.msra.mxu0 %v419
    %801 = vmatpush.msra.mxu0 %v417
    %802 = vmatpush.msra.mxu0 %v415
    %803 = vmatpush.msra.mxu0 %v413
    %804 = vmatpush.msra.mxu0 %v411
    %805 = vmatpush.msra.mxu0 %v409
    %806 = vmatmul.f32.gmra.mxu0 %v532
    %v807 = vpop.f32.mrf.mxu0
    %v808 = vadd.f32 %v788, %v807
    %809 = vdwg.mxu0
    %810 = vmatpush.msra.mxu0 %v471
    %811 = vmatpush.msra.mxu0 %v469
    %812 = vmatpush.msra.mxu0 %v467
    %813 = vmatpush.msra.mxu0 %v465
    %814 = vmatpush.msra.mxu0 %v463
    %815 = vmatpush.msra.mxu0 %v461
    %816 = vmatpush.msra.mxu0 %v459
    %817 = vmatpush.msra.mxu0 %v457
    %818 = vmatpush.msra.mxu0 %v455
    %819 = vmatpush.msra.mxu0 %v453
    %820 = vmatpush.msra.mxu0 %v451
    %821 = vmatpush.msra.mxu0 %v449
    %822 = vmatpush.msra.mxu0 %v447
    %823 = vmatpush.msra.mxu0 %v445
    %824 = vmatpush.msra.mxu0 %v443
    %825 = vmatpush.msra.mxu0 %v441
    %826 = vmatmul.f32.gmra.mxu0 %v533
    %v827 = vpop.f32.mrf.mxu0
    %v828 = vadd.f32 %v808, %v827
    %829 = vdwg.mxu0
    %830 = vmatpush.msra.mxu0 %v503
    %831 = vmatpush.msra.mxu0 %v501
    %832 = vmatpush.msra.mxu0 %v499
    %833 = vmatpush.msra.mxu0 %v497
    %834 = vmatpush.msra.mxu0 %v495
    %835 = vmatpush.msra.mxu0 %v493
    %836 = vmatpush.msra.mxu0 %v491
    %837 = vmatpush.msra.mxu0 %v489
    %838 = vmatpush.msra.mxu0 %v487
    %839 = vmatpush.msra.mxu0 %v485
    %840 = vmatpush.msra.mxu0 %v483
    %841 = vmatpush.msra.mxu0 %v481
    %842 = vmatpush.msra.mxu0 %v479
    %843 = vmatpush.msra.mxu0 %v477
    %844 = vmatpush.msra.mxu0 %v475
    %845 = vmatpush.msra.mxu0 %v473
    %846 = vmatmul.f32.gmra.mxu0 %v534
    %v847 = vpop.f32.mrf.mxu0
    %v848 = vadd.f32 %v828, %v847
    %849 = vdwg.mxu0
    %850 = vmatpush.msra.mxu0 %v56
    %851 = vmatpush.msra.mxu0 %v54
    %852 = vmatpush.msra.mxu0 %v52
    %853 = vmatpush.msra.mxu0 %v50
    %854 = vmatpush.msra.mxu0 %v48
    %855 = vmatpush.msra.mxu0 %v46
    %856 = vmatpush.msra.mxu0 %v44
    %857 = vmatpush.msra.mxu0 %v42
    %858 = vmatpush.msra.mxu0 %v40
    %859 = vmatpush.msra.mxu0 %v38
    %860 = vmatpush.msra.mxu0 %v36
    %861 = vmatpush.msra.mxu0 %v34
    %862 = vmatpush.msra.mxu0 %v32
    %863 = vmatpush.msra.mxu0 %v30
    %864 = vmatpush.msra.mxu0 %v28
    %865 = vmatpush.msra.mxu0 %v26
    %866 = vmatmul.f32.gmra.mxu0 %v518
    %v867 = vpop.f32.mrf.mxu0
    %v868 = vadd.f32 %v508, %v867
    %869 = vdwg.mxu0
    %870 = vmatpush.msra.mxu0 %v88
    %871 = vmatpush.msra.mxu0 %v86
    %872 = vmatpush.msra.mxu0 %v84
    %873 = vmatpush.msra.mxu0 %v82
    %874 = vmatpush.msra.mxu0 %v80
    %875 = vmatpush.msra.mxu0 %v78
    %876 = vmatpush.msra.mxu0 %v76
    %877 = vmatpush.msra.mxu0 %v74
    %878 = vmatpush.msra.mxu0 %v72
    %879 = vmatpush.msra.mxu0 %v70
    %880 = vmatpush.msra.mxu0 %v68
    %881 = vmatpush.msra.mxu0 %v66
    %882 = vmatpush.msra.mxu0 %v64
    %883 = vmatpush.msra.mxu0 %v62
    %884 = vmatpush.msra.mxu0 %v60
    %885 = vmatpush.msra.mxu0 %v58
    %886 = vmatmul.f32.gmra.mxu0 %v519
    %v887 = vpop.f32.mrf.mxu0
    %v888 = vadd.f32 %v868, %v887
    %889 = vdwg.mxu0
    %890 = vmatpush.msra.mxu0 %v120
    %891 = vmatpush.msra.mxu0 %v118
    %892 = vmatpush.msra.mxu0 %v116
    %893 = vmatpush.msra.mxu0 %v114
    %894 = vmatpush.msra.mxu0 %v112
    %895 = vmatpush.msra.mxu0 %v110
    %896 = vmatpush.msra.mxu0 %v108
    %897 = vmatpush.msra.mxu0 %v106
    %898 = vmatpush.msra.mxu0 %v104
    %899 = vmatpush.msra.mxu0 %v102
    %900 = vmatpush.msra.mxu0 %v100
    %901 = vmatpush.msra.mxu0 %v98
    %902 = vmatpush.msra.mxu0 %v96
    %903 = vmatpush.msra.mxu0 %v94
    %904 = vmatpush.msra.mxu0 %v92
    %905 = vmatpush.msra.mxu0 %v90
    %906 = vmatmul.f32.gmra.mxu0 %v520
    %v907 = vpop.f32.mrf.mxu0
    %v908 = vadd.f32 %v888, %v907
    %909 = vdwg.mxu0
    %910 = vmatpush.msra.mxu0 %v152
    %911 = vmatpush.msra.mxu0 %v150
    %912 = vmatpush.msra.mxu0 %v148
    %913 = vmatpush.msra.mxu0 %v146
    %914 = vmatpush.msra.mxu0 %v144
    %915 = vmatpush.msra.mxu0 %v142
    %916 = vmatpush.msra.mxu0 %v140
    %917 = vmatpush.msra.mxu0 %v138
    %918 = vmatpush.msra.mxu0 %v136
    %919 = vmatpush.msra.mxu0 %v134
    %920 = vmatpush.msra.mxu0 %v132
    %921 = vmatpush.msra.mxu0 %v130
    %922 = vmatpush.msra.mxu0 %v128
    %923 = vmatpush.msra.mxu0 %v126
    %924 = vmatpush.msra.mxu0 %v124
    %925 = vmatpush.msra.mxu0 %v122
    %926 = vmatmul.f32.gmra.mxu0 %v521
    %v927 = vpop.f32.mrf.mxu0
    %v928 = vadd.f32 %v908, %v927
    %929 = vdwg.mxu0
    %930 = vmatpush.msra.mxu0 %v184
    %931 = vmatpush.msra.mxu0 %v182
    %932 = vmatpush.msra.mxu0 %v180
    %933 = vmatpush.msra.mxu0 %v178
    %934 = vmatpush.msra.mxu0 %v176
    %935 = vmatpush.msra.mxu0 %v174
    %936 = vmatpush.msra.mxu0 %v172
    %937 = vmatpush.msra.mxu0 %v170
    %938 = vmatpush.msra.mxu0 %v168
    %939 = vmatpush.msra.mxu0 %v166
    %940 = vmatpush.msra.mxu0 %v164
    %941 = vmatpush.msra.mxu0 %v162
    %942 = vmatpush.msra.mxu0 %v160
    %943 = vmatpush.msra.mxu0 %v158
    %944 = vmatpush.msra.mxu0 %v156
    %945 = vmatpush.msra.mxu0 %v154
    %946 = vmatmul.f32.gmra.mxu0 %v522
    %v947 = vpop.f32.mrf.mxu0
    %v948 = vadd.f32 %v928, %v947
    %949 = vdwg.mxu0
    %950 = vmatpush.msra.mxu0 %v216
    %951 = vmatpush.msra.mxu0 %v214
    %952 = vmatpush.msra.mxu0 %v212
    %953 = vmatpush.msra.mxu0 %v210
    %954 = vmatpush.msra.mxu0 %v208
    %955 = vmatpush.msra.mxu0 %v206
    %956 = vmatpush.msra.mxu0 %v204
    %957 = vmatpush.msra.mxu0 %v202
    %958 = vmatpush.msra.mxu0 %v200
    %959 = vmatpush.msra.mxu0 %v198
    %960 = vmatpush.msra.mxu0 %v196
    %961 = vmatpush.msra.mxu0 %v194
    %962 = vmatpush.msra.mxu0 %v192
    %963 = vmatpush.msra.mxu0 %v190
    %964 = vmatpush.msra.mxu0 %v188
    %965 = vmatpush.msra.mxu0 %v186
    %966 = vmatmul.f32.gmra.mxu0 %v523
    %v967 = vpop.f32.mrf.mxu0
    %v968 = vadd.f32 %v948, %v967
    %969 = vdwg.mxu0
    %970 = vmatpush.msra.mxu0 %v248
    %971 = vmatpush.msra.mxu0 %v246
    %972 = vmatpush.msra.mxu0 %v244
    %973 = vmatpush.msra.mxu0 %v242
    %974 = vmatpush.msra.mxu0 %v240
    %975 = vmatpush.msra.mxu0 %v238
    %976 = vmatpush.msra.mxu0 %v236
    %977 = vmatpush.msra.mxu0 %v234
    %978 = vmatpush.msra.mxu0 %v232
    %979 = vmatpush.msra.mxu0 %v230
    %980 = vmatpush.msra.mxu0 %v228
    %981 = vmatpush.msra.mxu0 %v226
    %982 = vmatpush.msra.mxu0 %v224
    %983 = vmatpush.msra.mxu0 %v222
    %984 = vmatpush.msra.mxu0 %v220
    %985 = vmatpush.msra.mxu0 %v218
    %986 = vmatmul.f32.gmra.mxu0 %v524
    %v987 = vpop.f32.mrf.mxu0
    %v988 = vadd.f32 %v968, %v987
    %989 = vdwg.mxu0
    %990 = vmatpush.msra.mxu0 %v280
    %991 = vmatpush.msra.mxu0 %v278
    %992 = vmatpush.msra.mxu0 %v276
    %993 = vmatpush.msra.mxu0 %v274
    %994 = vmatpush.msra.mxu0 %v272
    %995 = vmatpush.msra.mxu0 %v270
    %996 = vmatpush.msra.mxu0 %v268
    %997 = vmatpush.msra.mxu0 %v266
    %998 = vmatpush.msra.mxu0 %v264
    %999 = vmatpush.msra.mxu0 %v262
    %1000 = vmatpush.msra.mxu0 %v260
    %1001 = vmatpush.msra.mxu0 %v258
    %1002 = vmatpush.msra.mxu0 %v256
    %1003 = vmatpush.msra.mxu0 %v254
    %1004 = vmatpush.msra.mxu0 %v252
    %1005 = vmatpush.msra.mxu0 %v250
    %1006 = vmatmul.f32.gmra.mxu0 %v525
    %v1007 = vpop.f32.mrf.mxu0
    %v1008 = vadd.f32 %v988, %v1007
    %1009 = vdwg.mxu0
    %1010 = vmatpush.msra.mxu0 %v312
    %1011 = vmatpush.msra.mxu0 %v310
    %1012 = vmatpush.msra.mxu0 %v308
    %1013 = vmatpush.msra.mxu0 %v306
    %1014 = vmatpush.msra.mxu0 %v304
    %1015 = vmatpush.msra.mxu0 %v302
    %1016 = vmatpush.msra.mxu0 %v300
    %1017 = vmatpush.msra.mxu0 %v298
    %1018 = vmatpush.msra.mxu0 %v296
    %1019 = vmatpush.msra.mxu0 %v294
    %1020 = vmatpush.msra.mxu0 %v292
    %1021 = vmatpush.msra.mxu0 %v290
    %1022 = vmatpush.msra.mxu0 %v288
    %1023 = vmatpush.msra.mxu0 %v286
    %1024 = vmatpush.msra.mxu0 %v284
    %1025 = vmatpush.msra.mxu0 %v282
    %1026 = vmatmul.f32.gmra.mxu0 %v528
    %v1027 = vpop.f32.mrf.mxu0
    %v1028 = vadd.f32 %v1008, %v1027
    %1029 = vdwg.mxu0
    %1030 = vmatpush.msra.mxu0 %v344
    %1031 = vmatpush.msra.mxu0 %v342
    %1032 = vmatpush.msra.mxu0 %v340
    %1033 = vmatpush.msra.mxu0 %v338
    %1034 = vmatpush.msra.mxu0 %v336
    %1035 = vmatpush.msra.mxu0 %v334
    %1036 = vmatpush.msra.mxu0 %v332
    %1037 = vmatpush.msra.mxu0 %v330
    %1038 = vmatpush.msra.mxu0 %v328
    %1039 = vmatpush.msra.mxu0 %v326
    %1040 = vmatpush.msra.mxu0 %v324
    %1041 = vmatpush.msra.mxu0 %v322
    %1042 = vmatpush.msra.mxu0 %v320
    %1043 = vmatpush.msra.mxu0 %v318
    %1044 = vmatpush.msra.mxu0 %v316
    %1045 = vmatpush.msra.mxu0 %v314
    %1046 = vmatmul.f32.gmra.mxu0 %v529
    %v1047 = vpop.f32.mrf.mxu0
    %v1048 = vadd.f32 %v1028, %v1047
    %1049 = vdwg.mxu0
    %1050 = vmatpush.msra.mxu0 %v376
    %1051 = vmatpush.msra.mxu0 %v374
    %1052 = vmatpush.msra.mxu0 %v372
    %1053 = vmatpush.msra.mxu0 %v370
    %1054 = vmatpush.msra.mxu0 %v368
    %1055 = vmatpush.msra.mxu0 %v366
    %1056 = vmatpush.msra.mxu0 %v364
    %1057 = vmatpush.msra.mxu0 %v362
    %1058 = vmatpush.msra.mxu0 %v360
    %1059 = vmatpush.msra.mxu0 %v358
    %1060 = vmatpush.msra.mxu0 %v356
    %1061 = vmatpush.msra.mxu0 %v354
    %1062 = vmatpush.msra.mxu0 %v352
    %1063 = vmatpush.msra.mxu0 %v350
    %1064 = vmatpush.msra.mxu0 %v348
    %1065 = vmatpush.msra.mxu0 %v346
    %1066 = vmatmul.f32.gmra.mxu0 %v530
    %v1067 = vpop.f32.mrf.mxu0
    %v1068 = vadd.f32 %v1048, %v1067
    %1069 = vdwg.mxu0
    %1070 = vmatpush.msra.mxu0 %v408
    %1071 = vmatpush.msra.mxu0 %v406
    %1072 = vmatpush.msra.mxu0 %v404
    %1073 = vmatpush.msra.mxu0 %v402
    %1074 = vmatpush.msra.mxu0 %v400
    %1075 = vmatpush.msra.mxu0 %v398
    %1076 = vmatpush.msra.mxu0 %v396
    %1077 = vmatpush.msra.mxu0 %v394
    %1078 = vmatpush.msra.mxu0 %v392
    %1079 = vmatpush.msra.mxu0 %v390
    %1080 = vmatpush.msra.mxu0 %v388
    %1081 = vmatpush.msra.mxu0 %v386
    %1082 = vmatpush.msra.mxu0 %v384
    %1083 = vmatpush.msra.mxu0 %v382
    %1084 = vmatpush.msra.mxu0 %v380
    %1085 = vmatpush.msra.mxu0 %v378
    %1086 = vmatmul.f32.gmra.mxu0 %v531
    %v1087 = vpop.f32.mrf.mxu0
    %v1088 = vadd.f32 %v1068, %v1087
    %1089 = vdwg.mxu0
    %1090 = vmatpush.msra.mxu0 %v440
    %1091 = vmatpush.msra.mxu0 %v438
    %1092 = vmatpush.msra.mxu0 %v436
    %1093 = vmatpush.msra.mxu0 %v434
    %1094 = vmatpush.msra.mxu0 %v432
    %1095 = vmatpush.msra.mxu0 %v430
    %1096 = vmatpush.msra.mxu0 %v428
    %1097 = vmatpush.msra.mxu0 %v426
    %1098 = vmatpush.msra.mxu0 %v424
    %1099 = vmatpush.msra.mxu0 %v422
    %1100 = vmatpush.msra.mxu0 %v420
    %1101 = vmatpush.msra.mxu0 %v418
    %1102 = vmatpush.msra.mxu0 %v416
    %1103 = vmatpush.msra.mxu0 %v414
    %1104 = vmatpush.msra.mxu0 %v412
    %1105 = vmatpush.msra.mxu0 %v410
    %1106 = vmatmul.f32.gmra.mxu0 %v532
    %v1107 = vpop.f32.mrf.mxu0
    %v1108 = vadd.f32 %v1088, %v1107
    %1109 = vdwg.mxu0
    %1110 = vmatpush.msra.mxu0 %v472
    %1111 = vmatpush.msra.mxu0 %v470
    %1112 = vmatpush.msra.mxu0 %v468
    %1113 = vmatpush.msra.mxu0 %v466
    %1114 = vmatpush.msra.mxu0 %v464
    %1115 = vmatpush.msra.mxu0 %v462
    %1116 = vmatpush.msra.mxu0 %v460
    %1117 = vmatpush.msra.mxu0 %v458
    %1118 = vmatpush.msra.mxu0 %v456
    %1119 = vmatpush.msra.mxu0 %v454
    %1120 = vmatpush.msra.mxu0 %v452
    %1121 = vmatpush.msra.mxu0 %v450
    %1122 = vmatpush.msra.mxu0 %v448
    %1123 = vmatpush.msra.mxu0 %v446
    %1124 = vmatpush.msra.mxu0 %v444
    %1125 = vmatpush.msra.mxu0 %v442
    %1126 = vmatmul.f32.gmra.mxu0 %v533
    %v1127 = vpop.f32.mrf.mxu0
    %v1128 = vadd.f32 %v1108, %v1127
    %1129 = vdwg.mxu0
    %1130 = vmatpush.msra.mxu0 %v504
    %1131 = vmatpush.msra.mxu0 %v502
    %1132 = vmatpush.msra.mxu0 %v500
    %1133 = vmatpush.msra.mxu0 %v498
    %1134 = vmatpush.msra.mxu0 %v496
    %1135 = vmatpush.msra.mxu0 %v494
    %1136 = vmatpush.msra.mxu0 %v492
    %1137 = vmatpush.msra.mxu0 %v490
    %1138 = vmatpush.msra.mxu0 %v488
    %1139 = vmatpush.msra.mxu0 %v486
    %1140 = vmatpush.msra.mxu0 %v484
    %1141 = vmatpush.msra.mxu0 %v482
    %1142 = vmatpush.msra.mxu0 %v480
    %1143 = vmatpush.msra.mxu0 %v478
    %1144 = vmatpush.msra.mxu0 %v476
    %1145 = vmatpush.msra.mxu0 %v474
    %1146 = vmatmul.f32.gmra.mxu0 %v534
    %v1147 = vpop.f32.mrf.mxu0
    %v1148 = vadd.f32 %v1128, %v1147
    %1149 = vdwg.mxu0
    %v1150 = vmax.f32 %v848, 0.0
    %v1151 = vmax.f32 %v1148, 0.0
    %v1152 = vld [vmem:[%s3] sm:$0xff]
    %v1153 = vld [vmem:[%s3 + $0x8] sm:$0xff]
    %v1154 = vld [vmem:[%s3 + $0x10] sm:$0xff]
    %v1155 = vld [vmem:[%s3 + $0x18] sm:$0xff]
    %v1156 = vld [vmem:[%s3 + $0x20] sm:$0xff]
    %v1157 = vld [vmem:[%s3 + $0x28] sm:$0xff]
    %v1158 = vld [vmem:[%s3 + $0x30] sm:$0xff]
    %v1159 = vld [vmem:[%s3 + $0x38] sm:$0xff]
    %v1160 = vld [vmem:[%s3 + $0x40] sm:$0xff]
    %v1161 = vld [vmem:[%s3 + $0x48] sm:$0xff]
    %v1162 = vld [vmem:[%s3 + $0x50] sm:$0xff]
    %v1163 = vld [vmem:[%s3 + $0x58] sm:$0xff]
    %v1164 = vld [vmem:[%s3 + $0x60] sm:$0xff]
    %v1165 = vld [vmem:[%s3 + $0x68] sm:$0xff]
    %v1166 = vld [vmem:[%s3 + $0x70] sm:$0xff]
    %v1167 = vld [vmem:[%s3 + $0x78] sm:$0xff]
    %v1168 = vld [vmem:[%s3 + $0x80] sm:$0xff]
    %v1169 = vld [vmem:[%s3 + $0x88] sm:$0xff]
    %v1170 = vld [vmem:[%s3 + $0x90] sm:$0xff]
    %v1171 = vld [vmem:[%s3 + $0x98] sm:$0xff]
    %v1172 = vld [vmem:[%s3 + $0xa0] sm:$0xff]
    %v1173 = vld [vmem:[%s3 + $0xa8] sm:$0xff]
    %v1174 = vld [vmem:[%s3 + $0xb0] sm:$0xff]
    %v1175 = vld [vmem:[%s3 + $0xb8] sm:$0xff]
    %v1176 = vld [vmem:[%s3 + $0xc0] sm:$0xff]
    %v1177 = vld [vmem:[%s3 + $0xc8] sm:$0xff]
    %v1178 = vld [vmem:[%s3 + $0xd0] sm:$0xff]
    %v1179 = vld [vmem:[%s3 + $0xd8] sm:$0xff]
    %v1180 = vld [vmem:[%s3 + $0xe0] sm:$0xff]
    %v1181 = vld [vmem:[%s3 + $0xe8] sm:$0xff]
    %v1182 = vld [vmem:[%s3 + $0xf0] sm:$0xff]
    %v1183 = vld [vmem:[%s3 + $0xf8] sm:$0xff]
    %v1184 = vld [vmem:[%s4] sm:$0x1]
    %v1186 = vperm.slane %v1184, 0
    %1188 = vmatpush.msra.mxu0 %v1167
    %1189 = vmatpush.msra.mxu0 %v1166
    %1190 = vmatpush.msra.mxu0 %v1165
    %1191 = vmatpush.msra.mxu0 %v1164
    %1192 = vmatpush.msra.mxu0 %v1163
    %1193 = vmatpush.msra.mxu0 %v1162
    %1194 = vmatpush.msra.mxu0 %v1161
    %1195 = vmatpush.msra.mxu0 %v1160
    %1196 = vmatpush.msra.mxu0 %v1159
    %1197 = vmatpush.msra.mxu0 %v1158
    %1198 = vmatpush.msra.mxu0 %v1157
    %1199 = vmatpush.msra.mxu0 %v1156
    %1200 = vmatpush.msra.mxu0 %v1155
    %1201 = vmatpush.msra.mxu0 %v1154
    %1202 = vmatpush.msra.mxu0 %v1153
    %1203 = vmatpush.msra.mxu0 %v1152
    %1204 = vmatmul.f32.gmra.mxu0 %v1150
    %v1205 = vpop.f32.mrf.mxu0
    %v1206 = vadd.f32 %v1186, %v1205
    %1207 = vdwg.mxu0
    %1208 = vmatpush.msra.mxu0 %v1183
    %1209 = vmatpush.msra.mxu0 %v1182
    %1210 = vmatpush.msra.mxu0 %v1181
    %1211 = vmatpush.msra.mxu0 %v1180
    %1212 = vmatpush.msra.mxu0 %v1179
    %1213 = vmatpush.msra.mxu0 %v1178
    %1214 = vmatpush.msra.mxu0 %v1177
    %1215 = vmatpush.msra.mxu0 %v1176
    %1216 = vmatpush.msra.mxu0 %v1175
    %1217 = vmatpush.msra.mxu0 %v1174
    %1218 = vmatpush.msra.mxu0 %v1173
    %1219 = vmatpush.msra.mxu0 %v1172
    %1220 = vmatpush.msra.mxu0 %v1171
    %1221 = vmatpush.msra.mxu0 %v1170
    %1222 = vmatpush.msra.mxu0 %v1169
    %1223 = vmatpush.msra.mxu0 %v1168
    %1224 = vmatmul.f32.gmra.mxu0 %v1151
    %v1225 = vpop.f32.mrf.mxu0
    %v1226 = vadd.f32 %v1206, %v1225
    %1227 = vdwg.mxu0
    %vm1228 = vcmask 9216
    %v1229 = vsel %vm1228, %v1226, -inf
    %1230 = vmax.xlane.f32.xlu0 %v1229
    %v1231 = vpop.xlane.xlu0 %1230
    %v1232 = vsub.f32 %v1226, %v1231
    %v1233 = vmul.f32 %v1232, 1.442695
    %v1234 = vpow.pop %v1233
    %v1235 = vsel %vm1228, %v1234, 0.0
    %1236 = vadd.xlane.f32.xlu0 %v1235
    %v1237 = vpop.xlane.xlu0 %1236
    %v1238 = vlog2.pop %v1237
    %v1239 = vmul.f32 %v1238, 0.6931472
    %v1240 = vsub.f32 %v1232, %v1239
    %1241 = vst.msk [vmem:[#allocation2] sm:$0x3] %vm1228, %v1240
    // Predicated region
    $region22: #{_lambda_.5} parent=1 // pred_check
      _
    $region23: #{_lambda_.5} parent=1 // pred_check_branch
      %1243 = sbr.rel (0) target = $region25
    $region24: #{_lambda_.5} parent=1 // pred_region
      %1245 = vsyncadd [#allocation3], 0
      %s1247 = sshll.u32 [#allocation2], 4
      %s1248 = int_to_ptr.vmem [resolvable:$true] %s1247
      %s1249 = sshll.u32 %s5, 4
      %s1250 = int_to_ptr.hbm [resolvable:$true] %s1249
      %1252 = dma.vmem_to_hbm [thread:$0]  %s1248, 32, %s1250, [#allocation3]
    $region25: #{_lambda_.5} parent=1 // pred_fallthru
      _
    // Predicated region
    $region26: #{_lambda_.5} parent=1 // pred_check
      _
    $region27: #{_lambda_.5} parent=1 // pred_check_branch
      %1254 = sbr.rel (0) target = $region29
    $region28: #{_lambda_.5} parent=1 // pred_region
      %1256 = dma.done [#allocation3], 32
    $region29: #{_lambda_.5} parent=1 // pred_fallthru
      _
    %1257 = vsyncpa [#allocation3], 1

</llo_original>
